<compile_context>
chip_gen: v5e
topology: v5e:2x2
jax: 0.10.0
libtpu: 0.0.40
codegen_flags: <defaults>
</compile_context>

<pallas_src>
import numpy as np
import jax
import jax.numpy as jnp
from jax.experimental import pallas as pl
from jax.experimental.pallas import tpu as pltpu


# --------------------------------------------------------------------------
# Fused MLP kernel
# --------------------------------------------------------------------------

def mlp_kernel(x_ref, wg_ref, wu_ref, wd_ref, o_ref, acc_ref):
    """One (tm x ti) chunk of the fused gate/up/GLU/down computation.

    x_ref  : (tm, H)  bf16   -- resident across the I axis
    wg_ref : (H, ti)  bf16   -- gate weight column chunk
    wu_ref : (H, ti)  bf16   -- up   weight column chunk
    wd_ref : (ti, H)  bf16   -- down weight row chunk
    o_ref  : (tm, H)  out dtype (written on the last I step)
    acc_ref: (tm, H)  f32 VMEM accumulator
    """
    j = pl.program_id(1)

    @pl.when(j == 0)
    def _init():
        acc_ref[...] = jnp.zeros_like(acc_ref)

    x = x_ref[...]
    gate = jnp.dot(x, wg_ref[...], preferred_element_type=jnp.float32)   # (tm, ti) f32
    up = jnp.dot(x, wu_ref[...], preferred_element_type=jnp.float32)     # (tm, ti) f32
    act = (jax.nn.silu(gate) * up).astype(wd_ref.dtype)                   # bf16 for MXU
    acc_ref[...] += jnp.dot(act, wd_ref[...], preferred_element_type=jnp.float32)

    @pl.when(j == pl.num_programs(1) - 1)
    def _finalize():
        o_ref[...] = acc_ref[...].astype(o_ref.dtype)


# --------------------------------------------------------------------------
# Wrapper
# --------------------------------------------------------------------------

def _round_up(x, m):
    return (x + m - 1) // m * m


def _pick_chunk(n, candidates):
    for c in candidates:
        if n % c == 0:
            return c
    return n


def pallas_mlp(x, w_gate_up, w_down, *, tm=256, ti=512):
    """Fused MLP forward.

    x         : [..., H]   (any leading dims)
    w_gate_up : [H, 2*I]   (= torch gate_up_proj.weight.T; columns [:I]=gate, [I:]=up)
    w_down    : [I, H]     (= torch down_proj.weight.T)
    returns   : [..., H]   in x.dtype
    """
    orig_shape = x.shape
    H = orig_shape[-1]
    two_i = w_gate_up.shape[1]
    I = two_i // 2
    assert w_gate_up.shape[0] == H and w_down.shape == (I, H)
    out_dtype = x.dtype

    M = int(np.prod(orig_shape[:-1])) if len(orig_shape) > 1 else 1
    xf = x.reshape(M, H)

    # --- tile selection ---------------------------------------------------
    tm_eff = min(tm, _round_up(M, 8))          # big M tile; >= 8 sublanes
    Mp = _round_up(M, tm_eff)
    if Mp != M:                                # zero-pad rows; padded rows contribute 0
        xf = jnp.pad(xf, ((0, Mp - M), (0, 0)))
    ti_eff = _pick_chunk(I, (512, 384, 256, 128))   # stream the intermediate dim

    # --- bf16 MXU operands (f32 accumulation inside the kernel) -----------
    xb = xf.astype(jnp.bfloat16)
    wg = w_gate_up[:, :I].astype(jnp.bfloat16)
    wu = w_gate_up[:, I:].astype(jnp.bfloat16)
    wd = w_down.astype(jnp.bfloat16)

    grid = (Mp // tm_eff, I // ti_eff)

    out = pl.pallas_call(
        mlp_kernel,
        grid=grid,
        in_specs=[
            pl.BlockSpec((tm_eff, H), lambda i, j: (i, 0)),   # x tile, resident over j
            pl.BlockSpec((H, ti_eff), lambda i, j: (0, j)),   # gate weight chunk
            pl.BlockSpec((H, ti_eff), lambda i, j: (0, j)),   # up weight chunk
            pl.BlockSpec((ti_eff, H), lambda i, j: (j, 0)),   # down weight chunk
        ],
        out_specs=pl.BlockSpec((tm_eff, H), lambda i, j: (i, 0)),
        out_shape=jax.ShapeDtypeStruct((Mp, H), out_dtype),
        scratch_shapes=[pltpu.VMEM((tm_eff, H), jnp.float32)],
        compiler_params=pltpu.CompilerParams(
            dimension_semantics=("parallel", "arbitrary"),
            vmem_limit_bytes=32 * 1024 * 1024,
        ),
    )(xb, wg, wu, wd)

    return out[:M].reshape(orig_shape)


# --------------------------------------------------------------------------
# Plain-JAX reference (mirrors the PyTorch MLP forward exactly, fp32)
# --------------------------------------------------------------------------

def mlp_reference(x, w_gate_up, w_down):
    I = w_down.shape[0]
    merged = x @ w_gate_up
    gate, up = merged[..., :I], merged[..., I:]
    return (jax.nn.silu(gate) * up) @ w_down


# --------------------------------------------------------------------------
# Main
# --------------------------------------------------------------------------

if __name__ == "__main__":
    # Module constants from the spec: hidden_size=576, intermediate_size=1536.
    hidden_size = 576
    intermediate_size = 1536
    batch, seq = 2, 8

    key = jax.random.PRNGKey(0)
    kx, kgu, kd = jax.random.split(key, 3)

    x = jax.random.normal(kx, (batch, seq, hidden_size), jnp.float32)
    # [in, out] layout (transpose of torch.nn.Linear.weight), bias=False as in the module.
    w_gate_up = jax.random.normal(kgu, (hidden_size, 2 * intermediate_size), jnp.float32) * 0.02
    w_down = jax.random.normal(kd, (intermediate_size, hidden_size), jnp.float32) * 0.02

    out = pallas_mlp(x, w_gate_up, w_down)
    out = jax.block_until_ready(out)

    assert out.shape == (batch, seq, hidden_size)
    assert bool(jnp.all(jnp.isfinite(out)))

    # Loose numeric sanity check vs fp32 reference (kernel uses bf16 MXU operands).
    ref = mlp_reference(x, w_gate_up, w_down)
    rel_err = float(jnp.linalg.norm(out - ref) / (jnp.linalg.norm(ref) + 1e-6))
    assert rel_err < 5e-2, f"relative error too large: {rel_err}"

    print("KERNEL_OK")
</pallas_src>

<mosaic_0001>
module attributes {stable_mosaic.version = 11 : i64} {
  func.func @mlp_kernel(%arg0: i32, %arg1: i32, %arg2: memref<16x576xbf16, #tpu.memory_space<vmem>>, %arg3: memref<576x512xbf16, #tpu.memory_space<vmem>>, %arg4: memref<576x512xbf16, #tpu.memory_space<vmem>>, %arg5: memref<512x576xbf16, #tpu.memory_space<vmem>>, %arg6: memref<16x576xf32, #tpu.memory_space<vmem>>, %arg7: memref<16x576xf32, #tpu.memory_space<vmem>>) attributes {dimension_semantics = [#tpu.dimension_semantics<parallel>, #tpu.dimension_semantics<arbitrary>], iteration_bounds = array<i64: 1, 3>, scalar_prefetch = 0 : i64, scratch_operands = 1 : i64, tpu.core_type = #tpu.core_type<tc>, window_params = [{transform_indices = @transform_0, window_bounds = array<i64: 16, 576>}, {transform_indices = @transform_1, window_bounds = array<i64: 576, 512>}, {transform_indices = @transform_2, window_bounds = array<i64: 576, 512>}, {transform_indices = @transform_3, window_bounds = array<i64: 512, 576>}, {transform_indices = @transform_4, window_bounds = array<i64: 16, 576>}]} {
    %c0_i32 = arith.constant 0 : i32
    %0 = arith.cmpi eq, %arg1, %c0_i32 : i32
    %1 = arith.extui %0 : i1 to i32
    %c0_i32_0 = arith.constant 0 : i32
    %2 = arith.cmpi ne, %1, %c0_i32_0 : i32
    scf.if %2 {
      %cst_16 = arith.constant 0.000000e+00 : f32
      %24 = vector.broadcast %cst_16 : f32 to vector<16x576xf32>
      %c0_17 = arith.constant 0 : index
      %c0_18 = arith.constant 0 : index
      %25 = vector.load %arg7[%c0_17, %c0_18] : memref<16x576xf32, #tpu.memory_space<vmem>>, vector<16x576xf32>
      tpu.vector_store %arg7[%c0_17, %c0_18], %24 {strides = array<i32>} : memref<16x576xf32, #tpu.memory_space<vmem>>, vector<16x576xf32>,
    } else {
    }
    %c0 = arith.constant 0 : index
    %c0_1 = arith.constant 0 : index
    %3 = vector.load %arg2[%c0, %c0_1] : memref<16x576xbf16, #tpu.memory_space<vmem>>, vector<16x576xbf16>
    %c0_2 = arith.constant 0 : index
    %c0_3 = arith.constant 0 : index
    %4 = vector.load %arg3[%c0_2, %c0_3] : memref<576x512xbf16, #tpu.memory_space<vmem>>, vector<576x512xbf16>
    %cst = arith.constant dense<0.000000e+00> : vector<16x512xf32>
    %5 = tpu.matmul %3, %4, %cst {dimension_numbers = #tpu.dot_dimension_numbers<[1], [0], [0], [1], [0, 0, 1, 1], [], []>} : vector<16x576xbf16>, vector<576x512xbf16>, vector<16x512xf32> -> vector<16x512xf32>
    %c0_4 = arith.constant 0 : index
    %c0_5 = arith.constant 0 : index
    %6 = vector.load %arg4[%c0_4, %c0_5] : memref<576x512xbf16, #tpu.memory_space<vmem>>, vector<576x512xbf16>
    %cst_6 = arith.constant dense<0.000000e+00> : vector<16x512xf32>
    %7 = tpu.matmul %3, %6, %cst_6 {dimension_numbers = #tpu.dot_dimension_numbers<[1], [0], [0], [1], [0, 0, 1, 1], [], []>} : vector<16x576xbf16>, vector<576x512xbf16>, vector<16x512xf32> -> vector<16x512xf32>
    %8 = arith.negf %5 : vector<16x512xf32>
    %9 = math.exp %8 : vector<16x512xf32>
    %cst_7 = arith.constant 1.000000e+00 : f32
    %10 = vector.broadcast %cst_7 : f32 to vector<16x512xf32>
    %11 = arith.addf %10, %9 : vector<16x512xf32>
    %12 = arith.divf %10, %11 : vector<16x512xf32>
    %13 = arith.mulf %5, %12 : vector<16x512xf32>
    %14 = arith.mulf %13, %7 : vector<16x512xf32>
    %15 = arith.truncf %14 : vector<16x512xf32> to vector<16x512xbf16>
    %c0_8 = arith.constant 0 : index
    %c0_9 = arith.constant 0 : index
    %16 = vector.load %arg7[%c0_8, %c0_9] : memref<16x576xf32, #tpu.memory_space<vmem>>, vector<16x576xf32>
    %c0_10 = arith.constant 0 : index
    %c0_11 = arith.constant 0 : index
    %17 = vector.load %arg5[%c0_10, %c0_11] : memref<512x576xbf16, #tpu.memory_space<vmem>>, vector<512x576xbf16>
    %cst_12 = arith.constant dense<0.000000e+00> : vector<16x576xf32>
    %18 = tpu.matmul %15, %17, %cst_12 {dimension_numbers = #tpu.dot_dimension_numbers<[1], [0], [0], [1], [0, 0, 1, 1], [], []>} : vector<16x512xbf16>, vector<512x576xbf16>, vector<16x576xf32> -> vector<16x576xf32>
    %19 = arith.addf %16, %18 : vector<16x576xf32>
    %c0_13 = arith.constant 0 : index
    %c0_14 = arith.constant 0 : index
    %20 = vector.load %arg7[%c0_13, %c0_14] : memref<16x576xf32, #tpu.memory_space<vmem>>, vector<16x576xf32>
    tpu.vector_store %arg7[%c0_13, %c0_14], %19 {strides = array<i32>} : memref<16x576xf32, #tpu.memory_space<vmem>>, vector<16x576xf32>,
    %c2_i32 = arith.constant 2 : i32
    %21 = arith.cmpi eq, %arg1, %c2_i32 : i32
    %22 = arith.extui %21 : i1 to i32
    %c0_i32_15 = arith.constant 0 : i32
    %23 = arith.cmpi ne, %22, %c0_i32_15 : i32
    scf.if %23 {
      %c0_16 = arith.constant 0 : index
      %c0_17 = arith.constant 0 : index
      %24 = vector.load %arg7[%c0_16, %c0_17] : memref<16x576xf32, #tpu.memory_space<vmem>>, vector<16x576xf32>
      %c0_18 = arith.constant 0 : index
      %c0_19 = arith.constant 0 : index
      %25 = vector.load %arg6[%c0_18, %c0_19] : memref<16x576xf32, #tpu.memory_space<vmem>>, vector<16x576xf32>
      tpu.vector_store %arg6[%c0_18, %c0_19], %24 {strides = array<i32>} : memref<16x576xf32, #tpu.memory_space<vmem>>, vector<16x576xf32>,
    } else {
    }
    return
  }
  func.func @transform_0(%arg0: i32, %arg1: i32) -> (i32, i32) {
    %c0_i32 = arith.constant 0 : i32
    %c0_i32_0 = arith.constant 0 : i32
    return %arg0, %c0_i32 : i32, i32
  }
  func.func @transform_1(%arg0: i32, %arg1: i32) -> (i32, i32) {
    %c0_i32 = arith.constant 0 : i32
    %c0_i32_0 = arith.constant 0 : i32
    return %c0_i32, %arg1 : i32, i32
  }
  func.func @transform_2(%arg0: i32, %arg1: i32) -> (i32, i32) {
    %c0_i32 = arith.constant 0 : i32
    %c0_i32_0 = arith.constant 0 : i32
    return %c0_i32, %arg1 : i32, i32
  }
  func.func @transform_3(%arg0: i32, %arg1: i32) -> (i32, i32) {
    %c0_i32 = arith.constant 0 : i32
    %c0_i32_0 = arith.constant 0 : i32
    return %arg1, %c0_i32 : i32, i32
  }
  func.func @transform_4(%arg0: i32, %arg1: i32) -> (i32, i32) {
    %c0_i32 = arith.constant 0 : i32
    %c0_i32_0 = arith.constant 0 : i32
    return %arg0, %c0_i32 : i32, i32
  }
}

</mosaic_0001>

<llo_original>
// kernel: tpu_custom_call.1
$region0: #{tpu_custom_call.1}
  #allocation0 [shape = 'u32[]', space=smem, size = 0x4, offset = 0x4, fixed_abs, tag = 'smem constant byte address 0x4 - core index']
  #allocation1 [shape = 'u32[72,128]{1,0:T(1,128)}', space=vmem, size = 0x9000, scoped, tag = 'internal scratch']
  #allocation2 [shape = 'f32[16,576]{1,0:T(8,128)}', space=vmem, size = 0xa000, scoped, tag = 'scratch operand']
  %s0 = inlined_call_operand.vmem [shape: bf16[16,576], index: 0, kind: input, shape index: {}]
  %s1 = inlined_call_operand.vmem [shape: bf16[576,1536], index: 1, kind: input, shape index: {}]
  %s2 = inlined_call_operand.vmem [shape: bf16[576,1536], index: 2, kind: input, shape index: {}]
  %s3 = inlined_call_operand.vmem [shape: bf16[1536,576], index: 3, kind: input, shape index: {}]
  %s4 = inlined_call_operand.hbm [shape: f32[16,576], index: 4, kind: output, shape index: {}]
  %s5 = sld [smem:[#allocation0]]
  $region103: #{tpu_custom_call.1} parent=0
    _
  %s7 = ssub.s32 1, %s5
  %s8 = scalar_select 0, %s7, %s5
  $region1: #{tpu_custom_call.1} parent=0
    #allocation3 [shape = 'u8[1179648]{0}', space=vmem, size = 0x120000, scoped, tag = 'input window, operand 1']
    #allocation4 [shape = 'u8[1179648]{0}', space=vmem, size = 0x120000, scoped, tag = 'input window, operand 2']
    #allocation5 [shape = 'u8[40960]{0}', space=vmem, size = 0xa000, scoped, tag = 'output window, operand 0, single buffered']
    #allocation6 [shape = 's32[2]{0}', space=sflag, size = 0x8, scoped, tag = 'scoped memory for tpu_custom_call.1']
    %9 = vsyncpa [#allocation6], 0
    loop: start=0, step=1, limit=5
    $region2: #{tpu_custom_call.1} parent=1 // loop_pre_header
      _
    $region3: #{tpu_custom_call.1} parent=1 // loop_header
      %s11 = sphi 0, %s15
      %p12 = scmp.ge.s32.totalorder %s11, 5
      %s18 = sphi 0, %s30
      %s19 = sphi 0, %s26
      %s20 = sphi 0, %s18
      %s21 = sphi 0, %s19
      %s22 = sphi 0, %s20
      %s23 = sphi 0, %s21
      %s33 = sphi 0, %s35
      %s36 = sphi 0, %s33
      %s37 = sphi 0, %s36
      %s53 = sphi 0, %s37
      %s59 = sphi 0, %s61
      %s62 = sphi 0, %s59
      %s63 = sphi 0, %s62
      %s79 = sphi 0, %s63
      %s85 = sphi 0, %s87
      %s88 = sphi 0, %s85
      %s89 = sphi 0, %s88
      %s105 = sphi 0, %s89
      %s111 = sphi 0, %s113
      %s114 = sphi 0, %s111
      %s115 = sphi 0, %s114
      %s131 = sphi 0, %s115
      %s137 = sphi 0, %s139
      %s140 = sphi 0, %s137
      %s141 = sphi 0, %s140
      %s157 = sphi 0, %s141
    $region4: #{tpu_custom_call.1} parent=1 // loop_header_branch
      %14 = sbr.rel (%p12) target = $region8
    $region5: #{tpu_custom_call.1} parent=1 // loop_body
      %s16 = ssub.s32 %s11, 1
      %s17 = ssub.s32 %s11, 2
      %s24 = sadd.s32 1, %s19
      %p25 = scmp.ge.s32.totalorder %s24, 3
      %s26 = scalar_select %p25, 0, %s24
      %s27 = sadd.s32 1, %s18
      %s28 = scalar_select %p25, %s27, %s18
      %p29 = scmp.ge.s32.totalorder %s28, 1
      %s30 = scalar_select %p29, 0, %s28
      %s31 = ssub.s32 %s18, %s30
      %p32 = scmp.eq.s32.totalorder %s31, 0
      %s34 = sadd.s32 %s33, 1
      %s35 = scalar_select %p32, %s33, %s34
      %p38 = pneg %p32
      %p39 = scmp.eq.s32.totalorder %s11, 2
      %p40 = por %p38, %p39
      %p41 = scmp.ne.s32.totalorder %s33, %s36
      %p42 = scmp.eq.s32.totalorder %s11, 0
      %p43 = por %p41, %p42
      %p44 = scmp.ne.s32.totalorder %s33, %s36
      %p45 = scmp.eq.s32.totalorder %s16, 2
      %p46 = por %p44, %p45
      %p47 = scmp.ne.s32.totalorder %s36, %s37
      %p48 = scmp.eq.s32.totalorder %s16, 0
      %p49 = por %p47, %p48
      %p50 = scmp.ne.s32.totalorder %s36, %s37
      %p51 = scmp.eq.s32.totalorder %s17, 2
      %p52 = por %p50, %p51
      %p54 = scmp.ne.s32.totalorder %s37, %s53
      %p55 = scmp.eq.s32.totalorder %s17, 0
      %p56 = por %p54, %p55
      %s57 = ssub.s32 %s19, %s26
      %p58 = scmp.eq.s32.totalorder %s57, 0
      %s60 = sadd.s32 %s59, 1
      %s61 = scalar_select %p58, %s59, %s60
      %p64 = pneg %p58
      %p65 = scmp.eq.s32.totalorder %s11, 2
      %p66 = por %p64, %p65
      %p67 = scmp.ne.s32.totalorder %s59, %s62
      %p68 = scmp.eq.s32.totalorder %s11, 0
      %p69 = por %p67, %p68
      %p70 = scmp.ne.s32.totalorder %s59, %s62
      %p71 = scmp.eq.s32.totalorder %s16, 2
      %p72 = por %p70, %p71
      %p73 = scmp.ne.s32.totalorder %s62, %s63
      %p74 = scmp.eq.s32.totalorder %s16, 0
      %p75 = por %p73, %p74
      %p76 = scmp.ne.s32.totalorder %s62, %s63
      %p77 = scmp.eq.s32.totalorder %s17, 2
      %p78 = por %p76, %p77
      %p80 = scmp.ne.s32.totalorder %s63, %s79
      %p81 = scmp.eq.s32.totalorder %s17, 0
      %p82 = por %p80, %p81
      %s83 = ssub.s32 %s19, %s26
      %p84 = scmp.eq.s32.totalorder %s83, 0
      %s86 = sadd.s32 %s85, 1
      %s87 = scalar_select %p84, %s85, %s86
      %p90 = pneg %p84
      %p91 = scmp.eq.s32.totalorder %s11, 2
      %p92 = por %p90, %p91
      %p93 = scmp.ne.s32.totalorder %s85, %s88
      %p94 = scmp.eq.s32.totalorder %s11, 0
      %p95 = por %p93, %p94
      %p96 = scmp.ne.s32.totalorder %s85, %s88
      %p97 = scmp.eq.s32.totalorder %s16, 2
      %p98 = por %p96, %p97
      %p99 = scmp.ne.s32.totalorder %s88, %s89
      %p100 = scmp.eq.s32.totalorder %s16, 0
      %p101 = por %p99, %p100
      %p102 = scmp.ne.s32.totalorder %s88, %s89
      %p103 = scmp.eq.s32.totalorder %s17, 2
      %p104 = por %p102, %p103
      %p106 = scmp.ne.s32.totalorder %s89, %s105
      %p107 = scmp.eq.s32.totalorder %s17, 0
      %p108 = por %p106, %p107
      %s109 = ssub.s32 %s19, %s26
      %p110 = scmp.eq.s32.totalorder %s109, 0
      %s112 = sadd.s32 %s111, 1
      %s113 = scalar_select %p110, %s111, %s112
      %p116 = pneg %p110
      %p117 = scmp.eq.s32.totalorder %s11, 2
      %p118 = por %p116, %p117
      %p119 = scmp.ne.s32.totalorder %s111, %s114
      %p120 = scmp.eq.s32.totalorder %s11, 0
      %p121 = por %p119, %p120
      %p122 = scmp.ne.s32.totalorder %s111, %s114
      %p123 = scmp.eq.s32.totalorder %s16, 2
      %p124 = por %p122, %p123
      %p125 = scmp.ne.s32.totalorder %s114, %s115
      %p126 = scmp.eq.s32.totalorder %s16, 0
      %p127 = por %p125, %p126
      %p128 = scmp.ne.s32.totalorder %s114, %s115
      %p129 = scmp.eq.s32.totalorder %s17, 2
      %p130 = por %p128, %p129
      %p132 = scmp.ne.s32.totalorder %s115, %s131
      %p133 = scmp.eq.s32.totalorder %s17, 0
      %p134 = por %p132, %p133
      %s135 = ssub.s32 %s18, %s30
      %p136 = scmp.eq.s32.totalorder %s135, 0
      %s138 = sadd.s32 %s137, 1
      %s139 = scalar_select %p136, %s137, %s138
      %p142 = pneg %p136
      %p143 = scmp.eq.s32.totalorder %s11, 2
      %p144 = por %p142, %p143
      %p145 = scmp.ne.s32.totalorder %s137, %s140
      %p146 = scmp.eq.s32.totalorder %s11, 0
      %p147 = por %p145, %p146
      %p148 = scmp.ne.s32.totalorder %s137, %s140
      %p149 = scmp.eq.s32.totalorder %s16, 2
      %p150 = por %p148, %p149
      %p151 = scmp.ne.s32.totalorder %s140, %s141
      %p152 = scmp.eq.s32.totalorder %s16, 0
      %p153 = por %p151, %p152
      %p154 = scmp.ne.s32.totalorder %s140, %s141
      %p155 = scmp.eq.s32.totalorder %s17, 2
      %p156 = por %p154, %p155
      %p158 = scmp.ne.s32.totalorder %s141, %s157
      %p159 = scmp.eq.s32.totalorder %s17, 0
      %p160 = por %p158, %p159
      %p161 = scmp.le.s32.totalorder 1, %s11
      %p162 = scmp.lt.s32.totalorder %s11, 4
      %p163 = pnand %p161, %p162
      %p164 = pneg %p163
      // Predicated region
      $region9: #{tpu_custom_call.1} parent=5 // pred_check
        _
      $region10: #{tpu_custom_call.1} parent=5 // pred_check_branch
        %166 = sbr.rel (%p163) target = $region12
      $region11: #{tpu_custom_call.1} parent=5 // pred_region
        %s167 = ssub.s32 %s11, 1
        // Predicated region
        $region13: #{tpu_custom_call.1} parent=11 // pred_check
          %p168 = pneg %p49
        $region14: #{tpu_custom_call.1} parent=11 // pred_check_branch
          %170 = sbr.rel (%p168) target = $region16
        $region15: #{tpu_custom_call.1} parent=11 // pred_region
          %s171 = smul.u32 2, %s20
          %p172 = scmp.lt.s32.totalorder %s171, 1
          %s173 = scalar_select %p172, %s171, 1
          %s174 = smul.addr %s173, 5
          %s175 = smul.addr %s174, 4
          %s176 = scalar_lea.vmem %s0, %s175
          %s177 = smul.u32 2, %s20
        $region16: #{tpu_custom_call.1} parent=11 // pred_fallthru
          _
      $region12: #{tpu_custom_call.1} parent=5 // pred_fallthru
        _
      %p178 = scmp.lt.s32.totalorder %s11, 3
      // Predicated region
      $region17: #{tpu_custom_call.1} parent=5 // pred_check
        %p179 = pneg %p178
      $region18: #{tpu_custom_call.1} parent=5 // pred_check_branch
        %181 = sbr.rel (%p179) target = $region20
      $region19: #{tpu_custom_call.1} parent=5 // pred_region
        // Predicated region
        $region21: #{tpu_custom_call.1} parent=19 // pred_check
          %p182 = pneg %p69
        $region22: #{tpu_custom_call.1} parent=19 // pred_check_branch
          %184 = sbr.rel (%p182) target = $region24
        $region23: #{tpu_custom_call.1} parent=19 // pred_region
          %s185 = sand.u32 %s59, 1
          %s186 = sand.u32 %s59, 1
          %s187 = smul.addr %s186, 1152
          %s188 = scalar_lea.vmem [#allocation3], %s187
          %s189 = smul.u32 4, %s19
          %s190 = smul.addr %s189, 4
          %s191 = scalar_lea.vmem %s1, %s190
          // Predicated region
          $region25: #{tpu_custom_call.1} parent=23 // pred_check
            _
          $region26: #{tpu_custom_call.1} parent=23 // pred_check_branch
            %193 = sbr.rel (0) target = $region28
          $region27: #{tpu_custom_call.1} parent=23 // pred_region
            // Predicated region
            $region29: #{tpu_custom_call.1} parent=27 // pred_check
              _
            $region30: #{tpu_custom_call.1} parent=27 // pred_check_branch
              %195 = sbr.rel (0) target = $region32
            $region31: #{tpu_custom_call.1} parent=27 // pred_region
              loop: start=0, step=1, limit=1
              $region33: #{tpu_custom_call.1} parent=31 // loop_pre_header
                _
              $region34: #{tpu_custom_call.1} parent=31 // loop_header
                %s197 = sphi 0, %s201
                %p198 = scmp.ge.s32.totalorder %s197, 1
                %s202 = sphi %s191, %s191
                %s203 = sphi %s188, %s188
              $region35: #{tpu_custom_call.1} parent=31 // loop_header_branch
                %200 = sbr.rel (%p198) target = $region39
              $region36: #{tpu_custom_call.1} parent=31 // loop_body
                %v204 = vld [vmem:[%s202] sm:$0xff]
                %205 = vst [vmem:[%s203] sm:$0xff] %v204
                %v206 = vld [vmem:[%s202 + $0x8] sm:$0xff]
                %207 = vst [vmem:[%s203 + $0x8] sm:$0xff] %v206
                %v208 = vld [vmem:[%s202 + $0x30] sm:$0xff]
                %209 = vst [vmem:[%s203 + $0x10] sm:$0xff] %v208
                %v210 = vld [vmem:[%s202 + $0x38] sm:$0xff]
                %211 = vst [vmem:[%s203 + $0x18] sm:$0xff] %v210
                %v212 = vld [vmem:[%s202 + $0x60] sm:$0xff]
                %213 = vst [vmem:[%s203 + $0x20] sm:$0xff] %v212
                %v214 = vld [vmem:[%s202 + $0x68] sm:$0xff]
                %215 = vst [vmem:[%s203 + $0x28] sm:$0xff] %v214
                %v216 = vld [vmem:[%s202 + $0x90] sm:$0xff]
                %217 = vst [vmem:[%s203 + $0x30] sm:$0xff] %v216
                %v218 = vld [vmem:[%s202 + $0x98] sm:$0xff]
                %219 = vst [vmem:[%s203 + $0x38] sm:$0xff] %v218
                %v220 = vld [vmem:[%s202 + $0xc0] sm:$0xff]
                %221 = vst [vmem:[%s203 + $0x40] sm:$0xff] %v220
                %v222 = vld [vmem:[%s202 + $0xc8] sm:$0xff]
                %223 = vst [vmem:[%s203 + $0x48] sm:$0xff] %v222
                %v224 = vld [vmem:[%s202 + $0xf0] sm:$0xff]
                %225 = vst [vmem:[%s203 + $0x50] sm:$0xff] %v224
                %v226 = vld [vmem:[%s202 + $0xf8] sm:$0xff]
                %227 = vst [vmem:[%s203 + $0x58] sm:$0xff] %v226
                %v228 = vld [vmem:[%s202 + $0x120] sm:$0xff]
                %229 = vst [vmem:[%s203 + $0x60] sm:$0xff] %v228
                %v230 = vld [vmem:[%s202 + $0x128] sm:$0xff]
                %231 = vst [vmem:[%s203 + $0x68] sm:$0xff] %v230
                %v232 = vld [vmem:[%s202 + $0x150] sm:$0xff]
                %233 = vst [vmem:[%s203 + $0x70] sm:$0xff] %v232
                %v234 = vld [vmem:[%s202 + $0x158] sm:$0xff]
                %235 = vst [vmem:[%s203 + $0x78] sm:$0xff] %v234
                %v236 = vld [vmem:[%s202 + $0x180] sm:$0xff]
                %237 = vst [vmem:[%s203 + $0x80] sm:$0xff] %v236
                %v238 = vld [vmem:[%s202 + $0x188] sm:$0xff]
                %239 = vst [vmem:[%s203 + $0x88] sm:$0xff] %v238
                %v240 = vld [vmem:[%s202 + $0x1b0] sm:$0xff]
                %241 = vst [vmem:[%s203 + $0x90] sm:$0xff] %v240
                %v242 = vld [vmem:[%s202 + $0x1b8] sm:$0xff]
                %243 = vst [vmem:[%s203 + $0x98] sm:$0xff] %v242
                %v244 = vld [vmem:[%s202 + $0x1e0] sm:$0xff]
                %245 = vst [vmem:[%s203 + $0xa0] sm:$0xff] %v244
                %v246 = vld [vmem:[%s202 + $0x1e8] sm:$0xff]
                %247 = vst [vmem:[%s203 + $0xa8] sm:$0xff] %v246
                %v248 = vld [vmem:[%s202 + $0x210] sm:$0xff]
                %249 = vst [vmem:[%s203 + $0xb0] sm:$0xff] %v248
                %v250 = vld [vmem:[%s202 + $0x218] sm:$0xff]
                %251 = vst [vmem:[%s203 + $0xb8] sm:$0xff] %v250
                %v252 = vld [vmem:[%s202 + $0x240] sm:$0xff]
                %253 = vst [vmem:[%s203 + $0xc0] sm:$0xff] %v252
                %v254 = vld [vmem:[%s202 + $0x248] sm:$0xff]
                %255 = vst [vmem:[%s203 + $0xc8] sm:$0xff] %v254
                %v256 = vld [vmem:[%s202 + $0x270] sm:$0xff]
                %257 = vst [vmem:[%s203 + $0xd0] sm:$0xff] %v256
                %v258 = vld [vmem:[%s202 + $0x278] sm:$0xff]
                %259 = vst [vmem:[%s203 + $0xd8] sm:$0xff] %v258
                %v260 = vld [vmem:[%s202 + $0x2a0] sm:$0xff]
                %261 = vst [vmem:[%s203 + $0xe0] sm:$0xff] %v260
                %v262 = vld [vmem:[%s202 + $0x2a8] sm:$0xff]
                %263 = vst [vmem:[%s203 + $0xe8] sm:$0xff] %v262
                %v264 = vld [vmem:[%s202 + $0x2d0] sm:$0xff]
                %265 = vst [vmem:[%s203 + $0xf0] sm:$0xff] %v264
                %v266 = vld [vmem:[%s202 + $0x2d8] sm:$0xff]
                %267 = vst [vmem:[%s203 + $0xf8] sm:$0xff] %v266
                %v268 = vld [vmem:[%s202 + $0x300] sm:$0xff]
                %269 = vst [vmem:[%s203 + $0x100] sm:$0xff] %v268
                %v270 = vld [vmem:[%s202 + $0x308] sm:$0xff]
                %271 = vst [vmem:[%s203 + $0x108] sm:$0xff] %v270
                %v272 = vld [vmem:[%s202 + $0x330] sm:$0xff]
                %273 = vst [vmem:[%s203 + $0x110] sm:$0xff] %v272
                %v274 = vld [vmem:[%s202 + $0x338] sm:$0xff]
                %275 = vst [vmem:[%s203 + $0x118] sm:$0xff] %v274
                %v276 = vld [vmem:[%s202 + $0x360] sm:$0xff]
                %277 = vst [vmem:[%s203 + $0x120] sm:$0xff] %v276
                %v278 = vld [vmem:[%s202 + $0x368] sm:$0xff]
                %279 = vst [vmem:[%s203 + $0x128] sm:$0xff] %v278
                %v280 = vld [vmem:[%s202 + $0x390] sm:$0xff]
                %281 = vst [vmem:[%s203 + $0x130] sm:$0xff] %v280
                %v282 = vld [vmem:[%s202 + $0x398] sm:$0xff]
                %283 = vst [vmem:[%s203 + $0x138] sm:$0xff] %v282
                %v284 = vld [vmem:[%s202 + $0x3c0] sm:$0xff]
                %285 = vst [vmem:[%s203 + $0x140] sm:$0xff] %v284
                %v286 = vld [vmem:[%s202 + $0x3c8] sm:$0xff]
                %287 = vst [vmem:[%s203 + $0x148] sm:$0xff] %v286
                %v288 = vld [vmem:[%s202 + $0x3f0] sm:$0xff]
                %289 = vst [vmem:[%s203 + $0x150] sm:$0xff] %v288
                %v290 = vld [vmem:[%s202 + $0x3f8] sm:$0xff]
                %291 = vst [vmem:[%s203 + $0x158] sm:$0xff] %v290
                %v292 = vld [vmem:[%s202 + $0x420] sm:$0xff]
                %293 = vst [vmem:[%s203 + $0x160] sm:$0xff] %v292
                %v294 = vld [vmem:[%s202 + $0x428] sm:$0xff]
                %295 = vst [vmem:[%s203 + $0x168] sm:$0xff] %v294
                %v296 = vld [vmem:[%s202 + $0x450] sm:$0xff]
                %297 = vst [vmem:[%s203 + $0x170] sm:$0xff] %v296
                %v298 = vld [vmem:[%s202 + $0x458] sm:$0xff]
                %299 = vst [vmem:[%s203 + $0x178] sm:$0xff] %v298
                %v300 = vld [vmem:[%s202 + $0x480] sm:$0xff]
                %301 = vst [vmem:[%s203 + $0x180] sm:$0xff] %v300
                %v302 = vld [vmem:[%s202 + $0x488] sm:$0xff]
                %303 = vst [vmem:[%s203 + $0x188] sm:$0xff] %v302
                %v304 = vld [vmem:[%s202 + $0x4b0] sm:$0xff]
                %305 = vst [vmem:[%s203 + $0x190] sm:$0xff] %v304
                %v306 = vld [vmem:[%s202 + $0x4b8] sm:$0xff]
                %307 = vst [vmem:[%s203 + $0x198] sm:$0xff] %v306
                %v308 = vld [vmem:[%s202 + $0x4e0] sm:$0xff]
                %309 = vst [vmem:[%s203 + $0x1a0] sm:$0xff] %v308
                %v310 = vld [vmem:[%s202 + $0x4e8] sm:$0xff]
                %311 = vst [vmem:[%s203 + $0x1a8] sm:$0xff] %v310
                %v312 = vld [vmem:[%s202 + $0x510] sm:$0xff]
                %313 = vst [vmem:[%s203 + $0x1b0] sm:$0xff] %v312
                %v314 = vld [vmem:[%s202 + $0x518] sm:$0xff]
                %315 = vst [vmem:[%s203 + $0x1b8] sm:$0xff] %v314
                %v316 = vld [vmem:[%s202 + $0x540] sm:$0xff]
                %317 = vst [vmem:[%s203 + $0x1c0] sm:$0xff] %v316
                %v318 = vld [vmem:[%s202 + $0x548] sm:$0xff]
                %319 = vst [vmem:[%s203 + $0x1c8] sm:$0xff] %v318
                %v320 = vld [vmem:[%s202 + $0x570] sm:$0xff]
                %321 = vst [vmem:[%s203 + $0x1d0] sm:$0xff] %v320
                %v322 = vld [vmem:[%s202 + $0x578] sm:$0xff]
                %323 = vst [vmem:[%s203 + $0x1d8] sm:$0xff] %v322
                %v324 = vld [vmem:[%s202 + $0x5a0] sm:$0xff]
                %325 = vst [vmem:[%s203 + $0x1e0] sm:$0xff] %v324
                %v326 = vld [vmem:[%s202 + $0x5a8] sm:$0xff]
                %327 = vst [vmem:[%s203 + $0x1e8] sm:$0xff] %v326
                %v328 = vld [vmem:[%s202 + $0x5d0] sm:$0xff]
                %329 = vst [vmem:[%s203 + $0x1f0] sm:$0xff] %v328
                %v330 = vld [vmem:[%s202 + $0x5d8] sm:$0xff]
                %331 = vst [vmem:[%s203 + $0x1f8] sm:$0xff] %v330
                %v332 = vld [vmem:[%s202 + $0x600] sm:$0xff]
                %333 = vst [vmem:[%s203 + $0x200] sm:$0xff] %v332
                %v334 = vld [vmem:[%s202 + $0x608] sm:$0xff]
                %335 = vst [vmem:[%s203 + $0x208] sm:$0xff] %v334
                %v336 = vld [vmem:[%s202 + $0x630] sm:$0xff]
                %337 = vst [vmem:[%s203 + $0x210] sm:$0xff] %v336
                %v338 = vld [vmem:[%s202 + $0x638] sm:$0xff]
                %339 = vst [vmem:[%s203 + $0x218] sm:$0xff] %v338
                %v340 = vld [vmem:[%s202 + $0x660] sm:$0xff]
                %341 = vst [vmem:[%s203 + $0x220] sm:$0xff] %v340
                %v342 = vld [vmem:[%s202 + $0x668] sm:$0xff]
                %343 = vst [vmem:[%s203 + $0x228] sm:$0xff] %v342
                %v344 = vld [vmem:[%s202 + $0x690] sm:$0xff]
                %345 = vst [vmem:[%s203 + $0x230] sm:$0xff] %v344
                %v346 = vld [vmem:[%s202 + $0x698] sm:$0xff]
                %347 = vst [vmem:[%s203 + $0x238] sm:$0xff] %v346
                %v348 = vld [vmem:[%s202 + $0x6c0] sm:$0xff]
                %349 = vst [vmem:[%s203 + $0x240] sm:$0xff] %v348
                %v350 = vld [vmem:[%s202 + $0x6c8] sm:$0xff]
                %351 = vst [vmem:[%s203 + $0x248] sm:$0xff] %v350
                %v352 = vld [vmem:[%s202 + $0x6f0] sm:$0xff]
                %353 = vst [vmem:[%s203 + $0x250] sm:$0xff] %v352
                %v354 = vld [vmem:[%s202 + $0x6f8] sm:$0xff]
                %355 = vst [vmem:[%s203 + $0x258] sm:$0xff] %v354
                %v356 = vld [vmem:[%s202 + $0x720] sm:$0xff]
                %357 = vst [vmem:[%s203 + $0x260] sm:$0xff] %v356
                %v358 = vld [vmem:[%s202 + $0x728] sm:$0xff]
                %359 = vst [vmem:[%s203 + $0x268] sm:$0xff] %v358
                %v360 = vld [vmem:[%s202 + $0x750] sm:$0xff]
                %361 = vst [vmem:[%s203 + $0x270] sm:$0xff] %v360
                %v362 = vld [vmem:[%s202 + $0x758] sm:$0xff]
                %363 = vst [vmem:[%s203 + $0x278] sm:$0xff] %v362
                %v364 = vld [vmem:[%s202 + $0x780] sm:$0xff]
                %365 = vst [vmem:[%s203 + $0x280] sm:$0xff] %v364
                %v366 = vld [vmem:[%s202 + $0x788] sm:$0xff]
                %367 = vst [vmem:[%s203 + $0x288] sm:$0xff] %v366
                %v368 = vld [vmem:[%s202 + $0x7b0] sm:$0xff]
                %369 = vst [vmem:[%s203 + $0x290] sm:$0xff] %v368
                %v370 = vld [vmem:[%s202 + $0x7b8] sm:$0xff]
                %371 = vst [vmem:[%s203 + $0x298] sm:$0xff] %v370
                %v372 = vld [vmem:[%s202 + $0x7e0] sm:$0xff]
                %373 = vst [vmem:[%s203 + $0x2a0] sm:$0xff] %v372
                %v374 = vld [vmem:[%s202 + $0x7e8] sm:$0xff]
                %375 = vst [vmem:[%s203 + $0x2a8] sm:$0xff] %v374
                %v376 = vld [vmem:[%s202 + $0x810] sm:$0xff]
                %377 = vst [vmem:[%s203 + $0x2b0] sm:$0xff] %v376
                %v378 = vld [vmem:[%s202 + $0x818] sm:$0xff]
                %379 = vst [vmem:[%s203 + $0x2b8] sm:$0xff] %v378
                %v380 = vld [vmem:[%s202 + $0x840] sm:$0xff]
                %381 = vst [vmem:[%s203 + $0x2c0] sm:$0xff] %v380
                %v382 = vld [vmem:[%s202 + $0x848] sm:$0xff]
                %383 = vst [vmem:[%s203 + $0x2c8] sm:$0xff] %v382
                %v384 = vld [vmem:[%s202 + $0x870] sm:$0xff]
                %385 = vst [vmem:[%s203 + $0x2d0] sm:$0xff] %v384
                %v386 = vld [vmem:[%s202 + $0x878] sm:$0xff]
                %387 = vst [vmem:[%s203 + $0x2d8] sm:$0xff] %v386
                %v388 = vld [vmem:[%s202 + $0x8a0] sm:$0xff]
                %389 = vst [vmem:[%s203 + $0x2e0] sm:$0xff] %v388
                %v390 = vld [vmem:[%s202 + $0x8a8] sm:$0xff]
                %391 = vst [vmem:[%s203 + $0x2e8] sm:$0xff] %v390
                %v392 = vld [vmem:[%s202 + $0x8d0] sm:$0xff]
                %393 = vst [vmem:[%s203 + $0x2f0] sm:$0xff] %v392
                %v394 = vld [vmem:[%s202 + $0x8d8] sm:$0xff]
                %395 = vst [vmem:[%s203 + $0x2f8] sm:$0xff] %v394
                %v396 = vld [vmem:[%s202 + $0x900] sm:$0xff]
                %397 = vst [vmem:[%s203 + $0x300] sm:$0xff] %v396
                %v398 = vld [vmem:[%s202 + $0x908] sm:$0xff]
                %399 = vst [vmem:[%s203 + $0x308] sm:$0xff] %v398
                %v400 = vld [vmem:[%s202 + $0x930] sm:$0xff]
                %401 = vst [vmem:[%s203 + $0x310] sm:$0xff] %v400
                %v402 = vld [vmem:[%s202 + $0x938] sm:$0xff]
                %403 = vst [vmem:[%s203 + $0x318] sm:$0xff] %v402
                %v404 = vld [vmem:[%s202 + $0x960] sm:$0xff]
                %405 = vst [vmem:[%s203 + $0x320] sm:$0xff] %v404
                %v406 = vld [vmem:[%s202 + $0x968] sm:$0xff]
                %407 = vst [vmem:[%s203 + $0x328] sm:$0xff] %v406
                %v408 = vld [vmem:[%s202 + $0x990] sm:$0xff]
                %409 = vst [vmem:[%s203 + $0x330] sm:$0xff] %v408
                %v410 = vld [vmem:[%s202 + $0x998] sm:$0xff]
                %411 = vst [vmem:[%s203 + $0x338] sm:$0xff] %v410
                %v412 = vld [vmem:[%s202 + $0x9c0] sm:$0xff]
                %413 = vst [vmem:[%s203 + $0x340] sm:$0xff] %v412
                %v414 = vld [vmem:[%s202 + $0x9c8] sm:$0xff]
                %415 = vst [vmem:[%s203 + $0x348] sm:$0xff] %v414
                %v416 = vld [vmem:[%s202 + $0x9f0] sm:$0xff]
                %417 = vst [vmem:[%s203 + $0x350] sm:$0xff] %v416
                %v418 = vld [vmem:[%s202 + $0x9f8] sm:$0xff]
                %419 = vst [vmem:[%s203 + $0x358] sm:$0xff] %v418
                %v420 = vld [vmem:[%s202 + $0xa20] sm:$0xff]
                %421 = vst [vmem:[%s203 + $0x360] sm:$0xff] %v420
                %v422 = vld [vmem:[%s202 + $0xa28] sm:$0xff]
                %423 = vst [vmem:[%s203 + $0x368] sm:$0xff] %v422
                %v424 = vld [vmem:[%s202 + $0xa50] sm:$0xff]
                %425 = vst [vmem:[%s203 + $0x370] sm:$0xff] %v424
                %v426 = vld [vmem:[%s202 + $0xa58] sm:$0xff]
                %427 = vst [vmem:[%s203 + $0x378] sm:$0xff] %v426
                %v428 = vld [vmem:[%s202 + $0xa80] sm:$0xff]
                %429 = vst [vmem:[%s203 + $0x380] sm:$0xff] %v428
                %v430 = vld [vmem:[%s202 + $0xa88] sm:$0xff]
                %431 = vst [vmem:[%s203 + $0x388] sm:$0xff] %v430
                %v432 = vld [vmem:[%s202 + $0xab0] sm:$0xff]
                %433 = vst [vmem:[%s203 + $0x390] sm:$0xff] %v432
                %v434 = vld [vmem:[%s202 + $0xab8] sm:$0xff]
                %435 = vst [vmem:[%s203 + $0x398] sm:$0xff] %v434
                %v436 = vld [vmem:[%s202 + $0xae0] sm:$0xff]
                %437 = vst [vmem:[%s203 + $0x3a0] sm:$0xff] %v436
                %v438 = vld [vmem:[%s202 + $0xae8] sm:$0xff]
                %439 = vst [vmem:[%s203 + $0x3a8] sm:$0xff] %v438
                %v440 = vld [vmem:[%s202 + $0xb10] sm:$0xff]
                %441 = vst [vmem:[%s203 + $0x3b0] sm:$0xff] %v440
                %v442 = vld [vmem:[%s202 + $0xb18] sm:$0xff]
                %443 = vst [vmem:[%s203 + $0x3b8] sm:$0xff] %v442
                %v444 = vld [vmem:[%s202 + $0xb40] sm:$0xff]
                %445 = vst [vmem:[%s203 + $0x3c0] sm:$0xff] %v444
                %v446 = vld [vmem:[%s202 + $0xb48] sm:$0xff]
                %447 = vst [vmem:[%s203 + $0x3c8] sm:$0xff] %v446
                %v448 = vld [vmem:[%s202 + $0xb70] sm:$0xff]
                %449 = vst [vmem:[%s203 + $0x3d0] sm:$0xff] %v448
                %v450 = vld [vmem:[%s202 + $0xb78] sm:$0xff]
                %451 = vst [vmem:[%s203 + $0x3d8] sm:$0xff] %v450
                %v452 = vld [vmem:[%s202 + $0xba0] sm:$0xff]
                %453 = vst [vmem:[%s203 + $0x3e0] sm:$0xff] %v452
                %v454 = vld [vmem:[%s202 + $0xba8] sm:$0xff]
                %455 = vst [vmem:[%s203 + $0x3e8] sm:$0xff] %v454
                %v456 = vld [vmem:[%s202 + $0xbd0] sm:$0xff]
                %457 = vst [vmem:[%s203 + $0x3f0] sm:$0xff] %v456
                %v458 = vld [vmem:[%s202 + $0xbd8] sm:$0xff]
                %459 = vst [vmem:[%s203 + $0x3f8] sm:$0xff] %v458
                %v460 = vld [vmem:[%s202 + $0xc00] sm:$0xff]
                %461 = vst [vmem:[%s203 + $0x400] sm:$0xff] %v460
                %v462 = vld [vmem:[%s202 + $0xc08] sm:$0xff]
                %463 = vst [vmem:[%s203 + $0x408] sm:$0xff] %v462
                %v464 = vld [vmem:[%s202 + $0xc30] sm:$0xff]
                %465 = vst [vmem:[%s203 + $0x410] sm:$0xff] %v464
                %v466 = vld [vmem:[%s202 + $0xc38] sm:$0xff]
                %467 = vst [vmem:[%s203 + $0x418] sm:$0xff] %v466
                %v468 = vld [vmem:[%s202 + $0xc60] sm:$0xff]
                %469 = vst [vmem:[%s203 + $0x420] sm:$0xff] %v468
                %v470 = vld [vmem:[%s202 + $0xc68] sm:$0xff]
                %471 = vst [vmem:[%s203 + $0x428] sm:$0xff] %v470
                %v472 = vld [vmem:[%s202 + $0xc90] sm:$0xff]
                %473 = vst [vmem:[%s203 + $0x430] sm:$0xff] %v472
                %v474 = vld [vmem:[%s202 + $0xc98] sm:$0xff]
                %475 = vst [vmem:[%s203 + $0x438] sm:$0xff] %v474
                %v476 = vld [vmem:[%s202 + $0xcc0] sm:$0xff]
                %477 = vst [vmem:[%s203 + $0x440] sm:$0xff] %v476
                %v478 = vld [vmem:[%s202 + $0xcc8] sm:$0xff]
                %479 = vst [vmem:[%s203 + $0x448] sm:$0xff] %v478
                %v480 = vld [vmem:[%s202 + $0xcf0] sm:$0xff]
                %481 = vst [vmem:[%s203 + $0x450] sm:$0xff] %v480
                %v482 = vld [vmem:[%s202 + $0xcf8] sm:$0xff]
                %483 = vst [vmem:[%s203 + $0x458] sm:$0xff] %v482
                %v484 = vld [vmem:[%s202 + $0xd20] sm:$0xff]
                %485 = vst [vmem:[%s203 + $0x460] sm:$0xff] %v484
                %v486 = vld [vmem:[%s202 + $0xd28] sm:$0xff]
                %487 = vst [vmem:[%s203 + $0x468] sm:$0xff] %v486
                %v488 = vld [vmem:[%s202 + $0xd50] sm:$0xff]
                %489 = vst [vmem:[%s203 + $0x470] sm:$0xff] %v488
                %v490 = vld [vmem:[%s202 + $0xd58] sm:$0xff]
                %491 = vst [vmem:[%s203 + $0x478] sm:$0xff] %v490
              $region37: #{tpu_custom_call.1} parent=31 // loop_footer
                %s201 = sadd.s32 1, %s197
              $region38: #{tpu_custom_call.1} parent=31 // loop_footer_branch
                %196 = sbr.rel target = $region34
              $region39: #{tpu_custom_call.1} parent=31 // loop_exit
                _
            $region32: #{tpu_custom_call.1} parent=27 // pred_fallthru
              _
            // Predicated region
            $region40: #{tpu_custom_call.1} parent=27 // pred_check
              _
            $region41: #{tpu_custom_call.1} parent=27 // pred_check_branch
              %493 = sbr.rel target = $region43
            $region42: #{tpu_custom_call.1} parent=27 // pred_region
              _
            $region43: #{tpu_custom_call.1} parent=27 // pred_fallthru
              _
          $region28: #{tpu_custom_call.1} parent=23 // pred_fallthru
            _
          %494 = vnop
        $region24: #{tpu_custom_call.1} parent=19 // pred_fallthru
          _
        // Predicated region
        $region44: #{tpu_custom_call.1} parent=19 // pred_check
          %p495 = pneg %p95
        $region45: #{tpu_custom_call.1} parent=19 // pred_check_branch
          %497 = sbr.rel (%p495) target = $region47
        $region46: #{tpu_custom_call.1} parent=19 // pred_region
          %s498 = sand.u32 %s85, 1
          %s499 = sand.u32 %s85, 1
          %s500 = smul.addr %s499, 1152
          %s501 = scalar_lea.vmem [#allocation4], %s500
          %s502 = smul.u32 4, %s19
          %s503 = smul.addr %s502, 4
          %s504 = scalar_lea.vmem %s2, %s503
          // Predicated region
          $region48: #{tpu_custom_call.1} parent=46 // pred_check
            _
          $region49: #{tpu_custom_call.1} parent=46 // pred_check_branch
            %506 = sbr.rel (0) target = $region51
          $region50: #{tpu_custom_call.1} parent=46 // pred_region
            // Predicated region
            $region52: #{tpu_custom_call.1} parent=50 // pred_check
              _
            $region53: #{tpu_custom_call.1} parent=50 // pred_check_branch
              %508 = sbr.rel (0) target = $region55
            $region54: #{tpu_custom_call.1} parent=50 // pred_region
              loop: start=0, step=1, limit=1
              $region56: #{tpu_custom_call.1} parent=54 // loop_pre_header
                _
              $region57: #{tpu_custom_call.1} parent=54 // loop_header
                %s510 = sphi 0, %s514
                %p511 = scmp.ge.s32.totalorder %s510, 1
                %s515 = sphi %s504, %s504
                %s516 = sphi %s501, %s501
              $region58: #{tpu_custom_call.1} parent=54 // loop_header_branch
                %513 = sbr.rel (%p511) target = $region62
              $region59: #{tpu_custom_call.1} parent=54 // loop_body
                %v517 = vld [vmem:[%s515] sm:$0xff]
                %518 = vst [vmem:[%s516] sm:$0xff] %v517
                %v519 = vld [vmem:[%s515 + $0x8] sm:$0xff]
                %520 = vst [vmem:[%s516 + $0x8] sm:$0xff] %v519
                %v521 = vld [vmem:[%s515 + $0x30] sm:$0xff]
                %522 = vst [vmem:[%s516 + $0x10] sm:$0xff] %v521
                %v523 = vld [vmem:[%s515 + $0x38] sm:$0xff]
                %524 = vst [vmem:[%s516 + $0x18] sm:$0xff] %v523
                %v525 = vld [vmem:[%s515 + $0x60] sm:$0xff]
                %526 = vst [vmem:[%s516 + $0x20] sm:$0xff] %v525
                %v527 = vld [vmem:[%s515 + $0x68] sm:$0xff]
                %528 = vst [vmem:[%s516 + $0x28] sm:$0xff] %v527
                %v529 = vld [vmem:[%s515 + $0x90] sm:$0xff]
                %530 = vst [vmem:[%s516 + $0x30] sm:$0xff] %v529
                %v531 = vld [vmem:[%s515 + $0x98] sm:$0xff]
                %532 = vst [vmem:[%s516 + $0x38] sm:$0xff] %v531
                %v533 = vld [vmem:[%s515 + $0xc0] sm:$0xff]
                %534 = vst [vmem:[%s516 + $0x40] sm:$0xff] %v533
                %v535 = vld [vmem:[%s515 + $0xc8] sm:$0xff]
                %536 = vst [vmem:[%s516 + $0x48] sm:$0xff] %v535
                %v537 = vld [vmem:[%s515 + $0xf0] sm:$0xff]
                %538 = vst [vmem:[%s516 + $0x50] sm:$0xff] %v537
                %v539 = vld [vmem:[%s515 + $0xf8] sm:$0xff]
                %540 = vst [vmem:[%s516 + $0x58] sm:$0xff] %v539
                %v541 = vld [vmem:[%s515 + $0x120] sm:$0xff]
                %542 = vst [vmem:[%s516 + $0x60] sm:$0xff] %v541
                %v543 = vld [vmem:[%s515 + $0x128] sm:$0xff]
                %544 = vst [vmem:[%s516 + $0x68] sm:$0xff] %v543
                %v545 = vld [vmem:[%s515 + $0x150] sm:$0xff]
                %546 = vst [vmem:[%s516 + $0x70] sm:$0xff] %v545
                %v547 = vld [vmem:[%s515 + $0x158] sm:$0xff]
                %548 = vst [vmem:[%s516 + $0x78] sm:$0xff] %v547
                %v549 = vld [vmem:[%s515 + $0x180] sm:$0xff]
                %550 = vst [vmem:[%s516 + $0x80] sm:$0xff] %v549
                %v551 = vld [vmem:[%s515 + $0x188] sm:$0xff]
                %552 = vst [vmem:[%s516 + $0x88] sm:$0xff] %v551
                %v553 = vld [vmem:[%s515 + $0x1b0] sm:$0xff]
                %554 = vst [vmem:[%s516 + $0x90] sm:$0xff] %v553
                %v555 = vld [vmem:[%s515 + $0x1b8] sm:$0xff]
                %556 = vst [vmem:[%s516 + $0x98] sm:$0xff] %v555
                %v557 = vld [vmem:[%s515 + $0x1e0] sm:$0xff]
                %558 = vst [vmem:[%s516 + $0xa0] sm:$0xff] %v557
                %v559 = vld [vmem:[%s515 + $0x1e8] sm:$0xff]
                %560 = vst [vmem:[%s516 + $0xa8] sm:$0xff] %v559
                %v561 = vld [vmem:[%s515 + $0x210] sm:$0xff]
                %562 = vst [vmem:[%s516 + $0xb0] sm:$0xff] %v561
                %v563 = vld [vmem:[%s515 + $0x218] sm:$0xff]
                %564 = vst [vmem:[%s516 + $0xb8] sm:$0xff] %v563
                %v565 = vld [vmem:[%s515 + $0x240] sm:$0xff]
                %566 = vst [vmem:[%s516 + $0xc0] sm:$0xff] %v565
                %v567 = vld [vmem:[%s515 + $0x248] sm:$0xff]
                %568 = vst [vmem:[%s516 + $0xc8] sm:$0xff] %v567
                %v569 = vld [vmem:[%s515 + $0x270] sm:$0xff]
                %570 = vst [vmem:[%s516 + $0xd0] sm:$0xff] %v569
                %v571 = vld [vmem:[%s515 + $0x278] sm:$0xff]
                %572 = vst [vmem:[%s516 + $0xd8] sm:$0xff] %v571
                %v573 = vld [vmem:[%s515 + $0x2a0] sm:$0xff]
                %574 = vst [vmem:[%s516 + $0xe0] sm:$0xff] %v573
                %v575 = vld [vmem:[%s515 + $0x2a8] sm:$0xff]
                %576 = vst [vmem:[%s516 + $0xe8] sm:$0xff] %v575
                %v577 = vld [vmem:[%s515 + $0x2d0] sm:$0xff]
                %578 = vst [vmem:[%s516 + $0xf0] sm:$0xff] %v577
                %v579 = vld [vmem:[%s515 + $0x2d8] sm:$0xff]
                %580 = vst [vmem:[%s516 + $0xf8] sm:$0xff] %v579
                %v581 = vld [vmem:[%s515 + $0x300] sm:$0xff]
                %582 = vst [vmem:[%s516 + $0x100] sm:$0xff] %v581
                %v583 = vld [vmem:[%s515 + $0x308] sm:$0xff]
                %584 = vst [vmem:[%s516 + $0x108] sm:$0xff] %v583
                %v585 = vld [vmem:[%s515 + $0x330] sm:$0xff]
                %586 = vst [vmem:[%s516 + $0x110] sm:$0xff] %v585
                %v587 = vld [vmem:[%s515 + $0x338] sm:$0xff]
                %588 = vst [vmem:[%s516 + $0x118] sm:$0xff] %v587
                %v589 = vld [vmem:[%s515 + $0x360] sm:$0xff]
                %590 = vst [vmem:[%s516 + $0x120] sm:$0xff] %v589
                %v591 = vld [vmem:[%s515 + $0x368] sm:$0xff]
                %592 = vst [vmem:[%s516 + $0x128] sm:$0xff] %v591
                %v593 = vld [vmem:[%s515 + $0x390] sm:$0xff]
                %594 = vst [vmem:[%s516 + $0x130] sm:$0xff] %v593
                %v595 = vld [vmem:[%s515 + $0x398] sm:$0xff]
                %596 = vst [vmem:[%s516 + $0x138] sm:$0xff] %v595
                %v597 = vld [vmem:[%s515 + $0x3c0] sm:$0xff]
                %598 = vst [vmem:[%s516 + $0x140] sm:$0xff] %v597
                %v599 = vld [vmem:[%s515 + $0x3c8] sm:$0xff]
                %600 = vst [vmem:[%s516 + $0x148] sm:$0xff] %v599
                %v601 = vld [vmem:[%s515 + $0x3f0] sm:$0xff]
                %602 = vst [vmem:[%s516 + $0x150] sm:$0xff] %v601
                %v603 = vld [vmem:[%s515 + $0x3f8] sm:$0xff]
                %604 = vst [vmem:[%s516 + $0x158] sm:$0xff] %v603
                %v605 = vld [vmem:[%s515 + $0x420] sm:$0xff]
                %606 = vst [vmem:[%s516 + $0x160] sm:$0xff] %v605
                %v607 = vld [vmem:[%s515 + $0x428] sm:$0xff]
                %608 = vst [vmem:[%s516 + $0x168] sm:$0xff] %v607
                %v609 = vld [vmem:[%s515 + $0x450] sm:$0xff]
                %610 = vst [vmem:[%s516 + $0x170] sm:$0xff] %v609
                %v611 = vld [vmem:[%s515 + $0x458] sm:$0xff]
                %612 = vst [vmem:[%s516 + $0x178] sm:$0xff] %v611
                %v613 = vld [vmem:[%s515 + $0x480] sm:$0xff]
                %614 = vst [vmem:[%s516 + $0x180] sm:$0xff] %v613
                %v615 = vld [vmem:[%s515 + $0x488] sm:$0xff]
                %616 = vst [vmem:[%s516 + $0x188] sm:$0xff] %v615
                %v617 = vld [vmem:[%s515 + $0x4b0] sm:$0xff]
                %618 = vst [vmem:[%s516 + $0x190] sm:$0xff] %v617
                %v619 = vld [vmem:[%s515 + $0x4b8] sm:$0xff]
                %620 = vst [vmem:[%s516 + $0x198] sm:$0xff] %v619
                %v621 = vld [vmem:[%s515 + $0x4e0] sm:$0xff]
                %622 = vst [vmem:[%s516 + $0x1a0] sm:$0xff] %v621
                %v623 = vld [vmem:[%s515 + $0x4e8] sm:$0xff]
                %624 = vst [vmem:[%s516 + $0x1a8] sm:$0xff] %v623
                %v625 = vld [vmem:[%s515 + $0x510] sm:$0xff]
                %626 = vst [vmem:[%s516 + $0x1b0] sm:$0xff] %v625
                %v627 = vld [vmem:[%s515 + $0x518] sm:$0xff]
                %628 = vst [vmem:[%s516 + $0x1b8] sm:$0xff] %v627
                %v629 = vld [vmem:[%s515 + $0x540] sm:$0xff]
                %630 = vst [vmem:[%s516 + $0x1c0] sm:$0xff] %v629
                %v631 = vld [vmem:[%s515 + $0x548] sm:$0xff]
                %632 = vst [vmem:[%s516 + $0x1c8] sm:$0xff] %v631
                %v633 = vld [vmem:[%s515 + $0x570] sm:$0xff]
                %634 = vst [vmem:[%s516 + $0x1d0] sm:$0xff] %v633
                %v635 = vld [vmem:[%s515 + $0x578] sm:$0xff]
                %636 = vst [vmem:[%s516 + $0x1d8] sm:$0xff] %v635
                %v637 = vld [vmem:[%s515 + $0x5a0] sm:$0xff]
                %638 = vst [vmem:[%s516 + $0x1e0] sm:$0xff] %v637
                %v639 = vld [vmem:[%s515 + $0x5a8] sm:$0xff]
                %640 = vst [vmem:[%s516 + $0x1e8] sm:$0xff] %v639
                %v641 = vld [vmem:[%s515 + $0x5d0] sm:$0xff]
                %642 = vst [vmem:[%s516 + $0x1f0] sm:$0xff] %v641
                %v643 = vld [vmem:[%s515 + $0x5d8] sm:$0xff]
                %644 = vst [vmem:[%s516 + $0x1f8] sm:$0xff] %v643
                %v645 = vld [vmem:[%s515 + $0x600] sm:$0xff]
                %646 = vst [vmem:[%s516 + $0x200] sm:$0xff] %v645
                %v647 = vld [vmem:[%s515 + $0x608] sm:$0xff]
                %648 = vst [vmem:[%s516 + $0x208] sm:$0xff] %v647
                %v649 = vld [vmem:[%s515 + $0x630] sm:$0xff]
                %650 = vst [vmem:[%s516 + $0x210] sm:$0xff] %v649
                %v651 = vld [vmem:[%s515 + $0x638] sm:$0xff]
                %652 = vst [vmem:[%s516 + $0x218] sm:$0xff] %v651
                %v653 = vld [vmem:[%s515 + $0x660] sm:$0xff]
                %654 = vst [vmem:[%s516 + $0x220] sm:$0xff] %v653
                %v655 = vld [vmem:[%s515 + $0x668] sm:$0xff]
                %656 = vst [vmem:[%s516 + $0x228] sm:$0xff] %v655
                %v657 = vld [vmem:[%s515 + $0x690] sm:$0xff]
                %658 = vst [vmem:[%s516 + $0x230] sm:$0xff] %v657
                %v659 = vld [vmem:[%s515 + $0x698] sm:$0xff]
                %660 = vst [vmem:[%s516 + $0x238] sm:$0xff] %v659
                %v661 = vld [vmem:[%s515 + $0x6c0] sm:$0xff]
                %662 = vst [vmem:[%s516 + $0x240] sm:$0xff] %v661
                %v663 = vld [vmem:[%s515 + $0x6c8] sm:$0xff]
                %664 = vst [vmem:[%s516 + $0x248] sm:$0xff] %v663
                %v665 = vld [vmem:[%s515 + $0x6f0] sm:$0xff]
                %666 = vst [vmem:[%s516 + $0x250] sm:$0xff] %v665
                %v667 = vld [vmem:[%s515 + $0x6f8] sm:$0xff]
                %668 = vst [vmem:[%s516 + $0x258] sm:$0xff] %v667
                %v669 = vld [vmem:[%s515 + $0x720] sm:$0xff]
                %670 = vst [vmem:[%s516 + $0x260] sm:$0xff] %v669
                %v671 = vld [vmem:[%s515 + $0x728] sm:$0xff]
                %672 = vst [vmem:[%s516 + $0x268] sm:$0xff] %v671
                %v673 = vld [vmem:[%s515 + $0x750] sm:$0xff]
                %674 = vst [vmem:[%s516 + $0x270] sm:$0xff] %v673
                %v675 = vld [vmem:[%s515 + $0x758] sm:$0xff]
                %676 = vst [vmem:[%s516 + $0x278] sm:$0xff] %v675
                %v677 = vld [vmem:[%s515 + $0x780] sm:$0xff]
                %678 = vst [vmem:[%s516 + $0x280] sm:$0xff] %v677
                %v679 = vld [vmem:[%s515 + $0x788] sm:$0xff]
                %680 = vst [vmem:[%s516 + $0x288] sm:$0xff] %v679
                %v681 = vld [vmem:[%s515 + $0x7b0] sm:$0xff]
                %682 = vst [vmem:[%s516 + $0x290] sm:$0xff] %v681
                %v683 = vld [vmem:[%s515 + $0x7b8] sm:$0xff]
                %684 = vst [vmem:[%s516 + $0x298] sm:$0xff] %v683
                %v685 = vld [vmem:[%s515 + $0x7e0] sm:$0xff]
                %686 = vst [vmem:[%s516 + $0x2a0] sm:$0xff] %v685
                %v687 = vld [vmem:[%s515 + $0x7e8] sm:$0xff]
                %688 = vst [vmem:[%s516 + $0x2a8] sm:$0xff] %v687
                %v689 = vld [vmem:[%s515 + $0x810] sm:$0xff]
                %690 = vst [vmem:[%s516 + $0x2b0] sm:$0xff] %v689
                %v691 = vld [vmem:[%s515 + $0x818] sm:$0xff]
                %692 = vst [vmem:[%s516 + $0x2b8] sm:$0xff] %v691
                %v693 = vld [vmem:[%s515 + $0x840] sm:$0xff]
                %694 = vst [vmem:[%s516 + $0x2c0] sm:$0xff] %v693
                %v695 = vld [vmem:[%s515 + $0x848] sm:$0xff]
                %696 = vst [vmem:[%s516 + $0x2c8] sm:$0xff] %v695
                %v697 = vld [vmem:[%s515 + $0x870] sm:$0xff]
                %698 = vst [vmem:[%s516 + $0x2d0] sm:$0xff] %v697
                %v699 = vld [vmem:[%s515 + $0x878] sm:$0xff]
                %700 = vst [vmem:[%s516 + $0x2d8] sm:$0xff] %v699
                %v701 = vld [vmem:[%s515 + $0x8a0] sm:$0xff]
                %702 = vst [vmem:[%s516 + $0x2e0] sm:$0xff] %v701
                %v703 = vld [vmem:[%s515 + $0x8a8] sm:$0xff]
                %704 = vst [vmem:[%s516 + $0x2e8] sm:$0xff] %v703
                %v705 = vld [vmem:[%s515 + $0x8d0] sm:$0xff]
                %706 = vst [vmem:[%s516 + $0x2f0] sm:$0xff] %v705
                %v707 = vld [vmem:[%s515 + $0x8d8] sm:$0xff]
                %708 = vst [vmem:[%s516 + $0x2f8] sm:$0xff] %v707
                %v709 = vld [vmem:[%s515 + $0x900] sm:$0xff]
                %710 = vst [vmem:[%s516 + $0x300] sm:$0xff] %v709
                %v711 = vld [vmem:[%s515 + $0x908] sm:$0xff]
                %712 = vst [vmem:[%s516 + $0x308] sm:$0xff] %v711
                %v713 = vld [vmem:[%s515 + $0x930] sm:$0xff]
                %714 = vst [vmem:[%s516 + $0x310] sm:$0xff] %v713
                %v715 = vld [vmem:[%s515 + $0x938] sm:$0xff]
                %716 = vst [vmem:[%s516 + $0x318] sm:$0xff] %v715
                %v717 = vld [vmem:[%s515 + $0x960] sm:$0xff]
                %718 = vst [vmem:[%s516 + $0x320] sm:$0xff] %v717
                %v719 = vld [vmem:[%s515 + $0x968] sm:$0xff]
                %720 = vst [vmem:[%s516 + $0x328] sm:$0xff] %v719
                %v721 = vld [vmem:[%s515 + $0x990] sm:$0xff]
                %722 = vst [vmem:[%s516 + $0x330] sm:$0xff] %v721
                %v723 = vld [vmem:[%s515 + $0x998] sm:$0xff]
                %724 = vst [vmem:[%s516 + $0x338] sm:$0xff] %v723
                %v725 = vld [vmem:[%s515 + $0x9c0] sm:$0xff]
                %726 = vst [vmem:[%s516 + $0x340] sm:$0xff] %v725
                %v727 = vld [vmem:[%s515 + $0x9c8] sm:$0xff]
                %728 = vst [vmem:[%s516 + $0x348] sm:$0xff] %v727
                %v729 = vld [vmem:[%s515 + $0x9f0] sm:$0xff]
                %730 = vst [vmem:[%s516 + $0x350] sm:$0xff] %v729
                %v731 = vld [vmem:[%s515 + $0x9f8] sm:$0xff]
                %732 = vst [vmem:[%s516 + $0x358] sm:$0xff] %v731
                %v733 = vld [vmem:[%s515 + $0xa20] sm:$0xff]
                %734 = vst [vmem:[%s516 + $0x360] sm:$0xff] %v733
                %v735 = vld [vmem:[%s515 + $0xa28] sm:$0xff]
                %736 = vst [vmem:[%s516 + $0x368] sm:$0xff] %v735
                %v737 = vld [vmem:[%s515 + $0xa50] sm:$0xff]
                %738 = vst [vmem:[%s516 + $0x370] sm:$0xff] %v737
                %v739 = vld [vmem:[%s515 + $0xa58] sm:$0xff]
                %740 = vst [vmem:[%s516 + $0x378] sm:$0xff] %v739
                %v741 = vld [vmem:[%s515 + $0xa80] sm:$0xff]
                %742 = vst [vmem:[%s516 + $0x380] sm:$0xff] %v741
                %v743 = vld [vmem:[%s515 + $0xa88] sm:$0xff]
                %744 = vst [vmem:[%s516 + $0x388] sm:$0xff] %v743
                %v745 = vld [vmem:[%s515 + $0xab0] sm:$0xff]
                %746 = vst [vmem:[%s516 + $0x390] sm:$0xff] %v745
                %v747 = vld [vmem:[%s515 + $0xab8] sm:$0xff]
                %748 = vst [vmem:[%s516 + $0x398] sm:$0xff] %v747
                %v749 = vld [vmem:[%s515 + $0xae0] sm:$0xff]
                %750 = vst [vmem:[%s516 + $0x3a0] sm:$0xff] %v749
                %v751 = vld [vmem:[%s515 + $0xae8] sm:$0xff]
                %752 = vst [vmem:[%s516 + $0x3a8] sm:$0xff] %v751
                %v753 = vld [vmem:[%s515 + $0xb10] sm:$0xff]
                %754 = vst [vmem:[%s516 + $0x3b0] sm:$0xff] %v753
                %v755 = vld [vmem:[%s515 + $0xb18] sm:$0xff]
                %756 = vst [vmem:[%s516 + $0x3b8] sm:$0xff] %v755
                %v757 = vld [vmem:[%s515 + $0xb40] sm:$0xff]
                %758 = vst [vmem:[%s516 + $0x3c0] sm:$0xff] %v757
                %v759 = vld [vmem:[%s515 + $0xb48] sm:$0xff]
                %760 = vst [vmem:[%s516 + $0x3c8] sm:$0xff] %v759
                %v761 = vld [vmem:[%s515 + $0xb70] sm:$0xff]
                %762 = vst [vmem:[%s516 + $0x3d0] sm:$0xff] %v761
                %v763 = vld [vmem:[%s515 + $0xb78] sm:$0xff]
                %764 = vst [vmem:[%s516 + $0x3d8] sm:$0xff] %v763
                %v765 = vld [vmem:[%s515 + $0xba0] sm:$0xff]
                %766 = vst [vmem:[%s516 + $0x3e0] sm:$0xff] %v765
                %v767 = vld [vmem:[%s515 + $0xba8] sm:$0xff]
                %768 = vst [vmem:[%s516 + $0x3e8] sm:$0xff] %v767
                %v769 = vld [vmem:[%s515 + $0xbd0] sm:$0xff]
                %770 = vst [vmem:[%s516 + $0x3f0] sm:$0xff] %v769
                %v771 = vld [vmem:[%s515 + $0xbd8] sm:$0xff]
                %772 = vst [vmem:[%s516 + $0x3f8] sm:$0xff] %v771
                %v773 = vld [vmem:[%s515 + $0xc00] sm:$0xff]
                %774 = vst [vmem:[%s516 + $0x400] sm:$0xff] %v773
                %v775 = vld [vmem:[%s515 + $0xc08] sm:$0xff]
                %776 = vst [vmem:[%s516 + $0x408] sm:$0xff] %v775
                %v777 = vld [vmem:[%s515 + $0xc30] sm:$0xff]
                %778 = vst [vmem:[%s516 + $0x410] sm:$0xff] %v777
                %v779 = vld [vmem:[%s515 + $0xc38] sm:$0xff]
                %780 = vst [vmem:[%s516 + $0x418] sm:$0xff] %v779
                %v781 = vld [vmem:[%s515 + $0xc60] sm:$0xff]
                %782 = vst [vmem:[%s516 + $0x420] sm:$0xff] %v781
                %v783 = vld [vmem:[%s515 + $0xc68] sm:$0xff]
                %784 = vst [vmem:[%s516 + $0x428] sm:$0xff] %v783
                %v785 = vld [vmem:[%s515 + $0xc90] sm:$0xff]
                %786 = vst [vmem:[%s516 + $0x430] sm:$0xff] %v785
                %v787 = vld [vmem:[%s515 + $0xc98] sm:$0xff]
                %788 = vst [vmem:[%s516 + $0x438] sm:$0xff] %v787
                %v789 = vld [vmem:[%s515 + $0xcc0] sm:$0xff]
                %790 = vst [vmem:[%s516 + $0x440] sm:$0xff] %v789
                %v791 = vld [vmem:[%s515 + $0xcc8] sm:$0xff]
                %792 = vst [vmem:[%s516 + $0x448] sm:$0xff] %v791
                %v793 = vld [vmem:[%s515 + $0xcf0] sm:$0xff]
                %794 = vst [vmem:[%s516 + $0x450] sm:$0xff] %v793
                %v795 = vld [vmem:[%s515 + $0xcf8] sm:$0xff]
                %796 = vst [vmem:[%s516 + $0x458] sm:$0xff] %v795
                %v797 = vld [vmem:[%s515 + $0xd20] sm:$0xff]
                %798 = vst [vmem:[%s516 + $0x460] sm:$0xff] %v797
                %v799 = vld [vmem:[%s515 + $0xd28] sm:$0xff]
                %800 = vst [vmem:[%s516 + $0x468] sm:$0xff] %v799
                %v801 = vld [vmem:[%s515 + $0xd50] sm:$0xff]
                %802 = vst [vmem:[%s516 + $0x470] sm:$0xff] %v801
                %v803 = vld [vmem:[%s515 + $0xd58] sm:$0xff]
                %804 = vst [vmem:[%s516 + $0x478] sm:$0xff] %v803
              $region60: #{tpu_custom_call.1} parent=54 // loop_footer
                %s514 = sadd.s32 1, %s510
              $region61: #{tpu_custom_call.1} parent=54 // loop_footer_branch
                %509 = sbr.rel target = $region57
              $region62: #{tpu_custom_call.1} parent=54 // loop_exit
                _
            $region55: #{tpu_custom_call.1} parent=50 // pred_fallthru
              _
            // Predicated region
            $region63: #{tpu_custom_call.1} parent=50 // pred_check
              _
            $region64: #{tpu_custom_call.1} parent=50 // pred_check_branch
              %806 = sbr.rel target = $region66
            $region65: #{tpu_custom_call.1} parent=50 // pred_region
              _
            $region66: #{tpu_custom_call.1} parent=50 // pred_fallthru
              _
          $region51: #{tpu_custom_call.1} parent=46 // pred_fallthru
            _
          %807 = vnop
        $region47: #{tpu_custom_call.1} parent=19 // pred_fallthru
          _
        // Predicated region
        $region67: #{tpu_custom_call.1} parent=19 // pred_check
          %p808 = pneg %p121
        $region68: #{tpu_custom_call.1} parent=19 // pred_check_branch
          %810 = sbr.rel (%p808) target = $region70
        $region69: #{tpu_custom_call.1} parent=19 // pred_region
          %s811 = smul.u32 64, %s19
          %p812 = scmp.lt.s32.totalorder %s811, 191
          %s813 = scalar_select %p812, %s811, 191
          %s814 = smul.addr %s813, 5
          %s815 = smul.addr %s814, 4
          %s816 = scalar_lea.vmem %s3, %s815
          %s817 = smul.u32 64, %s19
        $region70: #{tpu_custom_call.1} parent=19 // pred_fallthru
          _
      $region20: #{tpu_custom_call.1} parent=5 // pred_fallthru
        _
      %p818 = scmp.le.s32.totalorder 1, %s11
      %p819 = scmp.lt.s32.totalorder %s11, 4
      %p820 = pnand %p818, %p819
      %p821 = pneg %p820
      // Predicated region
      $region71: #{tpu_custom_call.1} parent=5 // pred_check
        _
      $region72: #{tpu_custom_call.1} parent=5 // pred_check_branch
        %823 = sbr.rel (%p820) target = $region74
      $region73: #{tpu_custom_call.1} parent=5 // pred_region
        %s824 = ssub.s32 %s11, 1
        %s825 = sand.u32 %s62, 1
        %s826 = sand.u32 %s62, 1
        %s827 = smul.addr %s826, 1152
        %s828 = scalar_lea.vmem [#allocation3], %s827
        // Predicated region
        $region75: #{tpu_custom_call.1} parent=73 // pred_check
          %p829 = pneg %p75
        $region76: #{tpu_custom_call.1} parent=73 // pred_check_branch
          %831 = sbr.rel (%p829) target = $region78
        $region77: #{tpu_custom_call.1} parent=73 // pred_region
          _
        $region78: #{tpu_custom_call.1} parent=73 // pred_fallthru
          _
        %s832 = sand.u32 %s88, 1
        %s833 = sand.u32 %s88, 1
        %s834 = smul.addr %s833, 1152
        %s835 = scalar_lea.vmem [#allocation4], %s834
        // Predicated region
        $region79: #{tpu_custom_call.1} parent=73 // pred_check
          %p836 = pneg %p101
        $region80: #{tpu_custom_call.1} parent=73 // pred_check_branch
          %838 = sbr.rel (%p836) target = $region82
        $region81: #{tpu_custom_call.1} parent=73 // pred_region
          _
        $region82: #{tpu_custom_call.1} parent=73 // pred_fallthru
          _
        %s839 = smul.u32 2, %s20
        %p840 = scmp.lt.s32.totalorder %s839, 1
        %s841 = scalar_select %p840, %s839, 1
        %s842 = smul.addr %s841, 5
        %s843 = smul.addr %s842, 4
        %s844 = scalar_lea.vmem %s0, %s843
        %p845 = pneg %p49
        %p846 = pneg %p46
        %s847 = sand.u32 %s62, 1
        %s848 = sand.u32 %s62, 1
        %s849 = smul.addr %s848, 1152
        %s850 = scalar_lea.vmem [#allocation3], %s849
        %p851 = pneg %p75
        %p852 = pneg %p72
        %s853 = sand.u32 %s88, 1
        %s854 = sand.u32 %s88, 1
        %s855 = smul.addr %s854, 1152
        %s856 = scalar_lea.vmem [#allocation4], %s855
        %p857 = pneg %p101
        %p858 = pneg %p98
        %s859 = smul.u32 64, %s21
        %p860 = scmp.lt.s32.totalorder %s859, 191
        %s861 = scalar_select %p860, %s859, 191
        %s862 = smul.addr %s861, 5
        %s863 = smul.addr %s862, 4
        %s864 = scalar_lea.vmem %s3, %s863
        %p865 = pneg %p127
        %p866 = pneg %p124
        %p867 = pneg %p153
        %p868 = pneg %p150
        %s869 = smul.u32 2, %s20
        %p870 = scmp.lt.s32.totalorder %s869, 1
        %s871 = scalar_select %p870, %s869, 1
        %s872 = smul.addr %s871, 5
        %s873 = smul.addr %s872, 4
        %s874 = scalar_lea.vmem %s0, %s873
        %s875 = smul.u32 2, %s20
        %s876 = smul.u32 4, %s21
        %s877 = smul.u32 4, %s21
        %s878 = smul.u32 64, %s21
        %p879 = scmp.lt.s32.totalorder %s878, 191
        %s880 = scalar_select %p879, %s878, 191
        %s881 = smul.addr %s880, 5
        %s882 = smul.addr %s881, 4
        %s883 = scalar_lea.vmem %s3, %s882
        %s884 = smul.u32 64, %s21
        %s885 = smul.u32 2, %s20
        %p887 = scmp.eq.s32.totalorder %s21, 0
        // Predicated region
        $region83: #{tpu_custom_call.1} parent=73 // pred_check
          %p888 = pneg %p887
        $region84: #{tpu_custom_call.1} parent=73 // pred_check_branch
          %890 = sbr.rel (%p888) target = $region86
        $region85: #{tpu_custom_call.1} parent=73 // pred_region
          %891 = vst [vmem:[#allocation2] sm:$0xff] 0.0
          %892 = vst [vmem:[#allocation2 + $0x8] sm:$0xff] 0.0
          %893 = vst [vmem:[#allocation2 + $0x10] sm:$0xff] 0.0
          %894 = vst [vmem:[#allocation2 + $0x18] sm:$0xff] 0.0
          %vm895 = vcmask 523264
          %896 = vst.msk [vmem:[#allocation2 + $0x20] sm:$0xff] %vm895, 0.0
          %897 = vst [vmem:[#allocation2 + $0x28] sm:$0xff] 0.0
          %898 = vst [vmem:[#allocation2 + $0x30] sm:$0xff] 0.0
          %899 = vst [vmem:[#allocation2 + $0x38] sm:$0xff] 0.0
          %900 = vst [vmem:[#allocation2 + $0x40] sm:$0xff] 0.0
          %901 = vst.msk [vmem:[#allocation2 + $0x48] sm:$0xff] %vm895, 0.0
        $region86: #{tpu_custom_call.1} parent=73 // pred_fallthru
          _
        %v902 = vld [vmem:[%s874] sm:$0xff]
        %v903 = vld [vmem:[%s874 + $0x8] sm:$0xff]
        %v904 = vld [vmem:[%s874 + $0x10] sm:$0xf]
        %v905 = vld [vmem:[%s874 + $0x14] sm:$0xff]
        %v906 = vld [vmem:[%s874 + $0x1c] sm:$0xff]
        %v907 = vld [vmem:[%s874 + $0x24] sm:$0xf]
        %v908 = vld [vmem:[%s828] sm:$0xff]
        %v909 = vld [vmem:[%s828 + $0x8] sm:$0xff]
        %v910 = vld [vmem:[%s828 + $0x10] sm:$0xff]
        %v911 = vld [vmem:[%s828 + $0x18] sm:$0xff]
        %v912 = vld [vmem:[%s828 + $0x20] sm:$0xff]
        %v913 = vld [vmem:[%s828 + $0x28] sm:$0xff]
        %v914 = vld [vmem:[%s828 + $0x30] sm:$0xff]
        %v915 = vld [vmem:[%s828 + $0x38] sm:$0xff]
        %v916 = vld [vmem:[%s828 + $0x40] sm:$0xff]
        %v917 = vld [vmem:[%s828 + $0x48] sm:$0xff]
        %v918 = vld [vmem:[%s828 + $0x50] sm:$0xff]
        %v919 = vld [vmem:[%s828 + $0x58] sm:$0xff]
        %v920 = vld [vmem:[%s828 + $0x60] sm:$0xff]
        %v921 = vld [vmem:[%s828 + $0x68] sm:$0xff]
        %v922 = vld [vmem:[%s828 + $0x70] sm:$0xff]
        %v923 = vld [vmem:[%s828 + $0x78] sm:$0xff]
        %v924 = vld [vmem:[%s828 + $0x80] sm:$0xff]
        %v925 = vld [vmem:[%s828 + $0x88] sm:$0xff]
        %v926 = vld [vmem:[%s828 + $0x90] sm:$0xff]
        %v927 = vld [vmem:[%s828 + $0x98] sm:$0xff]
        %v928 = vld [vmem:[%s828 + $0xa0] sm:$0xff]
        %v929 = vld [vmem:[%s828 + $0xa8] sm:$0xff]
        %v930 = vld [vmem:[%s828 + $0xb0] sm:$0xff]
        %v931 = vld [vmem:[%s828 + $0xb8] sm:$0xff]
        %v932 = vld [vmem:[%s828 + $0xc0] sm:$0xff]
        %v933 = vld [vmem:[%s828 + $0xc8] sm:$0xff]
        %v934 = vld [vmem:[%s828 + $0xd0] sm:$0xff]
        %v935 = vld [vmem:[%s828 + $0xd8] sm:$0xff]
        %v936 = vld [vmem:[%s828 + $0xe0] sm:$0xff]
        %v937 = vld [vmem:[%s828 + $0xe8] sm:$0xff]
        %v938 = vld [vmem:[%s828 + $0xf0] sm:$0xff]
        %v939 = vld [vmem:[%s828 + $0xf8] sm:$0xff]
        %v940 = vld [vmem:[%s828 + $0x100] sm:$0xff]
        %v941 = vld [vmem:[%s828 + $0x108] sm:$0xff]
        %v942 = vld [vmem:[%s828 + $0x110] sm:$0xff]
        %v943 = vld [vmem:[%s828 + $0x118] sm:$0xff]
        %v944 = vld [vmem:[%s828 + $0x120] sm:$0xff]
        %v945 = vld [vmem:[%s828 + $0x128] sm:$0xff]
        %v946 = vld [vmem:[%s828 + $0x130] sm:$0xff]
        %v947 = vld [vmem:[%s828 + $0x138] sm:$0xff]
        %v948 = vld [vmem:[%s828 + $0x140] sm:$0xff]
        %v949 = vld [vmem:[%s828 + $0x148] sm:$0xff]
        %v950 = vld [vmem:[%s828 + $0x150] sm:$0xff]
        %v951 = vld [vmem:[%s828 + $0x158] sm:$0xff]
        %v952 = vld [vmem:[%s828 + $0x160] sm:$0xff]
        %v953 = vld [vmem:[%s828 + $0x168] sm:$0xff]
        %v954 = vld [vmem:[%s828 + $0x170] sm:$0xff]
        %v955 = vld [vmem:[%s828 + $0x178] sm:$0xff]
        %v956 = vld [vmem:[%s828 + $0x180] sm:$0xff]
        %v957 = vld [vmem:[%s828 + $0x188] sm:$0xff]
        %v958 = vld [vmem:[%s828 + $0x190] sm:$0xff]
        %v959 = vld [vmem:[%s828 + $0x198] sm:$0xff]
        %v960 = vld [vmem:[%s828 + $0x1a0] sm:$0xff]
        %v961 = vld [vmem:[%s828 + $0x1a8] sm:$0xff]
        %v962 = vld [vmem:[%s828 + $0x1b0] sm:$0xff]
        %v963 = vld [vmem:[%s828 + $0x1b8] sm:$0xff]
        %v964 = vld [vmem:[%s828 + $0x1c0] sm:$0xff]
        %v965 = vld [vmem:[%s828 + $0x1c8] sm:$0xff]
        %v966 = vld [vmem:[%s828 + $0x1d0] sm:$0xff]
        %v967 = vld [vmem:[%s828 + $0x1d8] sm:$0xff]
        %v968 = vld [vmem:[%s828 + $0x1e0] sm:$0xff]
        %v969 = vld [vmem:[%s828 + $0x1e8] sm:$0xff]
        %v970 = vld [vmem:[%s828 + $0x1f0] sm:$0xff]
        %v971 = vld [vmem:[%s828 + $0x1f8] sm:$0xff]
        %v972 = vld [vmem:[%s828 + $0x200] sm:$0xff]
        %v973 = vld [vmem:[%s828 + $0x208] sm:$0xff]
        %v974 = vld [vmem:[%s828 + $0x210] sm:$0xff]
        %v975 = vld [vmem:[%s828 + $0x218] sm:$0xff]
        %v976 = vld [vmem:[%s828 + $0x220] sm:$0xff]
        %v977 = vld [vmem:[%s828 + $0x228] sm:$0xff]
        %v978 = vld [vmem:[%s828 + $0x230] sm:$0xff]
        %v979 = vld [vmem:[%s828 + $0x238] sm:$0xff]
        %v980 = vld [vmem:[%s828 + $0x240] sm:$0xff]
        %v981 = vld [vmem:[%s828 + $0x248] sm:$0xff]
        %v982 = vld [vmem:[%s828 + $0x250] sm:$0xff]
        %v983 = vld [vmem:[%s828 + $0x258] sm:$0xff]
        %v984 = vld [vmem:[%s828 + $0x260] sm:$0xff]
        %v985 = vld [vmem:[%s828 + $0x268] sm:$0xff]
        %v986 = vld [vmem:[%s828 + $0x270] sm:$0xff]
        %v987 = vld [vmem:[%s828 + $0x278] sm:$0xff]
        %v988 = vld [vmem:[%s828 + $0x280] sm:$0xff]
        %v989 = vld [vmem:[%s828 + $0x288] sm:$0xff]
        %v990 = vld [vmem:[%s828 + $0x290] sm:$0xff]
        %v991 = vld [vmem:[%s828 + $0x298] sm:$0xff]
        %v992 = vld [vmem:[%s828 + $0x2a0] sm:$0xff]
        %v993 = vld [vmem:[%s828 + $0x2a8] sm:$0xff]
        %v994 = vld [vmem:[%s828 + $0x2b0] sm:$0xff]
        %v995 = vld [vmem:[%s828 + $0x2b8] sm:$0xff]
        %v996 = vld [vmem:[%s828 + $0x2c0] sm:$0xff]
        %v997 = vld [vmem:[%s828 + $0x2c8] sm:$0xff]
        %v998 = vld [vmem:[%s828 + $0x2d0] sm:$0xff]
        %v999 = vld [vmem:[%s828 + $0x2d8] sm:$0xff]
        %v1000 = vld [vmem:[%s828 + $0x2e0] sm:$0xff]
        %v1001 = vld [vmem:[%s828 + $0x2e8] sm:$0xff]
        %v1002 = vld [vmem:[%s828 + $0x2f0] sm:$0xff]
        %v1003 = vld [vmem:[%s828 + $0x2f8] sm:$0xff]
        %v1004 = vld [vmem:[%s828 + $0x300] sm:$0xff]
        %v1005 = vld [vmem:[%s828 + $0x308] sm:$0xff]
        %v1006 = vld [vmem:[%s828 + $0x310] sm:$0xff]
        %v1007 = vld [vmem:[%s828 + $0x318] sm:$0xff]
        %v1008 = vld [vmem:[%s828 + $0x320] sm:$0xff]
        %v1009 = vld [vmem:[%s828 + $0x328] sm:$0xff]
        %v1010 = vld [vmem:[%s828 + $0x330] sm:$0xff]
        %v1011 = vld [vmem:[%s828 + $0x338] sm:$0xff]
        %v1012 = vld [vmem:[%s828 + $0x340] sm:$0xff]
        %v1013 = vld [vmem:[%s828 + $0x348] sm:$0xff]
        %v1014 = vld [vmem:[%s828 + $0x350] sm:$0xff]
        %v1015 = vld [vmem:[%s828 + $0x358] sm:$0xff]
        %v1016 = vld [vmem:[%s828 + $0x360] sm:$0xff]
        %v1017 = vld [vmem:[%s828 + $0x368] sm:$0xff]
        %v1018 = vld [vmem:[%s828 + $0x370] sm:$0xff]
        %v1019 = vld [vmem:[%s828 + $0x378] sm:$0xff]
        %v1020 = vld [vmem:[%s828 + $0x380] sm:$0xff]
        %v1021 = vld [vmem:[%s828 + $0x388] sm:$0xff]
        %v1022 = vld [vmem:[%s828 + $0x390] sm:$0xff]
        %v1023 = vld [vmem:[%s828 + $0x398] sm:$0xff]
        %v1024 = vld [vmem:[%s828 + $0x3a0] sm:$0xff]
        %v1025 = vld [vmem:[%s828 + $0x3a8] sm:$0xff]
        %v1026 = vld [vmem:[%s828 + $0x3b0] sm:$0xff]
        %v1027 = vld [vmem:[%s828 + $0x3b8] sm:$0xff]
        %v1028 = vld [vmem:[%s828 + $0x3c0] sm:$0xff]
        %v1029 = vld [vmem:[%s828 + $0x3c8] sm:$0xff]
        %v1030 = vld [vmem:[%s828 + $0x3d0] sm:$0xff]
        %v1031 = vld [vmem:[%s828 + $0x3d8] sm:$0xff]
        %v1032 = vld [vmem:[%s828 + $0x3e0] sm:$0xff]
        %v1033 = vld [vmem:[%s828 + $0x3e8] sm:$0xff]
        %v1034 = vld [vmem:[%s828 + $0x3f0] sm:$0xff]
        %v1035 = vld [vmem:[%s828 + $0x3f8] sm:$0xff]
        %v1036 = vld [vmem:[%s828 + $0x400] sm:$0xff]
        %v1037 = vld [vmem:[%s828 + $0x408] sm:$0xff]
        %v1038 = vld [vmem:[%s828 + $0x410] sm:$0xff]
        %v1039 = vld [vmem:[%s828 + $0x418] sm:$0xff]
        %v1040 = vld [vmem:[%s828 + $0x420] sm:$0xff]
        %v1041 = vld [vmem:[%s828 + $0x428] sm:$0xff]
        %v1042 = vld [vmem:[%s828 + $0x430] sm:$0xff]
        %v1043 = vld [vmem:[%s828 + $0x438] sm:$0xff]
        %v1044 = vld [vmem:[%s828 + $0x440] sm:$0xff]
        %v1045 = vld [vmem:[%s828 + $0x448] sm:$0xff]
        %v1046 = vld [vmem:[%s828 + $0x450] sm:$0xff]
        %v1047 = vld [vmem:[%s828 + $0x458] sm:$0xff]
        %v1048 = vld [vmem:[%s828 + $0x460] sm:$0xff]
        %v1049 = vld [vmem:[%s828 + $0x468] sm:$0xff]
        %v1050 = vld [vmem:[%s828 + $0x470] sm:$0xff]
        %v1051 = vld [vmem:[%s828 + $0x478] sm:$0xff]
        %v1058 = vunpack.c.l.b16 %v902
        %v1059 = vunpack.c.h.b16 %v902
        %v1060 = vunpack.c.l.b16 %v903
        %v1061 = vunpack.c.h.b16 %v903
        %v1062 = vunpack.c.l.b16 %v904
        %v1063 = vunpack.c.l.b16 %v905
        %v1064 = vunpack.c.h.b16 %v905
        %v1065 = vunpack.c.l.b16 %v906
        %v1066 = vunpack.c.h.b16 %v906
        %v1067 = vunpack.c.l.b16 %v907
        %v1068 = vpack.c.b16 %v1063, %v1058
        %v1069 = vpack.c.b16 %v1064, %v1059
        %v1070 = vpack.c.b16 %v1065, %v1060
        %v1071 = vpack.c.b16 %v1066, %v1061
        %v1072 = vpack.c.b16 %v1067, %v1062
        %v1221 = vunpack.c.l.b16 %v908
        %v1222 = vunpack.c.h.b16 %v908
        %v1223 = vunpack.c.l.b16 %v909
        %v1224 = vunpack.c.h.b16 %v909
        %v1225 = vunpack.c.l.b16 %v910
        %v1226 = vunpack.c.h.b16 %v910
        %v1227 = vunpack.c.l.b16 %v911
        %v1228 = vunpack.c.h.b16 %v911
        %v1229 = vunpack.c.l.b16 %v912
        %v1230 = vunpack.c.h.b16 %v912
        %v1231 = vunpack.c.l.b16 %v913
        %v1232 = vunpack.c.h.b16 %v913
        %v1233 = vunpack.c.l.b16 %v914
        %v1234 = vunpack.c.h.b16 %v914
        %v1235 = vunpack.c.l.b16 %v915
        %v1236 = vunpack.c.h.b16 %v915
        %v1237 = vunpack.c.l.b16 %v916
        %v1238 = vunpack.c.h.b16 %v916
        %v1239 = vunpack.c.l.b16 %v917
        %v1240 = vunpack.c.h.b16 %v917
        %v1241 = vunpack.c.l.b16 %v918
        %v1242 = vunpack.c.h.b16 %v918
        %v1243 = vunpack.c.l.b16 %v919
        %v1244 = vunpack.c.h.b16 %v919
        %v1245 = vunpack.c.l.b16 %v920
        %v1246 = vunpack.c.h.b16 %v920
        %v1247 = vunpack.c.l.b16 %v921
        %v1248 = vunpack.c.h.b16 %v921
        %v1249 = vunpack.c.l.b16 %v922
        %v1250 = vunpack.c.h.b16 %v922
        %v1251 = vunpack.c.l.b16 %v923
        %v1252 = vunpack.c.h.b16 %v923
        %v1253 = vunpack.c.l.b16 %v924
        %v1254 = vunpack.c.h.b16 %v924
        %v1255 = vunpack.c.l.b16 %v925
        %v1256 = vunpack.c.h.b16 %v925
        %v1257 = vunpack.c.l.b16 %v926
        %v1258 = vunpack.c.h.b16 %v926
        %v1259 = vunpack.c.l.b16 %v927
        %v1260 = vunpack.c.h.b16 %v927
        %v1261 = vunpack.c.l.b16 %v928
        %v1262 = vunpack.c.h.b16 %v928
        %v1263 = vunpack.c.l.b16 %v929
        %v1264 = vunpack.c.h.b16 %v929
        %v1265 = vunpack.c.l.b16 %v930
        %v1266 = vunpack.c.h.b16 %v930
        %v1267 = vunpack.c.l.b16 %v931
        %v1268 = vunpack.c.h.b16 %v931
        %v1269 = vunpack.c.l.b16 %v932
        %v1270 = vunpack.c.h.b16 %v932
        %v1271 = vunpack.c.l.b16 %v933
        %v1272 = vunpack.c.h.b16 %v933
        %v1273 = vunpack.c.l.b16 %v934
        %v1274 = vunpack.c.h.b16 %v934
        %v1275 = vunpack.c.l.b16 %v935
        %v1276 = vunpack.c.h.b16 %v935
        %v1277 = vunpack.c.l.b16 %v936
        %v1278 = vunpack.c.h.b16 %v936
        %v1279 = vunpack.c.l.b16 %v937
        %v1280 = vunpack.c.h.b16 %v937
        %v1281 = vunpack.c.l.b16 %v938
        %v1282 = vunpack.c.h.b16 %v938
        %v1283 = vunpack.c.l.b16 %v939
        %v1284 = vunpack.c.h.b16 %v939
        %v1285 = vunpack.c.l.b16 %v940
        %v1286 = vunpack.c.h.b16 %v940
        %v1287 = vunpack.c.l.b16 %v941
        %v1288 = vunpack.c.h.b16 %v941
        %v1289 = vunpack.c.l.b16 %v942
        %v1290 = vunpack.c.h.b16 %v942
        %v1291 = vunpack.c.l.b16 %v943
        %v1292 = vunpack.c.h.b16 %v943
        %v1293 = vunpack.c.l.b16 %v944
        %v1294 = vunpack.c.h.b16 %v944
        %v1295 = vunpack.c.l.b16 %v945
        %v1296 = vunpack.c.h.b16 %v945
        %v1297 = vunpack.c.l.b16 %v946
        %v1298 = vunpack.c.h.b16 %v946
        %v1299 = vunpack.c.l.b16 %v947
        %v1300 = vunpack.c.h.b16 %v947
        %v1301 = vunpack.c.l.b16 %v948
        %v1302 = vunpack.c.h.b16 %v948
        %v1303 = vunpack.c.l.b16 %v949
        %v1304 = vunpack.c.h.b16 %v949
        %v1305 = vunpack.c.l.b16 %v950
        %v1306 = vunpack.c.h.b16 %v950
        %v1307 = vunpack.c.l.b16 %v951
        %v1308 = vunpack.c.h.b16 %v951
        %v1309 = vunpack.c.l.b16 %v952
        %v1310 = vunpack.c.h.b16 %v952
        %v1311 = vunpack.c.l.b16 %v953
        %v1312 = vunpack.c.h.b16 %v953
        %v1313 = vunpack.c.l.b16 %v954
        %v1314 = vunpack.c.h.b16 %v954
        %v1315 = vunpack.c.l.b16 %v955
        %v1316 = vunpack.c.h.b16 %v955
        %v1317 = vunpack.c.l.b16 %v956
        %v1318 = vunpack.c.h.b16 %v956
        %v1319 = vunpack.c.l.b16 %v957
        %v1320 = vunpack.c.h.b16 %v957
        %v1321 = vunpack.c.l.b16 %v958
        %v1322 = vunpack.c.h.b16 %v958
        %v1323 = vunpack.c.l.b16 %v959
        %v1324 = vunpack.c.h.b16 %v959
        %v1325 = vunpack.c.l.b16 %v960
        %v1326 = vunpack.c.h.b16 %v960
        %v1327 = vunpack.c.l.b16 %v961
        %v1328 = vunpack.c.h.b16 %v961
        %v1329 = vunpack.c.l.b16 %v962
        %v1330 = vunpack.c.h.b16 %v962
        %v1331 = vunpack.c.l.b16 %v963
        %v1332 = vunpack.c.h.b16 %v963
        %v1333 = vunpack.c.l.b16 %v964
        %v1334 = vunpack.c.h.b16 %v964
        %v1335 = vunpack.c.l.b16 %v965
        %v1336 = vunpack.c.h.b16 %v965
        %v1337 = vunpack.c.l.b16 %v966
        %v1338 = vunpack.c.h.b16 %v966
        %v1339 = vunpack.c.l.b16 %v967
        %v1340 = vunpack.c.h.b16 %v967
        %v1341 = vunpack.c.l.b16 %v968
        %v1342 = vunpack.c.h.b16 %v968
        %v1343 = vunpack.c.l.b16 %v969
        %v1344 = vunpack.c.h.b16 %v969
        %v1345 = vunpack.c.l.b16 %v970
        %v1346 = vunpack.c.h.b16 %v970
        %v1347 = vunpack.c.l.b16 %v971
        %v1348 = vunpack.c.h.b16 %v971
        %v1349 = vunpack.c.l.b16 %v972
        %v1350 = vunpack.c.h.b16 %v972
        %v1351 = vunpack.c.l.b16 %v973
        %v1352 = vunpack.c.h.b16 %v973
        %v1353 = vunpack.c.l.b16 %v974
        %v1354 = vunpack.c.h.b16 %v974
        %v1355 = vunpack.c.l.b16 %v975
        %v1356 = vunpack.c.h.b16 %v975
        %v1357 = vunpack.c.l.b16 %v976
        %v1358 = vunpack.c.h.b16 %v976
        %v1359 = vunpack.c.l.b16 %v977
        %v1360 = vunpack.c.h.b16 %v977
        %v1361 = vunpack.c.l.b16 %v978
        %v1362 = vunpack.c.h.b16 %v978
        %v1363 = vunpack.c.l.b16 %v979
        %v1364 = vunpack.c.h.b16 %v979
        %v1365 = vunpack.c.l.b16 %v980
        %v1366 = vunpack.c.h.b16 %v980
        %v1367 = vunpack.c.l.b16 %v981
        %v1368 = vunpack.c.h.b16 %v981
        %v1369 = vunpack.c.l.b16 %v982
        %v1370 = vunpack.c.h.b16 %v982
        %v1371 = vunpack.c.l.b16 %v983
        %v1372 = vunpack.c.h.b16 %v983
        %v1373 = vunpack.c.l.b16 %v984
        %v1374 = vunpack.c.h.b16 %v984
        %v1375 = vunpack.c.l.b16 %v985
        %v1376 = vunpack.c.h.b16 %v985
        %v1377 = vunpack.c.l.b16 %v986
        %v1378 = vunpack.c.h.b16 %v986
        %v1379 = vunpack.c.l.b16 %v987
        %v1380 = vunpack.c.h.b16 %v987
        %v1381 = vunpack.c.l.b16 %v988
        %v1382 = vunpack.c.h.b16 %v988
        %v1383 = vunpack.c.l.b16 %v989
        %v1384 = vunpack.c.h.b16 %v989
        %v1385 = vunpack.c.l.b16 %v990
        %v1386 = vunpack.c.h.b16 %v990
        %v1387 = vunpack.c.l.b16 %v991
        %v1388 = vunpack.c.h.b16 %v991
        %v1389 = vunpack.c.l.b16 %v992
        %v1390 = vunpack.c.h.b16 %v992
        %v1391 = vunpack.c.l.b16 %v993
        %v1392 = vunpack.c.h.b16 %v993
        %v1393 = vunpack.c.l.b16 %v994
        %v1394 = vunpack.c.h.b16 %v994
        %v1395 = vunpack.c.l.b16 %v995
        %v1396 = vunpack.c.h.b16 %v995
        %v1397 = vunpack.c.l.b16 %v996
        %v1398 = vunpack.c.h.b16 %v996
        %v1399 = vunpack.c.l.b16 %v997
        %v1400 = vunpack.c.h.b16 %v997
        %v1401 = vunpack.c.l.b16 %v998
        %v1402 = vunpack.c.h.b16 %v998
        %v1403 = vunpack.c.l.b16 %v999
        %v1404 = vunpack.c.h.b16 %v999
        %v1405 = vunpack.c.l.b16 %v1000
        %v1406 = vunpack.c.h.b16 %v1000
        %v1407 = vunpack.c.l.b16 %v1001
        %v1408 = vunpack.c.h.b16 %v1001
        %v1409 = vunpack.c.l.b16 %v1002
        %v1410 = vunpack.c.h.b16 %v1002
        %v1411 = vunpack.c.l.b16 %v1003
        %v1412 = vunpack.c.h.b16 %v1003
        %v1413 = vunpack.c.l.b16 %v1004
        %v1414 = vunpack.c.h.b16 %v1004
        %v1415 = vunpack.c.l.b16 %v1005
        %v1416 = vunpack.c.h.b16 %v1005
        %v1417 = vunpack.c.l.b16 %v1006
        %v1418 = vunpack.c.h.b16 %v1006
        %v1419 = vunpack.c.l.b16 %v1007
        %v1420 = vunpack.c.h.b16 %v1007
        %v1421 = vunpack.c.l.b16 %v1008
        %v1422 = vunpack.c.h.b16 %v1008
        %v1423 = vunpack.c.l.b16 %v1009
        %v1424 = vunpack.c.h.b16 %v1009
        %v1425 = vunpack.c.l.b16 %v1010
        %v1426 = vunpack.c.h.b16 %v1010
        %v1427 = vunpack.c.l.b16 %v1011
        %v1428 = vunpack.c.h.b16 %v1011
        %v1429 = vunpack.c.l.b16 %v1012
        %v1430 = vunpack.c.h.b16 %v1012
        %v1431 = vunpack.c.l.b16 %v1013
        %v1432 = vunpack.c.h.b16 %v1013
        %v1433 = vunpack.c.l.b16 %v1014
        %v1434 = vunpack.c.h.b16 %v1014
        %v1435 = vunpack.c.l.b16 %v1015
        %v1436 = vunpack.c.h.b16 %v1015
        %v1437 = vunpack.c.l.b16 %v1016
        %v1438 = vunpack.c.h.b16 %v1016
        %v1439 = vunpack.c.l.b16 %v1017
        %v1440 = vunpack.c.h.b16 %v1017
        %v1441 = vunpack.c.l.b16 %v1018
        %v1442 = vunpack.c.h.b16 %v1018
        %v1443 = vunpack.c.l.b16 %v1019
        %v1444 = vunpack.c.h.b16 %v1019
        %v1445 = vunpack.c.l.b16 %v1020
        %v1446 = vunpack.c.h.b16 %v1020
        %v1447 = vunpack.c.l.b16 %v1021
        %v1448 = vunpack.c.h.b16 %v1021
        %v1449 = vunpack.c.l.b16 %v1022
        %v1450 = vunpack.c.h.b16 %v1022
        %v1451 = vunpack.c.l.b16 %v1023
        %v1452 = vunpack.c.h.b16 %v1023
        %v1453 = vunpack.c.l.b16 %v1024
        %v1454 = vunpack.c.h.b16 %v1024
        %v1455 = vunpack.c.l.b16 %v1025
        %v1456 = vunpack.c.h.b16 %v1025
        %v1457 = vunpack.c.l.b16 %v1026
        %v1458 = vunpack.c.h.b16 %v1026
        %v1459 = vunpack.c.l.b16 %v1027
        %v1460 = vunpack.c.h.b16 %v1027
        %v1461 = vunpack.c.l.b16 %v1028
        %v1462 = vunpack.c.h.b16 %v1028
        %v1463 = vunpack.c.l.b16 %v1029
        %v1464 = vunpack.c.h.b16 %v1029
        %v1465 = vunpack.c.l.b16 %v1030
        %v1466 = vunpack.c.h.b16 %v1030
        %v1467 = vunpack.c.l.b16 %v1031
        %v1468 = vunpack.c.h.b16 %v1031
        %v1469 = vunpack.c.l.b16 %v1032
        %v1470 = vunpack.c.h.b16 %v1032
        %v1471 = vunpack.c.l.b16 %v1033
        %v1472 = vunpack.c.h.b16 %v1033
        %v1473 = vunpack.c.l.b16 %v1034
        %v1474 = vunpack.c.h.b16 %v1034
        %v1475 = vunpack.c.l.b16 %v1035
        %v1476 = vunpack.c.h.b16 %v1035
        %v1477 = vunpack.c.l.b16 %v1036
        %v1478 = vunpack.c.h.b16 %v1036
        %v1479 = vunpack.c.l.b16 %v1037
        %v1480 = vunpack.c.h.b16 %v1037
        %v1481 = vunpack.c.l.b16 %v1038
        %v1482 = vunpack.c.h.b16 %v1038
        %v1483 = vunpack.c.l.b16 %v1039
        %v1484 = vunpack.c.h.b16 %v1039
        %v1485 = vunpack.c.l.b16 %v1040
        %v1486 = vunpack.c.h.b16 %v1040
        %v1487 = vunpack.c.l.b16 %v1041
        %v1488 = vunpack.c.h.b16 %v1041
        %v1489 = vunpack.c.l.b16 %v1042
        %v1490 = vunpack.c.h.b16 %v1042
        %v1491 = vunpack.c.l.b16 %v1043
        %v1492 = vunpack.c.h.b16 %v1043
        %v1493 = vunpack.c.l.b16 %v1044
        %v1494 = vunpack.c.h.b16 %v1044
        %v1495 = vunpack.c.l.b16 %v1045
        %v1496 = vunpack.c.h.b16 %v1045
        %v1497 = vunpack.c.l.b16 %v1046
        %v1498 = vunpack.c.h.b16 %v1046
        %v1499 = vunpack.c.l.b16 %v1047
        %v1500 = vunpack.c.h.b16 %v1047
        %v1501 = vunpack.c.l.b16 %v1048
        %v1502 = vunpack.c.h.b16 %v1048
        %v1503 = vunpack.c.l.b16 %v1049
        %v1504 = vunpack.c.h.b16 %v1049
        %v1505 = vunpack.c.l.b16 %v1050
        %v1506 = vunpack.c.h.b16 %v1050
        %v1507 = vunpack.c.l.b16 %v1051
        %v1508 = vunpack.c.h.b16 %v1051
        %v1509 = vpack.c.b16 %v1225, %v1221
        %v1510 = vpack.c.b16 %v1226, %v1222
        %v1511 = vpack.c.b16 %v1227, %v1223
        %v1512 = vpack.c.b16 %v1228, %v1224
        %v1513 = vpack.c.b16 %v1233, %v1229
        %v1514 = vpack.c.b16 %v1234, %v1230
        %v1515 = vpack.c.b16 %v1235, %v1231
        %v1516 = vpack.c.b16 %v1236, %v1232
        %v1517 = vpack.c.b16 %v1241, %v1237
        %v1518 = vpack.c.b16 %v1242, %v1238
        %v1519 = vpack.c.b16 %v1243, %v1239
        %v1520 = vpack.c.b16 %v1244, %v1240
        %v1521 = vpack.c.b16 %v1249, %v1245
        %v1522 = vpack.c.b16 %v1250, %v1246
        %v1523 = vpack.c.b16 %v1251, %v1247
        %v1524 = vpack.c.b16 %v1252, %v1248
        %v1525 = vpack.c.b16 %v1257, %v1253
        %v1526 = vpack.c.b16 %v1258, %v1254
        %v1527 = vpack.c.b16 %v1259, %v1255
        %v1528 = vpack.c.b16 %v1260, %v1256
        %v1529 = vpack.c.b16 %v1265, %v1261
        %v1530 = vpack.c.b16 %v1266, %v1262
        %v1531 = vpack.c.b16 %v1267, %v1263
        %v1532 = vpack.c.b16 %v1268, %v1264
        %v1533 = vpack.c.b16 %v1273, %v1269
        %v1534 = vpack.c.b16 %v1274, %v1270
        %v1535 = vpack.c.b16 %v1275, %v1271
        %v1536 = vpack.c.b16 %v1276, %v1272
        %v1537 = vpack.c.b16 %v1281, %v1277
        %v1538 = vpack.c.b16 %v1282, %v1278
        %v1539 = vpack.c.b16 %v1283, %v1279
        %v1540 = vpack.c.b16 %v1284, %v1280
        %v1541 = vpack.c.b16 %v1289, %v1285
        %v1542 = vpack.c.b16 %v1290, %v1286
        %v1543 = vpack.c.b16 %v1291, %v1287
        %v1544 = vpack.c.b16 %v1292, %v1288
        %v1545 = vpack.c.b16 %v1297, %v1293
        %v1546 = vpack.c.b16 %v1298, %v1294
        %v1547 = vpack.c.b16 %v1299, %v1295
        %v1548 = vpack.c.b16 %v1300, %v1296
        %v1549 = vpack.c.b16 %v1305, %v1301
        %v1550 = vpack.c.b16 %v1306, %v1302
        %v1551 = vpack.c.b16 %v1307, %v1303
        %v1552 = vpack.c.b16 %v1308, %v1304
        %v1553 = vpack.c.b16 %v1313, %v1309
        %v1554 = vpack.c.b16 %v1314, %v1310
        %v1555 = vpack.c.b16 %v1315, %v1311
        %v1556 = vpack.c.b16 %v1316, %v1312
        %v1557 = vpack.c.b16 %v1321, %v1317
        %v1558 = vpack.c.b16 %v1322, %v1318
        %v1559 = vpack.c.b16 %v1323, %v1319
        %v1560 = vpack.c.b16 %v1324, %v1320
        %v1561 = vpack.c.b16 %v1329, %v1325
        %v1562 = vpack.c.b16 %v1330, %v1326
        %v1563 = vpack.c.b16 %v1331, %v1327
        %v1564 = vpack.c.b16 %v1332, %v1328
        %v1565 = vpack.c.b16 %v1337, %v1333
        %v1566 = vpack.c.b16 %v1338, %v1334
        %v1567 = vpack.c.b16 %v1339, %v1335
        %v1568 = vpack.c.b16 %v1340, %v1336
        %v1569 = vpack.c.b16 %v1345, %v1341
        %v1570 = vpack.c.b16 %v1346, %v1342
        %v1571 = vpack.c.b16 %v1347, %v1343
        %v1572 = vpack.c.b16 %v1348, %v1344
        %v1573 = vpack.c.b16 %v1353, %v1349
        %v1574 = vpack.c.b16 %v1354, %v1350
        %v1575 = vpack.c.b16 %v1355, %v1351
        %v1576 = vpack.c.b16 %v1356, %v1352
        %v1577 = vpack.c.b16 %v1361, %v1357
        %v1578 = vpack.c.b16 %v1362, %v1358
        %v1579 = vpack.c.b16 %v1363, %v1359
        %v1580 = vpack.c.b16 %v1364, %v1360
        %v1581 = vpack.c.b16 %v1369, %v1365
        %v1582 = vpack.c.b16 %v1370, %v1366
        %v1583 = vpack.c.b16 %v1371, %v1367
        %v1584 = vpack.c.b16 %v1372, %v1368
        %v1585 = vpack.c.b16 %v1377, %v1373
        %v1586 = vpack.c.b16 %v1378, %v1374
        %v1587 = vpack.c.b16 %v1379, %v1375
        %v1588 = vpack.c.b16 %v1380, %v1376
        %v1589 = vpack.c.b16 %v1385, %v1381
        %v1590 = vpack.c.b16 %v1386, %v1382
        %v1591 = vpack.c.b16 %v1387, %v1383
        %v1592 = vpack.c.b16 %v1388, %v1384
        %v1593 = vpack.c.b16 %v1393, %v1389
        %v1594 = vpack.c.b16 %v1394, %v1390
        %v1595 = vpack.c.b16 %v1395, %v1391
        %v1596 = vpack.c.b16 %v1396, %v1392
        %v1597 = vpack.c.b16 %v1401, %v1397
        %v1598 = vpack.c.b16 %v1402, %v1398
        %v1599 = vpack.c.b16 %v1403, %v1399
        %v1600 = vpack.c.b16 %v1404, %v1400
        %v1601 = vpack.c.b16 %v1409, %v1405
        %v1602 = vpack.c.b16 %v1410, %v1406
        %v1603 = vpack.c.b16 %v1411, %v1407
        %v1604 = vpack.c.b16 %v1412, %v1408
        %v1605 = vpack.c.b16 %v1417, %v1413
        %v1606 = vpack.c.b16 %v1418, %v1414
        %v1607 = vpack.c.b16 %v1419, %v1415
        %v1608 = vpack.c.b16 %v1420, %v1416
        %v1609 = vpack.c.b16 %v1425, %v1421
        %v1610 = vpack.c.b16 %v1426, %v1422
        %v1611 = vpack.c.b16 %v1427, %v1423
        %v1612 = vpack.c.b16 %v1428, %v1424
        %v1613 = vpack.c.b16 %v1433, %v1429
        %v1614 = vpack.c.b16 %v1434, %v1430
        %v1615 = vpack.c.b16 %v1435, %v1431
        %v1616 = vpack.c.b16 %v1436, %v1432
        %v1617 = vpack.c.b16 %v1441, %v1437
        %v1618 = vpack.c.b16 %v1442, %v1438
        %v1619 = vpack.c.b16 %v1443, %v1439
        %v1620 = vpack.c.b16 %v1444, %v1440
        %v1621 = vpack.c.b16 %v1449, %v1445
        %v1622 = vpack.c.b16 %v1450, %v1446
        %v1623 = vpack.c.b16 %v1451, %v1447
        %v1624 = vpack.c.b16 %v1452, %v1448
        %v1625 = vpack.c.b16 %v1457, %v1453
        %v1626 = vpack.c.b16 %v1458, %v1454
        %v1627 = vpack.c.b16 %v1459, %v1455
        %v1628 = vpack.c.b16 %v1460, %v1456
        %v1629 = vpack.c.b16 %v1465, %v1461
        %v1630 = vpack.c.b16 %v1466, %v1462
        %v1631 = vpack.c.b16 %v1467, %v1463
        %v1632 = vpack.c.b16 %v1468, %v1464
        %v1633 = vpack.c.b16 %v1473, %v1469
        %v1634 = vpack.c.b16 %v1474, %v1470
        %v1635 = vpack.c.b16 %v1475, %v1471
        %v1636 = vpack.c.b16 %v1476, %v1472
        %v1637 = vpack.c.b16 %v1481, %v1477
        %v1638 = vpack.c.b16 %v1482, %v1478
        %v1639 = vpack.c.b16 %v1483, %v1479
        %v1640 = vpack.c.b16 %v1484, %v1480
        %v1641 = vpack.c.b16 %v1489, %v1485
        %v1642 = vpack.c.b16 %v1490, %v1486
        %v1643 = vpack.c.b16 %v1491, %v1487
        %v1644 = vpack.c.b16 %v1492, %v1488
        %v1645 = vpack.c.b16 %v1497, %v1493
        %v1646 = vpack.c.b16 %v1498, %v1494
        %v1647 = vpack.c.b16 %v1499, %v1495
        %v1648 = vpack.c.b16 %v1500, %v1496
        %v1649 = vpack.c.b16 %v1505, %v1501
        %v1650 = vpack.c.b16 %v1506, %v1502
        %v1651 = vpack.c.b16 %v1507, %v1503
        %v1652 = vpack.c.b16 %v1508, %v1504
        %vm1797 = vcmask 523264
        %v1799 = vsel %vm1797, %v1072, 0
        %1801 = vmatpush.bf16.msra.mxu0 %v1537
        %1802 = vmatpush.bf16.msra.mxu0 %v1533
        %1803 = vmatpush.bf16.msra.mxu0 %v1529
        %1804 = vmatpush.bf16.msra.mxu0 %v1525
        %1805 = vmatpush.bf16.msra.mxu0 %v1521
        %1806 = vmatpush.bf16.msra.mxu0 %v1517
        %1807 = vmatpush.bf16.msra.mxu0 %v1513
        %1808 = vmatpush.bf16.msra.mxu0 %v1509
        %1809 = vmatmul.bf16.gmra.mxu0 %v1068
        %v1810 = vpop.f32.mrf.mxu0
        %v1811 = vadd.f32 0.0, %v1810
        %v1812 = vpop.f32.mrf.mxu0
        %v1813 = vadd.f32 0.0, %v1812
        %1814 = vdwg.mxu0
        %1815 = vmatpush.bf16.msra.mxu0 %v1569
        %1816 = vmatpush.bf16.msra.mxu0 %v1565
        %1817 = vmatpush.bf16.msra.mxu0 %v1561
        %1818 = vmatpush.bf16.msra.mxu0 %v1557
        %1819 = vmatpush.bf16.msra.mxu0 %v1553
        %1820 = vmatpush.bf16.msra.mxu0 %v1549
        %1821 = vmatpush.bf16.msra.mxu0 %v1545
        %1822 = vmatpush.bf16.msra.mxu0 %v1541
        %1823 = vmatmul.bf16.gmra.mxu0 %v1069
        %v1824 = vpop.f32.mrf.mxu0
        %v1825 = vadd.f32 %v1811, %v1824
        %v1826 = vpop.f32.mrf.mxu0
        %v1827 = vadd.f32 %v1813, %v1826
        %1828 = vdwg.mxu0
        %1829 = vmatpush.bf16.msra.mxu0 %v1601
        %1830 = vmatpush.bf16.msra.mxu0 %v1597
        %1831 = vmatpush.bf16.msra.mxu0 %v1593
        %1832 = vmatpush.bf16.msra.mxu0 %v1589
        %1833 = vmatpush.bf16.msra.mxu0 %v1585
        %1834 = vmatpush.bf16.msra.mxu0 %v1581
        %1835 = vmatpush.bf16.msra.mxu0 %v1577
        %1836 = vmatpush.bf16.msra.mxu0 %v1573
        %1837 = vmatmul.bf16.gmra.mxu0 %v1070
        %v1838 = vpop.f32.mrf.mxu0
        %v1839 = vadd.f32 %v1825, %v1838
        %v1840 = vpop.f32.mrf.mxu0
        %v1841 = vadd.f32 %v1827, %v1840
        %1842 = vdwg.mxu0
        %1843 = vmatpush.bf16.msra.mxu0 %v1633
        %1844 = vmatpush.bf16.msra.mxu0 %v1629
        %1845 = vmatpush.bf16.msra.mxu0 %v1625
        %1846 = vmatpush.bf16.msra.mxu0 %v1621
        %1847 = vmatpush.bf16.msra.mxu0 %v1617
        %1848 = vmatpush.bf16.msra.mxu0 %v1613
        %1849 = vmatpush.bf16.msra.mxu0 %v1609
        %1850 = vmatpush.bf16.msra.mxu0 %v1605
        %1851 = vmatmul.bf16.gmra.mxu0 %v1071
        %v1852 = vpop.f32.mrf.mxu0
        %v1853 = vadd.f32 %v1839, %v1852
        %v1854 = vpop.f32.mrf.mxu0
        %v1855 = vadd.f32 %v1841, %v1854
        %1856 = vdwg.mxu0
        %1857 = vmatpush.bf16.msra.mxu0 0
        %1858 = vmatpush.bf16.msra.mxu0 0
        %1859 = vmatpush.bf16.msra.mxu0 0
        %1860 = vmatpush.bf16.msra.mxu0 0
        %1861 = vmatpush.bf16.msra.mxu0 %v1649
        %1862 = vmatpush.bf16.msra.mxu0 %v1645
        %1863 = vmatpush.bf16.msra.mxu0 %v1641
        %1864 = vmatpush.bf16.msra.mxu0 %v1637
        %1865 = vmatmul.bf16.gmra.mxu0 %v1799
        %v1866 = vpop.f32.mrf.mxu0
        %v1867 = vadd.f32 %v1853, %v1866
        %v1868 = vpop.f32.mrf.mxu0
        %v1869 = vadd.f32 %v1855, %v1868
        %1870 = vdwg.mxu0
        %1871 = vmatpush.bf16.msra.mxu0 %v1538
        %1872 = vmatpush.bf16.msra.mxu0 %v1534
        %1873 = vmatpush.bf16.msra.mxu0 %v1530
        %1874 = vmatpush.bf16.msra.mxu0 %v1526
        %1875 = vmatpush.bf16.msra.mxu0 %v1522
        %1876 = vmatpush.bf16.msra.mxu0 %v1518
        %1877 = vmatpush.bf16.msra.mxu0 %v1514
        %1878 = vmatpush.bf16.msra.mxu0 %v1510
        %1879 = vmatmul.bf16.gmra.mxu0 %v1068
        %v1880 = vpop.f32.mrf.mxu0
        %v1881 = vadd.f32 0.0, %v1880
        %v1882 = vpop.f32.mrf.mxu0
        %v1883 = vadd.f32 0.0, %v1882
        %1884 = vdwg.mxu0
        %1885 = vmatpush.bf16.msra.mxu0 %v1570
        %1886 = vmatpush.bf16.msra.mxu0 %v1566
        %1887 = vmatpush.bf16.msra.mxu0 %v1562
        %1888 = vmatpush.bf16.msra.mxu0 %v1558
        %1889 = vmatpush.bf16.msra.mxu0 %v1554
        %1890 = vmatpush.bf16.msra.mxu0 %v1550
        %1891 = vmatpush.bf16.msra.mxu0 %v1546
        %1892 = vmatpush.bf16.msra.mxu0 %v1542
        %1893 = vmatmul.bf16.gmra.mxu0 %v1069
        %v1894 = vpop.f32.mrf.mxu0
        %v1895 = vadd.f32 %v1881, %v1894
        %v1896 = vpop.f32.mrf.mxu0
        %v1897 = vadd.f32 %v1883, %v1896
        %1898 = vdwg.mxu0
        %1899 = vmatpush.bf16.msra.mxu0 %v1602
        %1900 = vmatpush.bf16.msra.mxu0 %v1598
        %1901 = vmatpush.bf16.msra.mxu0 %v1594
        %1902 = vmatpush.bf16.msra.mxu0 %v1590
        %1903 = vmatpush.bf16.msra.mxu0 %v1586
        %1904 = vmatpush.bf16.msra.mxu0 %v1582
        %1905 = vmatpush.bf16.msra.mxu0 %v1578
        %1906 = vmatpush.bf16.msra.mxu0 %v1574
        %1907 = vmatmul.bf16.gmra.mxu0 %v1070
        %v1908 = vpop.f32.mrf.mxu0
        %v1909 = vadd.f32 %v1895, %v1908
        %v1910 = vpop.f32.mrf.mxu0
        %v1911 = vadd.f32 %v1897, %v1910
        %1912 = vdwg.mxu0
        %1913 = vmatpush.bf16.msra.mxu0 %v1634
        %1914 = vmatpush.bf16.msra.mxu0 %v1630
        %1915 = vmatpush.bf16.msra.mxu0 %v1626
        %1916 = vmatpush.bf16.msra.mxu0 %v1622
        %1917 = vmatpush.bf16.msra.mxu0 %v1618
        %1918 = vmatpush.bf16.msra.mxu0 %v1614
        %1919 = vmatpush.bf16.msra.mxu0 %v1610
        %1920 = vmatpush.bf16.msra.mxu0 %v1606
        %1921 = vmatmul.bf16.gmra.mxu0 %v1071
        %v1922 = vpop.f32.mrf.mxu0
        %v1923 = vadd.f32 %v1909, %v1922
        %v1924 = vpop.f32.mrf.mxu0
        %v1925 = vadd.f32 %v1911, %v1924
        %1926 = vdwg.mxu0
        %1927 = vmatpush.bf16.msra.mxu0 0
        %1928 = vmatpush.bf16.msra.mxu0 0
        %1929 = vmatpush.bf16.msra.mxu0 0
        %1930 = vmatpush.bf16.msra.mxu0 0
        %1931 = vmatpush.bf16.msra.mxu0 %v1650
        %1932 = vmatpush.bf16.msra.mxu0 %v1646
        %1933 = vmatpush.bf16.msra.mxu0 %v1642
        %1934 = vmatpush.bf16.msra.mxu0 %v1638
        %1935 = vmatmul.bf16.gmra.mxu0 %v1799
        %v1936 = vpop.f32.mrf.mxu0
        %v1937 = vadd.f32 %v1923, %v1936
        %v1938 = vpop.f32.mrf.mxu0
        %v1939 = vadd.f32 %v1925, %v1938
        %1940 = vdwg.mxu0
        %1941 = vmatpush.bf16.msra.mxu0 %v1539
        %1942 = vmatpush.bf16.msra.mxu0 %v1535
        %1943 = vmatpush.bf16.msra.mxu0 %v1531
        %1944 = vmatpush.bf16.msra.mxu0 %v1527
        %1945 = vmatpush.bf16.msra.mxu0 %v1523
        %1946 = vmatpush.bf16.msra.mxu0 %v1519
        %1947 = vmatpush.bf16.msra.mxu0 %v1515
        %1948 = vmatpush.bf16.msra.mxu0 %v1511
        %1949 = vmatmul.bf16.gmra.mxu0 %v1068
        %v1950 = vpop.f32.mrf.mxu0
        %v1951 = vadd.f32 0.0, %v1950
        %v1952 = vpop.f32.mrf.mxu0
        %v1953 = vadd.f32 0.0, %v1952
        %1954 = vdwg.mxu0
        %1955 = vmatpush.bf16.msra.mxu0 %v1571
        %1956 = vmatpush.bf16.msra.mxu0 %v1567
        %1957 = vmatpush.bf16.msra.mxu0 %v1563
        %1958 = vmatpush.bf16.msra.mxu0 %v1559
        %1959 = vmatpush.bf16.msra.mxu0 %v1555
        %1960 = vmatpush.bf16.msra.mxu0 %v1551
        %1961 = vmatpush.bf16.msra.mxu0 %v1547
        %1962 = vmatpush.bf16.msra.mxu0 %v1543
        %1963 = vmatmul.bf16.gmra.mxu0 %v1069
        %v1964 = vpop.f32.mrf.mxu0
        %v1965 = vadd.f32 %v1951, %v1964
        %v1966 = vpop.f32.mrf.mxu0
        %v1967 = vadd.f32 %v1953, %v1966
        %1968 = vdwg.mxu0
        %1969 = vmatpush.bf16.msra.mxu0 %v1603
        %1970 = vmatpush.bf16.msra.mxu0 %v1599
        %1971 = vmatpush.bf16.msra.mxu0 %v1595
        %1972 = vmatpush.bf16.msra.mxu0 %v1591
        %1973 = vmatpush.bf16.msra.mxu0 %v1587
        %1974 = vmatpush.bf16.msra.mxu0 %v1583
        %1975 = vmatpush.bf16.msra.mxu0 %v1579
        %1976 = vmatpush.bf16.msra.mxu0 %v1575
        %1977 = vmatmul.bf16.gmra.mxu0 %v1070
        %v1978 = vpop.f32.mrf.mxu0
        %v1979 = vadd.f32 %v1965, %v1978
        %v1980 = vpop.f32.mrf.mxu0
        %v1981 = vadd.f32 %v1967, %v1980
        %1982 = vdwg.mxu0
        %1983 = vmatpush.bf16.msra.mxu0 %v1635
        %1984 = vmatpush.bf16.msra.mxu0 %v1631
        %1985 = vmatpush.bf16.msra.mxu0 %v1627
        %1986 = vmatpush.bf16.msra.mxu0 %v1623
        %1987 = vmatpush.bf16.msra.mxu0 %v1619
        %1988 = vmatpush.bf16.msra.mxu0 %v1615
        %1989 = vmatpush.bf16.msra.mxu0 %v1611
        %1990 = vmatpush.bf16.msra.mxu0 %v1607
        %1991 = vmatmul.bf16.gmra.mxu0 %v1071
        %v1992 = vpop.f32.mrf.mxu0
        %v1993 = vadd.f32 %v1979, %v1992
        %v1994 = vpop.f32.mrf.mxu0
        %v1995 = vadd.f32 %v1981, %v1994
        %1996 = vdwg.mxu0
        %1997 = vmatpush.bf16.msra.mxu0 0
        %1998 = vmatpush.bf16.msra.mxu0 0
        %1999 = vmatpush.bf16.msra.mxu0 0
        %2000 = vmatpush.bf16.msra.mxu0 0
        %2001 = vmatpush.bf16.msra.mxu0 %v1651
        %2002 = vmatpush.bf16.msra.mxu0 %v1647
        %2003 = vmatpush.bf16.msra.mxu0 %v1643
        %2004 = vmatpush.bf16.msra.mxu0 %v1639
        %2005 = vmatmul.bf16.gmra.mxu0 %v1799
        %v2006 = vpop.f32.mrf.mxu0
        %v2007 = vadd.f32 %v1993, %v2006
        %v2008 = vpop.f32.mrf.mxu0
        %v2009 = vadd.f32 %v1995, %v2008
        %2010 = vdwg.mxu0
        %2011 = vmatpush.bf16.msra.mxu0 %v1540
        %2012 = vmatpush.bf16.msra.mxu0 %v1536
        %2013 = vmatpush.bf16.msra.mxu0 %v1532
        %2014 = vmatpush.bf16.msra.mxu0 %v1528
        %2015 = vmatpush.bf16.msra.mxu0 %v1524
        %2016 = vmatpush.bf16.msra.mxu0 %v1520
        %2017 = vmatpush.bf16.msra.mxu0 %v1516
        %2018 = vmatpush.bf16.msra.mxu0 %v1512
        %2019 = vmatmul.bf16.gmra.mxu0 %v1068
        %v2020 = vpop.f32.mrf.mxu0
        %v2021 = vadd.f32 0.0, %v2020
        %v2022 = vpop.f32.mrf.mxu0
        %v2023 = vadd.f32 0.0, %v2022
        %2024 = vdwg.mxu0
        %2025 = vmatpush.bf16.msra.mxu0 %v1572
        %2026 = vmatpush.bf16.msra.mxu0 %v1568
        %2027 = vmatpush.bf16.msra.mxu0 %v1564
        %2028 = vmatpush.bf16.msra.mxu0 %v1560
        %2029 = vmatpush.bf16.msra.mxu0 %v1556
        %2030 = vmatpush.bf16.msra.mxu0 %v1552
        %2031 = vmatpush.bf16.msra.mxu0 %v1548
        %2032 = vmatpush.bf16.msra.mxu0 %v1544
        %2033 = vmatmul.bf16.gmra.mxu0 %v1069
        %v2034 = vpop.f32.mrf.mxu0
        %v2035 = vadd.f32 %v2021, %v2034
        %v2036 = vpop.f32.mrf.mxu0
        %v2037 = vadd.f32 %v2023, %v2036
        %2038 = vdwg.mxu0
        %2039 = vmatpush.bf16.msra.mxu0 %v1604
        %2040 = vmatpush.bf16.msra.mxu0 %v1600
        %2041 = vmatpush.bf16.msra.mxu0 %v1596
        %2042 = vmatpush.bf16.msra.mxu0 %v1592
        %2043 = vmatpush.bf16.msra.mxu0 %v1588
        %2044 = vmatpush.bf16.msra.mxu0 %v1584
        %2045 = vmatpush.bf16.msra.mxu0 %v1580
        %2046 = vmatpush.bf16.msra.mxu0 %v1576
        %2047 = vmatmul.bf16.gmra.mxu0 %v1070
        %v2048 = vpop.f32.mrf.mxu0
        %v2049 = vadd.f32 %v2035, %v2048
        %v2050 = vpop.f32.mrf.mxu0
        %v2051 = vadd.f32 %v2037, %v2050
        %2052 = vdwg.mxu0
        %2053 = vmatpush.bf16.msra.mxu0 %v1636
        %2054 = vmatpush.bf16.msra.mxu0 %v1632
        %2055 = vmatpush.bf16.msra.mxu0 %v1628
        %2056 = vmatpush.bf16.msra.mxu0 %v1624
        %2057 = vmatpush.bf16.msra.mxu0 %v1620
        %2058 = vmatpush.bf16.msra.mxu0 %v1616
        %2059 = vmatpush.bf16.msra.mxu0 %v1612
        %2060 = vmatpush.bf16.msra.mxu0 %v1608
        %2061 = vmatmul.bf16.gmra.mxu0 %v1071
        %v2062 = vpop.f32.mrf.mxu0
        %v2063 = vadd.f32 %v2049, %v2062
        %v2064 = vpop.f32.mrf.mxu0
        %v2065 = vadd.f32 %v2051, %v2064
        %2066 = vdwg.mxu0
        %2067 = vmatpush.bf16.msra.mxu0 0
        %2068 = vmatpush.bf16.msra.mxu0 0
        %2069 = vmatpush.bf16.msra.mxu0 0
        %2070 = vmatpush.bf16.msra.mxu0 0
        %2071 = vmatpush.bf16.msra.mxu0 %v1652
        %2072 = vmatpush.bf16.msra.mxu0 %v1648
        %2073 = vmatpush.bf16.msra.mxu0 %v1644
        %2074 = vmatpush.bf16.msra.mxu0 %v1640
        %2075 = vmatmul.bf16.gmra.mxu0 %v1799
        %v2076 = vpop.f32.mrf.mxu0
        %v2077 = vadd.f32 %v2063, %v2076
        %v2078 = vpop.f32.mrf.mxu0
        %v2079 = vadd.f32 %v2065, %v2078
        %2080 = vdwg.mxu0
        %v2081 = vld [vmem:[%s835] sm:$0xff]
        %v2082 = vld [vmem:[%s835 + $0x8] sm:$0xff]
        %v2083 = vld [vmem:[%s835 + $0x10] sm:$0xff]
        %v2084 = vld [vmem:[%s835 + $0x18] sm:$0xff]
        %v2085 = vld [vmem:[%s835 + $0x20] sm:$0xff]
        %v2086 = vld [vmem:[%s835 + $0x28] sm:$0xff]
        %v2087 = vld [vmem:[%s835 + $0x30] sm:$0xff]
        %v2088 = vld [vmem:[%s835 + $0x38] sm:$0xff]
        %v2089 = vld [vmem:[%s835 + $0x40] sm:$0xff]
        %v2090 = vld [vmem:[%s835 + $0x48] sm:$0xff]
        %v2091 = vld [vmem:[%s835 + $0x50] sm:$0xff]
        %v2092 = vld [vmem:[%s835 + $0x58] sm:$0xff]
        %v2093 = vld [vmem:[%s835 + $0x60] sm:$0xff]
        %v2094 = vld [vmem:[%s835 + $0x68] sm:$0xff]
        %v2095 = vld [vmem:[%s835 + $0x70] sm:$0xff]
        %v2096 = vld [vmem:[%s835 + $0x78] sm:$0xff]
        %v2097 = vld [vmem:[%s835 + $0x80] sm:$0xff]
        %v2098 = vld [vmem:[%s835 + $0x88] sm:$0xff]
        %v2099 = vld [vmem:[%s835 + $0x90] sm:$0xff]
        %v2100 = vld [vmem:[%s835 + $0x98] sm:$0xff]
        %v2101 = vld [vmem:[%s835 + $0xa0] sm:$0xff]
        %v2102 = vld [vmem:[%s835 + $0xa8] sm:$0xff]
        %v2103 = vld [vmem:[%s835 + $0xb0] sm:$0xff]
        %v2104 = vld [vmem:[%s835 + $0xb8] sm:$0xff]
        %v2105 = vld [vmem:[%s835 + $0xc0] sm:$0xff]
        %v2106 = vld [vmem:[%s835 + $0xc8] sm:$0xff]
        %v2107 = vld [vmem:[%s835 + $0xd0] sm:$0xff]
        %v2108 = vld [vmem:[%s835 + $0xd8] sm:$0xff]
        %v2109 = vld [vmem:[%s835 + $0xe0] sm:$0xff]
        %v2110 = vld [vmem:[%s835 + $0xe8] sm:$0xff]
        %v2111 = vld [vmem:[%s835 + $0xf0] sm:$0xff]
        %v2112 = vld [vmem:[%s835 + $0xf8] sm:$0xff]
        %v2113 = vld [vmem:[%s835 + $0x100] sm:$0xff]
        %v2114 = vld [vmem:[%s835 + $0x108] sm:$0xff]
        %v2115 = vld [vmem:[%s835 + $0x110] sm:$0xff]
        %v2116 = vld [vmem:[%s835 + $0x118] sm:$0xff]
        %v2117 = vld [vmem:[%s835 + $0x120] sm:$0xff]
        %v2118 = vld [vmem:[%s835 + $0x128] sm:$0xff]
        %v2119 = vld [vmem:[%s835 + $0x130] sm:$0xff]
        %v2120 = vld [vmem:[%s835 + $0x138] sm:$0xff]
        %v2121 = vld [vmem:[%s835 + $0x140] sm:$0xff]
        %v2122 = vld [vmem:[%s835 + $0x148] sm:$0xff]
        %v2123 = vld [vmem:[%s835 + $0x150] sm:$0xff]
        %v2124 = vld [vmem:[%s835 + $0x158] sm:$0xff]
        %v2125 = vld [vmem:[%s835 + $0x160] sm:$0xff]
        %v2126 = vld [vmem:[%s835 + $0x168] sm:$0xff]
        %v2127 = vld [vmem:[%s835 + $0x170] sm:$0xff]
        %v2128 = vld [vmem:[%s835 + $0x178] sm:$0xff]
        %v2129 = vld [vmem:[%s835 + $0x180] sm:$0xff]
        %v2130 = vld [vmem:[%s835 + $0x188] sm:$0xff]
        %v2131 = vld [vmem:[%s835 + $0x190] sm:$0xff]
        %v2132 = vld [vmem:[%s835 + $0x198] sm:$0xff]
        %v2133 = vld [vmem:[%s835 + $0x1a0] sm:$0xff]
        %v2134 = vld [vmem:[%s835 + $0x1a8] sm:$0xff]
        %v2135 = vld [vmem:[%s835 + $0x1b0] sm:$0xff]
        %v2136 = vld [vmem:[%s835 + $0x1b8] sm:$0xff]
        %v2137 = vld [vmem:[%s835 + $0x1c0] sm:$0xff]
        %v2138 = vld [vmem:[%s835 + $0x1c8] sm:$0xff]
        %v2139 = vld [vmem:[%s835 + $0x1d0] sm:$0xff]
        %v2140 = vld [vmem:[%s835 + $0x1d8] sm:$0xff]
        %v2141 = vld [vmem:[%s835 + $0x1e0] sm:$0xff]
        %v2142 = vld [vmem:[%s835 + $0x1e8] sm:$0xff]
        %v2143 = vld [vmem:[%s835 + $0x1f0] sm:$0xff]
        %v2144 = vld [vmem:[%s835 + $0x1f8] sm:$0xff]
        %v2145 = vld [vmem:[%s835 + $0x200] sm:$0xff]
        %v2146 = vld [vmem:[%s835 + $0x208] sm:$0xff]
        %v2147 = vld [vmem:[%s835 + $0x210] sm:$0xff]
        %v2148 = vld [vmem:[%s835 + $0x218] sm:$0xff]
        %v2149 = vld [vmem:[%s835 + $0x220] sm:$0xff]
        %v2150 = vld [vmem:[%s835 + $0x228] sm:$0xff]
        %v2151 = vld [vmem:[%s835 + $0x230] sm:$0xff]
        %v2152 = vld [vmem:[%s835 + $0x238] sm:$0xff]
        %v2153 = vld [vmem:[%s835 + $0x240] sm:$0xff]
        %v2154 = vld [vmem:[%s835 + $0x248] sm:$0xff]
        %v2155 = vld [vmem:[%s835 + $0x250] sm:$0xff]
        %v2156 = vld [vmem:[%s835 + $0x258] sm:$0xff]
        %v2157 = vld [vmem:[%s835 + $0x260] sm:$0xff]
        %v2158 = vld [vmem:[%s835 + $0x268] sm:$0xff]
        %v2159 = vld [vmem:[%s835 + $0x270] sm:$0xff]
        %v2160 = vld [vmem:[%s835 + $0x278] sm:$0xff]
        %v2161 = vld [vmem:[%s835 + $0x280] sm:$0xff]
        %v2162 = vld [vmem:[%s835 + $0x288] sm:$0xff]
        %v2163 = vld [vmem:[%s835 + $0x290] sm:$0xff]
        %v2164 = vld [vmem:[%s835 + $0x298] sm:$0xff]
        %v2165 = vld [vmem:[%s835 + $0x2a0] sm:$0xff]
        %v2166 = vld [vmem:[%s835 + $0x2a8] sm:$0xff]
        %v2167 = vld [vmem:[%s835 + $0x2b0] sm:$0xff]
        %v2168 = vld [vmem:[%s835 + $0x2b8] sm:$0xff]
        %v2169 = vld [vmem:[%s835 + $0x2c0] sm:$0xff]
        %v2170 = vld [vmem:[%s835 + $0x2c8] sm:$0xff]
        %v2171 = vld [vmem:[%s835 + $0x2d0] sm:$0xff]
        %v2172 = vld [vmem:[%s835 + $0x2d8] sm:$0xff]
        %v2173 = vld [vmem:[%s835 + $0x2e0] sm:$0xff]
        %v2174 = vld [vmem:[%s835 + $0x2e8] sm:$0xff]
        %v2175 = vld [vmem:[%s835 + $0x2f0] sm:$0xff]
        %v2176 = vld [vmem:[%s835 + $0x2f8] sm:$0xff]
        %v2177 = vld [vmem:[%s835 + $0x300] sm:$0xff]
        %v2178 = vld [vmem:[%s835 + $0x308] sm:$0xff]
        %v2179 = vld [vmem:[%s835 + $0x310] sm:$0xff]
        %v2180 = vld [vmem:[%s835 + $0x318] sm:$0xff]
        %v2181 = vld [vmem:[%s835 + $0x320] sm:$0xff]
        %v2182 = vld [vmem:[%s835 + $0x328] sm:$0xff]
        %v2183 = vld [vmem:[%s835 + $0x330] sm:$0xff]
        %v2184 = vld [vmem:[%s835 + $0x338] sm:$0xff]
        %v2185 = vld [vmem:[%s835 + $0x340] sm:$0xff]
        %v2186 = vld [vmem:[%s835 + $0x348] sm:$0xff]
        %v2187 = vld [vmem:[%s835 + $0x350] sm:$0xff]
        %v2188 = vld [vmem:[%s835 + $0x358] sm:$0xff]
        %v2189 = vld [vmem:[%s835 + $0x360] sm:$0xff]
        %v2190 = vld [vmem:[%s835 + $0x368] sm:$0xff]
        %v2191 = vld [vmem:[%s835 + $0x370] sm:$0xff]
        %v2192 = vld [vmem:[%s835 + $0x378] sm:$0xff]
        %v2193 = vld [vmem:[%s835 + $0x380] sm:$0xff]
        %v2194 = vld [vmem:[%s835 + $0x388] sm:$0xff]
        %v2195 = vld [vmem:[%s835 + $0x390] sm:$0xff]
        %v2196 = vld [vmem:[%s835 + $0x398] sm:$0xff]
        %v2197 = vld [vmem:[%s835 + $0x3a0] sm:$0xff]
        %v2198 = vld [vmem:[%s835 + $0x3a8] sm:$0xff]
        %v2199 = vld [vmem:[%s835 + $0x3b0] sm:$0xff]
        %v2200 = vld [vmem:[%s835 + $0x3b8] sm:$0xff]
        %v2201 = vld [vmem:[%s835 + $0x3c0] sm:$0xff]
        %v2202 = vld [vmem:[%s835 + $0x3c8] sm:$0xff]
        %v2203 = vld [vmem:[%s835 + $0x3d0] sm:$0xff]
        %v2204 = vld [vmem:[%s835 + $0x3d8] sm:$0xff]
        %v2205 = vld [vmem:[%s835 + $0x3e0] sm:$0xff]
        %v2206 = vld [vmem:[%s835 + $0x3e8] sm:$0xff]
        %v2207 = vld [vmem:[%s835 + $0x3f0] sm:$0xff]
        %v2208 = vld [vmem:[%s835 + $0x3f8] sm:$0xff]
        %v2209 = vld [vmem:[%s835 + $0x400] sm:$0xff]
        %v2210 = vld [vmem:[%s835 + $0x408] sm:$0xff]
        %v2211 = vld [vmem:[%s835 + $0x410] sm:$0xff]
        %v2212 = vld [vmem:[%s835 + $0x418] sm:$0xff]
        %v2213 = vld [vmem:[%s835 + $0x420] sm:$0xff]
        %v2214 = vld [vmem:[%s835 + $0x428] sm:$0xff]
        %v2215 = vld [vmem:[%s835 + $0x430] sm:$0xff]
        %v2216 = vld [vmem:[%s835 + $0x438] sm:$0xff]
        %v2217 = vld [vmem:[%s835 + $0x440] sm:$0xff]
        %v2218 = vld [vmem:[%s835 + $0x448] sm:$0xff]
        %v2219 = vld [vmem:[%s835 + $0x450] sm:$0xff]
        %v2220 = vld [vmem:[%s835 + $0x458] sm:$0xff]
        %v2221 = vld [vmem:[%s835 + $0x460] sm:$0xff]
        %v2222 = vld [vmem:[%s835 + $0x468] sm:$0xff]
        %v2223 = vld [vmem:[%s835 + $0x470] sm:$0xff]
        %v2224 = vld [vmem:[%s835 + $0x478] sm:$0xff]
        %v2369 = vunpack.c.l.b16 %v2081
        %v2370 = vunpack.c.h.b16 %v2081
        %v2371 = vunpack.c.l.b16 %v2082
        %v2372 = vunpack.c.h.b16 %v2082
        %v2373 = vunpack.c.l.b16 %v2083
        %v2374 = vunpack.c.h.b16 %v2083
        %v2375 = vunpack.c.l.b16 %v2084
        %v2376 = vunpack.c.h.b16 %v2084
        %v2377 = vunpack.c.l.b16 %v2085
        %v2378 = vunpack.c.h.b16 %v2085
        %v2379 = vunpack.c.l.b16 %v2086
        %v2380 = vunpack.c.h.b16 %v2086
        %v2381 = vunpack.c.l.b16 %v2087
        %v2382 = vunpack.c.h.b16 %v2087
        %v2383 = vunpack.c.l.b16 %v2088
        %v2384 = vunpack.c.h.b16 %v2088
        %v2385 = vunpack.c.l.b16 %v2089
        %v2386 = vunpack.c.h.b16 %v2089
        %v2387 = vunpack.c.l.b16 %v2090
        %v2388 = vunpack.c.h.b16 %v2090
        %v2389 = vunpack.c.l.b16 %v2091
        %v2390 = vunpack.c.h.b16 %v2091
        %v2391 = vunpack.c.l.b16 %v2092
        %v2392 = vunpack.c.h.b16 %v2092
        %v2393 = vunpack.c.l.b16 %v2093
        %v2394 = vunpack.c.h.b16 %v2093
        %v2395 = vunpack.c.l.b16 %v2094
        %v2396 = vunpack.c.h.b16 %v2094
        %v2397 = vunpack.c.l.b16 %v2095
        %v2398 = vunpack.c.h.b16 %v2095
        %v2399 = vunpack.c.l.b16 %v2096
        %v2400 = vunpack.c.h.b16 %v2096
        %v2401 = vunpack.c.l.b16 %v2097
        %v2402 = vunpack.c.h.b16 %v2097
        %v2403 = vunpack.c.l.b16 %v2098
        %v2404 = vunpack.c.h.b16 %v2098
        %v2405 = vunpack.c.l.b16 %v2099
        %v2406 = vunpack.c.h.b16 %v2099
        %v2407 = vunpack.c.l.b16 %v2100
        %v2408 = vunpack.c.h.b16 %v2100
        %v2409 = vunpack.c.l.b16 %v2101
        %v2410 = vunpack.c.h.b16 %v2101
        %v2411 = vunpack.c.l.b16 %v2102
        %v2412 = vunpack.c.h.b16 %v2102
        %v2413 = vunpack.c.l.b16 %v2103
        %v2414 = vunpack.c.h.b16 %v2103
        %v2415 = vunpack.c.l.b16 %v2104
        %v2416 = vunpack.c.h.b16 %v2104
        %v2417 = vunpack.c.l.b16 %v2105
        %v2418 = vunpack.c.h.b16 %v2105
        %v2419 = vunpack.c.l.b16 %v2106
        %v2420 = vunpack.c.h.b16 %v2106
        %v2421 = vunpack.c.l.b16 %v2107
        %v2422 = vunpack.c.h.b16 %v2107
        %v2423 = vunpack.c.l.b16 %v2108
        %v2424 = vunpack.c.h.b16 %v2108
        %v2425 = vunpack.c.l.b16 %v2109
        %v2426 = vunpack.c.h.b16 %v2109
        %v2427 = vunpack.c.l.b16 %v2110
        %v2428 = vunpack.c.h.b16 %v2110
        %v2429 = vunpack.c.l.b16 %v2111
        %v2430 = vunpack.c.h.b16 %v2111
        %v2431 = vunpack.c.l.b16 %v2112
        %v2432 = vunpack.c.h.b16 %v2112
        %v2433 = vunpack.c.l.b16 %v2113
        %v2434 = vunpack.c.h.b16 %v2113
        %v2435 = vunpack.c.l.b16 %v2114
        %v2436 = vunpack.c.h.b16 %v2114
        %v2437 = vunpack.c.l.b16 %v2115
        %v2438 = vunpack.c.h.b16 %v2115
        %v2439 = vunpack.c.l.b16 %v2116
        %v2440 = vunpack.c.h.b16 %v2116
        %v2441 = vunpack.c.l.b16 %v2117
        %v2442 = vunpack.c.h.b16 %v2117
        %v2443 = vunpack.c.l.b16 %v2118
        %v2444 = vunpack.c.h.b16 %v2118
        %v2445 = vunpack.c.l.b16 %v2119
        %v2446 = vunpack.c.h.b16 %v2119
        %v2447 = vunpack.c.l.b16 %v2120
        %v2448 = vunpack.c.h.b16 %v2120
        %v2449 = vunpack.c.l.b16 %v2121
        %v2450 = vunpack.c.h.b16 %v2121
        %v2451 = vunpack.c.l.b16 %v2122
        %v2452 = vunpack.c.h.b16 %v2122
        %v2453 = vunpack.c.l.b16 %v2123
        %v2454 = vunpack.c.h.b16 %v2123
        %v2455 = vunpack.c.l.b16 %v2124
        %v2456 = vunpack.c.h.b16 %v2124
        %v2457 = vunpack.c.l.b16 %v2125
        %v2458 = vunpack.c.h.b16 %v2125
        %v2459 = vunpack.c.l.b16 %v2126
        %v2460 = vunpack.c.h.b16 %v2126
        %v2461 = vunpack.c.l.b16 %v2127
        %v2462 = vunpack.c.h.b16 %v2127
        %v2463 = vunpack.c.l.b16 %v2128
        %v2464 = vunpack.c.h.b16 %v2128
        %v2465 = vunpack.c.l.b16 %v2129
        %v2466 = vunpack.c.h.b16 %v2129
        %v2467 = vunpack.c.l.b16 %v2130
        %v2468 = vunpack.c.h.b16 %v2130
        %v2469 = vunpack.c.l.b16 %v2131
        %v2470 = vunpack.c.h.b16 %v2131
        %v2471 = vunpack.c.l.b16 %v2132
        %v2472 = vunpack.c.h.b16 %v2132
        %v2473 = vunpack.c.l.b16 %v2133
        %v2474 = vunpack.c.h.b16 %v2133
        %v2475 = vunpack.c.l.b16 %v2134
        %v2476 = vunpack.c.h.b16 %v2134
        %v2477 = vunpack.c.l.b16 %v2135
        %v2478 = vunpack.c.h.b16 %v2135
        %v2479 = vunpack.c.l.b16 %v2136
        %v2480 = vunpack.c.h.b16 %v2136
        %v2481 = vunpack.c.l.b16 %v2137
        %v2482 = vunpack.c.h.b16 %v2137
        %v2483 = vunpack.c.l.b16 %v2138
        %v2484 = vunpack.c.h.b16 %v2138
        %v2485 = vunpack.c.l.b16 %v2139
        %v2486 = vunpack.c.h.b16 %v2139
        %v2487 = vunpack.c.l.b16 %v2140
        %v2488 = vunpack.c.h.b16 %v2140
        %v2489 = vunpack.c.l.b16 %v2141
        %v2490 = vunpack.c.h.b16 %v2141
        %v2491 = vunpack.c.l.b16 %v2142
        %v2492 = vunpack.c.h.b16 %v2142
        %v2493 = vunpack.c.l.b16 %v2143
        %v2494 = vunpack.c.h.b16 %v2143
        %v2495 = vunpack.c.l.b16 %v2144
        %v2496 = vunpack.c.h.b16 %v2144
        %v2497 = vunpack.c.l.b16 %v2145
        %v2498 = vunpack.c.h.b16 %v2145
        %v2499 = vunpack.c.l.b16 %v2146
        %v2500 = vunpack.c.h.b16 %v2146
        %v2501 = vunpack.c.l.b16 %v2147
        %v2502 = vunpack.c.h.b16 %v2147
        %v2503 = vunpack.c.l.b16 %v2148
        %v2504 = vunpack.c.h.b16 %v2148
        %v2505 = vunpack.c.l.b16 %v2149
        %v2506 = vunpack.c.h.b16 %v2149
        %v2507 = vunpack.c.l.b16 %v2150
        %v2508 = vunpack.c.h.b16 %v2150
        %v2509 = vunpack.c.l.b16 %v2151
        %v2510 = vunpack.c.h.b16 %v2151
        %v2511 = vunpack.c.l.b16 %v2152
        %v2512 = vunpack.c.h.b16 %v2152
        %v2513 = vunpack.c.l.b16 %v2153
        %v2514 = vunpack.c.h.b16 %v2153
        %v2515 = vunpack.c.l.b16 %v2154
        %v2516 = vunpack.c.h.b16 %v2154
        %v2517 = vunpack.c.l.b16 %v2155
        %v2518 = vunpack.c.h.b16 %v2155
        %v2519 = vunpack.c.l.b16 %v2156
        %v2520 = vunpack.c.h.b16 %v2156
        %v2521 = vunpack.c.l.b16 %v2157
        %v2522 = vunpack.c.h.b16 %v2157
        %v2523 = vunpack.c.l.b16 %v2158
        %v2524 = vunpack.c.h.b16 %v2158
        %v2525 = vunpack.c.l.b16 %v2159
        %v2526 = vunpack.c.h.b16 %v2159
        %v2527 = vunpack.c.l.b16 %v2160
        %v2528 = vunpack.c.h.b16 %v2160
        %v2529 = vunpack.c.l.b16 %v2161
        %v2530 = vunpack.c.h.b16 %v2161
        %v2531 = vunpack.c.l.b16 %v2162
        %v2532 = vunpack.c.h.b16 %v2162
        %v2533 = vunpack.c.l.b16 %v2163
        %v2534 = vunpack.c.h.b16 %v2163
        %v2535 = vunpack.c.l.b16 %v2164
        %v2536 = vunpack.c.h.b16 %v2164
        %v2537 = vunpack.c.l.b16 %v2165
        %v2538 = vunpack.c.h.b16 %v2165
        %v2539 = vunpack.c.l.b16 %v2166
        %v2540 = vunpack.c.h.b16 %v2166
        %v2541 = vunpack.c.l.b16 %v2167
        %v2542 = vunpack.c.h.b16 %v2167
        %v2543 = vunpack.c.l.b16 %v2168
        %v2544 = vunpack.c.h.b16 %v2168
        %v2545 = vunpack.c.l.b16 %v2169
        %v2546 = vunpack.c.h.b16 %v2169
        %v2547 = vunpack.c.l.b16 %v2170
        %v2548 = vunpack.c.h.b16 %v2170
        %v2549 = vunpack.c.l.b16 %v2171
        %v2550 = vunpack.c.h.b16 %v2171
        %v2551 = vunpack.c.l.b16 %v2172
        %v2552 = vunpack.c.h.b16 %v2172
        %v2553 = vunpack.c.l.b16 %v2173
        %v2554 = vunpack.c.h.b16 %v2173
        %v2555 = vunpack.c.l.b16 %v2174
        %v2556 = vunpack.c.h.b16 %v2174
        %v2557 = vunpack.c.l.b16 %v2175
        %v2558 = vunpack.c.h.b16 %v2175
        %v2559 = vunpack.c.l.b16 %v2176
        %v2560 = vunpack.c.h.b16 %v2176
        %v2561 = vunpack.c.l.b16 %v2177
        %v2562 = vunpack.c.h.b16 %v2177
        %v2563 = vunpack.c.l.b16 %v2178
        %v2564 = vunpack.c.h.b16 %v2178
        %v2565 = vunpack.c.l.b16 %v2179
        %v2566 = vunpack.c.h.b16 %v2179
        %v2567 = vunpack.c.l.b16 %v2180
        %v2568 = vunpack.c.h.b16 %v2180
        %v2569 = vunpack.c.l.b16 %v2181
        %v2570 = vunpack.c.h.b16 %v2181
        %v2571 = vunpack.c.l.b16 %v2182
        %v2572 = vunpack.c.h.b16 %v2182
        %v2573 = vunpack.c.l.b16 %v2183
        %v2574 = vunpack.c.h.b16 %v2183
        %v2575 = vunpack.c.l.b16 %v2184
        %v2576 = vunpack.c.h.b16 %v2184
        %v2577 = vunpack.c.l.b16 %v2185
        %v2578 = vunpack.c.h.b16 %v2185
        %v2579 = vunpack.c.l.b16 %v2186
        %v2580 = vunpack.c.h.b16 %v2186
        %v2581 = vunpack.c.l.b16 %v2187
        %v2582 = vunpack.c.h.b16 %v2187
        %v2583 = vunpack.c.l.b16 %v2188
        %v2584 = vunpack.c.h.b16 %v2188
        %v2585 = vunpack.c.l.b16 %v2189
        %v2586 = vunpack.c.h.b16 %v2189
        %v2587 = vunpack.c.l.b16 %v2190
        %v2588 = vunpack.c.h.b16 %v2190
        %v2589 = vunpack.c.l.b16 %v2191
        %v2590 = vunpack.c.h.b16 %v2191
        %v2591 = vunpack.c.l.b16 %v2192
        %v2592 = vunpack.c.h.b16 %v2192
        %v2593 = vunpack.c.l.b16 %v2193
        %v2594 = vunpack.c.h.b16 %v2193
        %v2595 = vunpack.c.l.b16 %v2194
        %v2596 = vunpack.c.h.b16 %v2194
        %v2597 = vunpack.c.l.b16 %v2195
        %v2598 = vunpack.c.h.b16 %v2195
        %v2599 = vunpack.c.l.b16 %v2196
        %v2600 = vunpack.c.h.b16 %v2196
        %v2601 = vunpack.c.l.b16 %v2197
        %v2602 = vunpack.c.h.b16 %v2197
        %v2603 = vunpack.c.l.b16 %v2198
        %v2604 = vunpack.c.h.b16 %v2198
        %v2605 = vunpack.c.l.b16 %v2199
        %v2606 = vunpack.c.h.b16 %v2199
        %v2607 = vunpack.c.l.b16 %v2200
        %v2608 = vunpack.c.h.b16 %v2200
        %v2609 = vunpack.c.l.b16 %v2201
        %v2610 = vunpack.c.h.b16 %v2201
        %v2611 = vunpack.c.l.b16 %v2202
        %v2612 = vunpack.c.h.b16 %v2202
        %v2613 = vunpack.c.l.b16 %v2203
        %v2614 = vunpack.c.h.b16 %v2203
        %v2615 = vunpack.c.l.b16 %v2204
        %v2616 = vunpack.c.h.b16 %v2204
        %v2617 = vunpack.c.l.b16 %v2205
        %v2618 = vunpack.c.h.b16 %v2205
        %v2619 = vunpack.c.l.b16 %v2206
        %v2620 = vunpack.c.h.b16 %v2206
        %v2621 = vunpack.c.l.b16 %v2207
        %v2622 = vunpack.c.h.b16 %v2207
        %v2623 = vunpack.c.l.b16 %v2208
        %v2624 = vunpack.c.h.b16 %v2208
        %v2625 = vunpack.c.l.b16 %v2209
        %v2626 = vunpack.c.h.b16 %v2209
        %v2627 = vunpack.c.l.b16 %v2210
        %v2628 = vunpack.c.h.b16 %v2210
        %v2629 = vunpack.c.l.b16 %v2211
        %v2630 = vunpack.c.h.b16 %v2211
        %v2631 = vunpack.c.l.b16 %v2212
        %v2632 = vunpack.c.h.b16 %v2212
        %v2633 = vunpack.c.l.b16 %v2213
        %v2634 = vunpack.c.h.b16 %v2213
        %v2635 = vunpack.c.l.b16 %v2214
        %v2636 = vunpack.c.h.b16 %v2214
        %v2637 = vunpack.c.l.b16 %v2215
        %v2638 = vunpack.c.h.b16 %v2215
        %v2639 = vunpack.c.l.b16 %v2216
        %v2640 = vunpack.c.h.b16 %v2216
        %v2641 = vunpack.c.l.b16 %v2217
        %v2642 = vunpack.c.h.b16 %v2217
        %v2643 = vunpack.c.l.b16 %v2218
        %v2644 = vunpack.c.h.b16 %v2218
        %v2645 = vunpack.c.l.b16 %v2219
        %v2646 = vunpack.c.h.b16 %v2219
        %v2647 = vunpack.c.l.b16 %v2220
        %v2648 = vunpack.c.h.b16 %v2220
        %v2649 = vunpack.c.l.b16 %v2221
        %v2650 = vunpack.c.h.b16 %v2221
        %v2651 = vunpack.c.l.b16 %v2222
        %v2652 = vunpack.c.h.b16 %v2222
        %v2653 = vunpack.c.l.b16 %v2223
        %v2654 = vunpack.c.h.b16 %v2223
        %v2655 = vunpack.c.l.b16 %v2224
        %v2656 = vunpack.c.h.b16 %v2224
        %v2657 = vpack.c.b16 %v2373, %v2369
        %v2658 = vpack.c.b16 %v2374, %v2370
        %v2659 = vpack.c.b16 %v2375, %v2371
        %v2660 = vpack.c.b16 %v2376, %v2372
        %v2661 = vpack.c.b16 %v2381, %v2377
        %v2662 = vpack.c.b16 %v2382, %v2378
        %v2663 = vpack.c.b16 %v2383, %v2379
        %v2664 = vpack.c.b16 %v2384, %v2380
        %v2665 = vpack.c.b16 %v2389, %v2385
        %v2666 = vpack.c.b16 %v2390, %v2386
        %v2667 = vpack.c.b16 %v2391, %v2387
        %v2668 = vpack.c.b16 %v2392, %v2388
        %v2669 = vpack.c.b16 %v2397, %v2393
        %v2670 = vpack.c.b16 %v2398, %v2394
        %v2671 = vpack.c.b16 %v2399, %v2395
        %v2672 = vpack.c.b16 %v2400, %v2396
        %v2673 = vpack.c.b16 %v2405, %v2401
        %v2674 = vpack.c.b16 %v2406, %v2402
        %v2675 = vpack.c.b16 %v2407, %v2403
        %v2676 = vpack.c.b16 %v2408, %v2404
        %v2677 = vpack.c.b16 %v2413, %v2409
        %v2678 = vpack.c.b16 %v2414, %v2410
        %v2679 = vpack.c.b16 %v2415, %v2411
        %v2680 = vpack.c.b16 %v2416, %v2412
        %v2681 = vpack.c.b16 %v2421, %v2417
        %v2682 = vpack.c.b16 %v2422, %v2418
        %v2683 = vpack.c.b16 %v2423, %v2419
        %v2684 = vpack.c.b16 %v2424, %v2420
        %v2685 = vpack.c.b16 %v2429, %v2425
        %v2686 = vpack.c.b16 %v2430, %v2426
        %v2687 = vpack.c.b16 %v2431, %v2427
        %v2688 = vpack.c.b16 %v2432, %v2428
        %v2689 = vpack.c.b16 %v2437, %v2433
        %v2690 = vpack.c.b16 %v2438, %v2434
        %v2691 = vpack.c.b16 %v2439, %v2435
        %v2692 = vpack.c.b16 %v2440, %v2436
        %v2693 = vpack.c.b16 %v2445, %v2441
        %v2694 = vpack.c.b16 %v2446, %v2442
        %v2695 = vpack.c.b16 %v2447, %v2443
        %v2696 = vpack.c.b16 %v2448, %v2444
        %v2697 = vpack.c.b16 %v2453, %v2449
        %v2698 = vpack.c.b16 %v2454, %v2450
        %v2699 = vpack.c.b16 %v2455, %v2451
        %v2700 = vpack.c.b16 %v2456, %v2452
        %v2701 = vpack.c.b16 %v2461, %v2457
        %v2702 = vpack.c.b16 %v2462, %v2458
        %v2703 = vpack.c.b16 %v2463, %v2459
        %v2704 = vpack.c.b16 %v2464, %v2460
        %v2705 = vpack.c.b16 %v2469, %v2465
        %v2706 = vpack.c.b16 %v2470, %v2466
        %v2707 = vpack.c.b16 %v2471, %v2467
        %v2708 = vpack.c.b16 %v2472, %v2468
        %v2709 = vpack.c.b16 %v2477, %v2473
        %v2710 = vpack.c.b16 %v2478, %v2474
        %v2711 = vpack.c.b16 %v2479, %v2475
        %v2712 = vpack.c.b16 %v2480, %v2476
        %v2713 = vpack.c.b16 %v2485, %v2481
        %v2714 = vpack.c.b16 %v2486, %v2482
        %v2715 = vpack.c.b16 %v2487, %v2483
        %v2716 = vpack.c.b16 %v2488, %v2484
        %v2717 = vpack.c.b16 %v2493, %v2489
        %v2718 = vpack.c.b16 %v2494, %v2490
        %v2719 = vpack.c.b16 %v2495, %v2491
        %v2720 = vpack.c.b16 %v2496, %v2492
        %v2721 = vpack.c.b16 %v2501, %v2497
        %v2722 = vpack.c.b16 %v2502, %v2498
        %v2723 = vpack.c.b16 %v2503, %v2499
        %v2724 = vpack.c.b16 %v2504, %v2500
        %v2725 = vpack.c.b16 %v2509, %v2505
        %v2726 = vpack.c.b16 %v2510, %v2506
        %v2727 = vpack.c.b16 %v2511, %v2507
        %v2728 = vpack.c.b16 %v2512, %v2508
        %v2729 = vpack.c.b16 %v2517, %v2513
        %v2730 = vpack.c.b16 %v2518, %v2514
        %v2731 = vpack.c.b16 %v2519, %v2515
        %v2732 = vpack.c.b16 %v2520, %v2516
        %v2733 = vpack.c.b16 %v2525, %v2521
        %v2734 = vpack.c.b16 %v2526, %v2522
        %v2735 = vpack.c.b16 %v2527, %v2523
        %v2736 = vpack.c.b16 %v2528, %v2524
        %v2737 = vpack.c.b16 %v2533, %v2529
        %v2738 = vpack.c.b16 %v2534, %v2530
        %v2739 = vpack.c.b16 %v2535, %v2531
        %v2740 = vpack.c.b16 %v2536, %v2532
        %v2741 = vpack.c.b16 %v2541, %v2537
        %v2742 = vpack.c.b16 %v2542, %v2538
        %v2743 = vpack.c.b16 %v2543, %v2539
        %v2744 = vpack.c.b16 %v2544, %v2540
        %v2745 = vpack.c.b16 %v2549, %v2545
        %v2746 = vpack.c.b16 %v2550, %v2546
        %v2747 = vpack.c.b16 %v2551, %v2547
        %v2748 = vpack.c.b16 %v2552, %v2548
        %v2749 = vpack.c.b16 %v2557, %v2553
        %v2750 = vpack.c.b16 %v2558, %v2554
        %v2751 = vpack.c.b16 %v2559, %v2555
        %v2752 = vpack.c.b16 %v2560, %v2556
        %v2753 = vpack.c.b16 %v2565, %v2561
        %v2754 = vpack.c.b16 %v2566, %v2562
        %v2755 = vpack.c.b16 %v2567, %v2563
        %v2756 = vpack.c.b16 %v2568, %v2564
        %v2757 = vpack.c.b16 %v2573, %v2569
        %v2758 = vpack.c.b16 %v2574, %v2570
        %v2759 = vpack.c.b16 %v2575, %v2571
        %v2760 = vpack.c.b16 %v2576, %v2572
        %v2761 = vpack.c.b16 %v2581, %v2577
        %v2762 = vpack.c.b16 %v2582, %v2578
        %v2763 = vpack.c.b16 %v2583, %v2579
        %v2764 = vpack.c.b16 %v2584, %v2580
        %v2765 = vpack.c.b16 %v2589, %v2585
        %v2766 = vpack.c.b16 %v2590, %v2586
        %v2767 = vpack.c.b16 %v2591, %v2587
        %v2768 = vpack.c.b16 %v2592, %v2588
        %v2769 = vpack.c.b16 %v2597, %v2593
        %v2770 = vpack.c.b16 %v2598, %v2594
        %v2771 = vpack.c.b16 %v2599, %v2595
        %v2772 = vpack.c.b16 %v2600, %v2596
        %v2773 = vpack.c.b16 %v2605, %v2601
        %v2774 = vpack.c.b16 %v2606, %v2602
        %v2775 = vpack.c.b16 %v2607, %v2603
        %v2776 = vpack.c.b16 %v2608, %v2604
        %v2777 = vpack.c.b16 %v2613, %v2609
        %v2778 = vpack.c.b16 %v2614, %v2610
        %v2779 = vpack.c.b16 %v2615, %v2611
        %v2780 = vpack.c.b16 %v2616, %v2612
        %v2781 = vpack.c.b16 %v2621, %v2617
        %v2782 = vpack.c.b16 %v2622, %v2618
        %v2783 = vpack.c.b16 %v2623, %v2619
        %v2784 = vpack.c.b16 %v2624, %v2620
        %v2785 = vpack.c.b16 %v2629, %v2625
        %v2786 = vpack.c.b16 %v2630, %v2626
        %v2787 = vpack.c.b16 %v2631, %v2627
        %v2788 = vpack.c.b16 %v2632, %v2628
        %v2789 = vpack.c.b16 %v2637, %v2633
        %v2790 = vpack.c.b16 %v2638, %v2634
        %v2791 = vpack.c.b16 %v2639, %v2635
        %v2792 = vpack.c.b16 %v2640, %v2636
        %v2793 = vpack.c.b16 %v2645, %v2641
        %v2794 = vpack.c.b16 %v2646, %v2642
        %v2795 = vpack.c.b16 %v2647, %v2643
        %v2796 = vpack.c.b16 %v2648, %v2644
        %v2797 = vpack.c.b16 %v2653, %v2649
        %v2798 = vpack.c.b16 %v2654, %v2650
        %v2799 = vpack.c.b16 %v2655, %v2651
        %v2800 = vpack.c.b16 %v2656, %v2652
        %2945 = vmatpush.bf16.msra.mxu0 %v2685
        %2946 = vmatpush.bf16.msra.mxu0 %v2681
        %2947 = vmatpush.bf16.msra.mxu0 %v2677
        %2948 = vmatpush.bf16.msra.mxu0 %v2673
        %2949 = vmatpush.bf16.msra.mxu0 %v2669
        %2950 = vmatpush.bf16.msra.mxu0 %v2665
        %2951 = vmatpush.bf16.msra.mxu0 %v2661
        %2952 = vmatpush.bf16.msra.mxu0 %v2657
        %2953 = vmatmul.bf16.gmra.mxu0 %v1068
        %v2954 = vpop.f32.mrf.mxu0
        %v2955 = vadd.f32 0.0, %v2954
        %v2956 = vpop.f32.mrf.mxu0
        %v2957 = vadd.f32 0.0, %v2956
        %2958 = vdwg.mxu0
        %2959 = vmatpush.bf16.msra.mxu0 %v2717
        %2960 = vmatpush.bf16.msra.mxu0 %v2713
        %2961 = vmatpush.bf16.msra.mxu0 %v2709
        %2962 = vmatpush.bf16.msra.mxu0 %v2705
        %2963 = vmatpush.bf16.msra.mxu0 %v2701
        %2964 = vmatpush.bf16.msra.mxu0 %v2697
        %2965 = vmatpush.bf16.msra.mxu0 %v2693
        %2966 = vmatpush.bf16.msra.mxu0 %v2689
        %2967 = vmatmul.bf16.gmra.mxu0 %v1069
        %v2968 = vpop.f32.mrf.mxu0
        %v2969 = vadd.f32 %v2955, %v2968
        %v2970 = vpop.f32.mrf.mxu0
        %v2971 = vadd.f32 %v2957, %v2970
        %2972 = vdwg.mxu0
        %2973 = vmatpush.bf16.msra.mxu0 %v2749
        %2974 = vmatpush.bf16.msra.mxu0 %v2745
        %2975 = vmatpush.bf16.msra.mxu0 %v2741
        %2976 = vmatpush.bf16.msra.mxu0 %v2737
        %2977 = vmatpush.bf16.msra.mxu0 %v2733
        %2978 = vmatpush.bf16.msra.mxu0 %v2729
        %2979 = vmatpush.bf16.msra.mxu0 %v2725
        %2980 = vmatpush.bf16.msra.mxu0 %v2721
        %2981 = vmatmul.bf16.gmra.mxu0 %v1070
        %v2982 = vpop.f32.mrf.mxu0
        %v2983 = vadd.f32 %v2969, %v2982
        %v2984 = vpop.f32.mrf.mxu0
        %v2985 = vadd.f32 %v2971, %v2984
        %2986 = vdwg.mxu0
        %2987 = vmatpush.bf16.msra.mxu0 %v2781
        %2988 = vmatpush.bf16.msra.mxu0 %v2777
        %2989 = vmatpush.bf16.msra.mxu0 %v2773
        %2990 = vmatpush.bf16.msra.mxu0 %v2769
        %2991 = vmatpush.bf16.msra.mxu0 %v2765
        %2992 = vmatpush.bf16.msra.mxu0 %v2761
        %2993 = vmatpush.bf16.msra.mxu0 %v2757
        %2994 = vmatpush.bf16.msra.mxu0 %v2753
        %2995 = vmatmul.bf16.gmra.mxu0 %v1071
        %v2996 = vpop.f32.mrf.mxu0
        %v2997 = vadd.f32 %v2983, %v2996
        %v2998 = vpop.f32.mrf.mxu0
        %v2999 = vadd.f32 %v2985, %v2998
        %3000 = vdwg.mxu0
        %3001 = vmatpush.bf16.msra.mxu0 0
        %3002 = vmatpush.bf16.msra.mxu0 0
        %3003 = vmatpush.bf16.msra.mxu0 0
        %3004 = vmatpush.bf16.msra.mxu0 0
        %3005 = vmatpush.bf16.msra.mxu0 %v2797
        %3006 = vmatpush.bf16.msra.mxu0 %v2793
        %3007 = vmatpush.bf16.msra.mxu0 %v2789
        %3008 = vmatpush.bf16.msra.mxu0 %v2785
        %3009 = vmatmul.bf16.gmra.mxu0 %v1799
        %v3010 = vpop.f32.mrf.mxu0
        %v3011 = vadd.f32 %v2997, %v3010
        %v3012 = vpop.f32.mrf.mxu0
        %v3013 = vadd.f32 %v2999, %v3012
        %3014 = vdwg.mxu0
        %3015 = vmatpush.bf16.msra.mxu0 %v2686
        %3016 = vmatpush.bf16.msra.mxu0 %v2682
        %3017 = vmatpush.bf16.msra.mxu0 %v2678
        %3018 = vmatpush.bf16.msra.mxu0 %v2674
        %3019 = vmatpush.bf16.msra.mxu0 %v2670
        %3020 = vmatpush.bf16.msra.mxu0 %v2666
        %3021 = vmatpush.bf16.msra.mxu0 %v2662
        %3022 = vmatpush.bf16.msra.mxu0 %v2658
        %3023 = vmatmul.bf16.gmra.mxu0 %v1068
        %v3024 = vpop.f32.mrf.mxu0
        %v3025 = vadd.f32 0.0, %v3024
        %v3026 = vpop.f32.mrf.mxu0
        %v3027 = vadd.f32 0.0, %v3026
        %3028 = vdwg.mxu0
        %3029 = vmatpush.bf16.msra.mxu0 %v2718
        %3030 = vmatpush.bf16.msra.mxu0 %v2714
        %3031 = vmatpush.bf16.msra.mxu0 %v2710
        %3032 = vmatpush.bf16.msra.mxu0 %v2706
        %3033 = vmatpush.bf16.msra.mxu0 %v2702
        %3034 = vmatpush.bf16.msra.mxu0 %v2698
        %3035 = vmatpush.bf16.msra.mxu0 %v2694
        %3036 = vmatpush.bf16.msra.mxu0 %v2690
        %3037 = vmatmul.bf16.gmra.mxu0 %v1069
        %v3038 = vpop.f32.mrf.mxu0
        %v3039 = vadd.f32 %v3025, %v3038
        %v3040 = vpop.f32.mrf.mxu0
        %v3041 = vadd.f32 %v3027, %v3040
        %3042 = vdwg.mxu0
        %3043 = vmatpush.bf16.msra.mxu0 %v2750
        %3044 = vmatpush.bf16.msra.mxu0 %v2746
        %3045 = vmatpush.bf16.msra.mxu0 %v2742
        %3046 = vmatpush.bf16.msra.mxu0 %v2738
        %3047 = vmatpush.bf16.msra.mxu0 %v2734
        %3048 = vmatpush.bf16.msra.mxu0 %v2730
        %3049 = vmatpush.bf16.msra.mxu0 %v2726
        %3050 = vmatpush.bf16.msra.mxu0 %v2722
        %3051 = vmatmul.bf16.gmra.mxu0 %v1070
        %v3052 = vpop.f32.mrf.mxu0
        %v3053 = vadd.f32 %v3039, %v3052
        %v3054 = vpop.f32.mrf.mxu0
        %v3055 = vadd.f32 %v3041, %v3054
        %3056 = vdwg.mxu0
        %3057 = vmatpush.bf16.msra.mxu0 %v2782
        %3058 = vmatpush.bf16.msra.mxu0 %v2778
        %3059 = vmatpush.bf16.msra.mxu0 %v2774
        %3060 = vmatpush.bf16.msra.mxu0 %v2770
        %3061 = vmatpush.bf16.msra.mxu0 %v2766
        %3062 = vmatpush.bf16.msra.mxu0 %v2762
        %3063 = vmatpush.bf16.msra.mxu0 %v2758
        %3064 = vmatpush.bf16.msra.mxu0 %v2754
        %3065 = vmatmul.bf16.gmra.mxu0 %v1071
        %v3066 = vpop.f32.mrf.mxu0
        %v3067 = vadd.f32 %v3053, %v3066
        %v3068 = vpop.f32.mrf.mxu0
        %v3069 = vadd.f32 %v3055, %v3068
        %3070 = vdwg.mxu0
        %3071 = vmatpush.bf16.msra.mxu0 0
        %3072 = vmatpush.bf16.msra.mxu0 0
        %3073 = vmatpush.bf16.msra.mxu0 0
        %3074 = vmatpush.bf16.msra.mxu0 0
        %3075 = vmatpush.bf16.msra.mxu0 %v2798
        %3076 = vmatpush.bf16.msra.mxu0 %v2794
        %3077 = vmatpush.bf16.msra.mxu0 %v2790
        %3078 = vmatpush.bf16.msra.mxu0 %v2786
        %3079 = vmatmul.bf16.gmra.mxu0 %v1799
        %v3080 = vpop.f32.mrf.mxu0
        %v3081 = vadd.f32 %v3067, %v3080
        %v3082 = vpop.f32.mrf.mxu0
        %v3083 = vadd.f32 %v3069, %v3082
        %3084 = vdwg.mxu0
        %3085 = vmatpush.bf16.msra.mxu0 %v2687
        %3086 = vmatpush.bf16.msra.mxu0 %v2683
        %3087 = vmatpush.bf16.msra.mxu0 %v2679
        %3088 = vmatpush.bf16.msra.mxu0 %v2675
        %3089 = vmatpush.bf16.msra.mxu0 %v2671
        %3090 = vmatpush.bf16.msra.mxu0 %v2667
        %3091 = vmatpush.bf16.msra.mxu0 %v2663
        %3092 = vmatpush.bf16.msra.mxu0 %v2659
        %3093 = vmatmul.bf16.gmra.mxu0 %v1068
        %v3094 = vpop.f32.mrf.mxu0
        %v3095 = vadd.f32 0.0, %v3094
        %v3096 = vpop.f32.mrf.mxu0
        %v3097 = vadd.f32 0.0, %v3096
        %3098 = vdwg.mxu0
        %3099 = vmatpush.bf16.msra.mxu0 %v2719
        %3100 = vmatpush.bf16.msra.mxu0 %v2715
        %3101 = vmatpush.bf16.msra.mxu0 %v2711
        %3102 = vmatpush.bf16.msra.mxu0 %v2707
        %3103 = vmatpush.bf16.msra.mxu0 %v2703
        %3104 = vmatpush.bf16.msra.mxu0 %v2699
        %3105 = vmatpush.bf16.msra.mxu0 %v2695
        %3106 = vmatpush.bf16.msra.mxu0 %v2691
        %3107 = vmatmul.bf16.gmra.mxu0 %v1069
        %v3108 = vpop.f32.mrf.mxu0
        %v3109 = vadd.f32 %v3095, %v3108
        %v3110 = vpop.f32.mrf.mxu0
        %v3111 = vadd.f32 %v3097, %v3110
        %3112 = vdwg.mxu0
        %3113 = vmatpush.bf16.msra.mxu0 %v2751
        %3114 = vmatpush.bf16.msra.mxu0 %v2747
        %3115 = vmatpush.bf16.msra.mxu0 %v2743
        %3116 = vmatpush.bf16.msra.mxu0 %v2739
        %3117 = vmatpush.bf16.msra.mxu0 %v2735
        %3118 = vmatpush.bf16.msra.mxu0 %v2731
        %3119 = vmatpush.bf16.msra.mxu0 %v2727
        %3120 = vmatpush.bf16.msra.mxu0 %v2723
        %3121 = vmatmul.bf16.gmra.mxu0 %v1070
        %v3122 = vpop.f32.mrf.mxu0
        %v3123 = vadd.f32 %v3109, %v3122
        %v3124 = vpop.f32.mrf.mxu0
        %v3125 = vadd.f32 %v3111, %v3124
        %3126 = vdwg.mxu0
        %3127 = vmatpush.bf16.msra.mxu0 %v2783
        %3128 = vmatpush.bf16.msra.mxu0 %v2779
        %3129 = vmatpush.bf16.msra.mxu0 %v2775
        %3130 = vmatpush.bf16.msra.mxu0 %v2771
        %3131 = vmatpush.bf16.msra.mxu0 %v2767
        %3132 = vmatpush.bf16.msra.mxu0 %v2763
        %3133 = vmatpush.bf16.msra.mxu0 %v2759
        %3134 = vmatpush.bf16.msra.mxu0 %v2755
        %3135 = vmatmul.bf16.gmra.mxu0 %v1071
        %v3136 = vpop.f32.mrf.mxu0
        %v3137 = vadd.f32 %v3123, %v3136
        %v3138 = vpop.f32.mrf.mxu0
        %v3139 = vadd.f32 %v3125, %v3138
        %3140 = vdwg.mxu0
        %3141 = vmatpush.bf16.msra.mxu0 0
        %3142 = vmatpush.bf16.msra.mxu0 0
        %3143 = vmatpush.bf16.msra.mxu0 0
        %3144 = vmatpush.bf16.msra.mxu0 0
        %3145 = vmatpush.bf16.msra.mxu0 %v2799
        %3146 = vmatpush.bf16.msra.mxu0 %v2795
        %3147 = vmatpush.bf16.msra.mxu0 %v2791
        %3148 = vmatpush.bf16.msra.mxu0 %v2787
        %3149 = vmatmul.bf16.gmra.mxu0 %v1799
        %v3150 = vpop.f32.mrf.mxu0
        %v3151 = vadd.f32 %v3137, %v3150
        %v3152 = vpop.f32.mrf.mxu0
        %v3153 = vadd.f32 %v3139, %v3152
        %3154 = vdwg.mxu0
        %3155 = vmatpush.bf16.msra.mxu0 %v2688
        %3156 = vmatpush.bf16.msra.mxu0 %v2684
        %3157 = vmatpush.bf16.msra.mxu0 %v2680
        %3158 = vmatpush.bf16.msra.mxu0 %v2676
        %3159 = vmatpush.bf16.msra.mxu0 %v2672
        %3160 = vmatpush.bf16.msra.mxu0 %v2668
        %3161 = vmatpush.bf16.msra.mxu0 %v2664
        %3162 = vmatpush.bf16.msra.mxu0 %v2660
        %3163 = vmatmul.bf16.gmra.mxu0 %v1068
        %v3164 = vpop.f32.mrf.mxu0
        %v3165 = vadd.f32 0.0, %v3164
        %v3166 = vpop.f32.mrf.mxu0
        %v3167 = vadd.f32 0.0, %v3166
        %3168 = vdwg.mxu0
        %3169 = vmatpush.bf16.msra.mxu0 %v2720
        %3170 = vmatpush.bf16.msra.mxu0 %v2716
        %3171 = vmatpush.bf16.msra.mxu0 %v2712
        %3172 = vmatpush.bf16.msra.mxu0 %v2708
        %3173 = vmatpush.bf16.msra.mxu0 %v2704
        %3174 = vmatpush.bf16.msra.mxu0 %v2700
        %3175 = vmatpush.bf16.msra.mxu0 %v2696
        %3176 = vmatpush.bf16.msra.mxu0 %v2692
        %3177 = vmatmul.bf16.gmra.mxu0 %v1069
        %v3178 = vpop.f32.mrf.mxu0
        %v3179 = vadd.f32 %v3165, %v3178
        %v3180 = vpop.f32.mrf.mxu0
        %v3181 = vadd.f32 %v3167, %v3180
        %3182 = vdwg.mxu0
        %3183 = vmatpush.bf16.msra.mxu0 %v2752
        %3184 = vmatpush.bf16.msra.mxu0 %v2748
        %3185 = vmatpush.bf16.msra.mxu0 %v2744
        %3186 = vmatpush.bf16.msra.mxu0 %v2740
        %3187 = vmatpush.bf16.msra.mxu0 %v2736
        %3188 = vmatpush.bf16.msra.mxu0 %v2732
        %3189 = vmatpush.bf16.msra.mxu0 %v2728
        %3190 = vmatpush.bf16.msra.mxu0 %v2724
        %3191 = vmatmul.bf16.gmra.mxu0 %v1070
        %v3192 = vpop.f32.mrf.mxu0
        %v3193 = vadd.f32 %v3179, %v3192
        %v3194 = vpop.f32.mrf.mxu0
        %v3195 = vadd.f32 %v3181, %v3194
        %3196 = vdwg.mxu0
        %3197 = vmatpush.bf16.msra.mxu0 %v2784
        %3198 = vmatpush.bf16.msra.mxu0 %v2780
        %3199 = vmatpush.bf16.msra.mxu0 %v2776
        %3200 = vmatpush.bf16.msra.mxu0 %v2772
        %3201 = vmatpush.bf16.msra.mxu0 %v2768
        %3202 = vmatpush.bf16.msra.mxu0 %v2764
        %3203 = vmatpush.bf16.msra.mxu0 %v2760
        %3204 = vmatpush.bf16.msra.mxu0 %v2756
        %3205 = vmatmul.bf16.gmra.mxu0 %v1071
        %v3206 = vpop.f32.mrf.mxu0
        %v3207 = vadd.f32 %v3193, %v3206
        %v3208 = vpop.f32.mrf.mxu0
        %v3209 = vadd.f32 %v3195, %v3208
        %3210 = vdwg.mxu0
        %3211 = vmatpush.bf16.msra.mxu0 0
        %3212 = vmatpush.bf16.msra.mxu0 0
        %3213 = vmatpush.bf16.msra.mxu0 0
        %3214 = vmatpush.bf16.msra.mxu0 0
        %3215 = vmatpush.bf16.msra.mxu0 %v2800
        %3216 = vmatpush.bf16.msra.mxu0 %v2796
        %3217 = vmatpush.bf16.msra.mxu0 %v2792
        %3218 = vmatpush.bf16.msra.mxu0 %v2788
        %3219 = vmatmul.bf16.gmra.mxu0 %v1799
        %v3220 = vpop.f32.mrf.mxu0
        %v3221 = vadd.f32 %v3207, %v3220
        %v3222 = vpop.f32.mrf.mxu0
        %v3223 = vadd.f32 %v3209, %v3222
        %3224 = vdwg.mxu0
        %v3225 = vxor.u32 %v1867, 2147483648
        %v3226 = vxor.u32 %v1937, 2147483648
        %v3227 = vxor.u32 %v2007, 2147483648
        %v3228 = vxor.u32 %v2077, 2147483648
        %v3229 = vxor.u32 %v1869, 2147483648
        %v3230 = vxor.u32 %v1939, 2147483648
        %v3231 = vxor.u32 %v2009, 2147483648
        %v3232 = vxor.u32 %v2079, 2147483648
        %v3233 = vmul.f32 %v3225, 1.442695
        %v3234 = vpow.pop %v3233
        %v3235 = vmul.f32 %v3226, 1.442695
        %v3236 = vpow.pop %v3235
        %v3237 = vmul.f32 %v3227, 1.442695
        %v3238 = vpow.pop %v3237
        %v3239 = vmul.f32 %v3228, 1.442695
        %v3240 = vpow.pop %v3239
        %v3241 = vmul.f32 %v3229, 1.442695
        %v3242 = vpow.pop %v3241
        %v3243 = vmul.f32 %v3230, 1.442695
        %v3244 = vpow.pop %v3243
        %v3245 = vmul.f32 %v3231, 1.442695
        %v3246 = vpow.pop %v3245
        %v3247 = vmul.f32 %v3232, 1.442695
        %v3248 = vpow.pop %v3247
        %v3249 = vadd.f32 %v3234, 1.0
        %v3250 = vadd.f32 %v3236, 1.0
        %v3251 = vadd.f32 %v3238, 1.0
        %v3252 = vadd.f32 %v3240, 1.0
        %v3253 = vadd.f32 %v3242, 1.0
        %v3254 = vadd.f32 %v3244, 1.0
        %v3255 = vadd.f32 %v3246, 1.0
        %v3256 = vadd.f32 %v3248, 1.0
        %v3257 = vrcp.pop %v3249
        %v3258 = vmul.f32 %v3249, %v3257
        %v3259 = vsub.f32 1.0, %v3258
        %v3260 = vmul.f32 %v3257, %v3259
        %v3261 = vadd.f32 %v3257, %v3260
        %vm3262 = vweird.f32 %v3249
        %vm3263 = vweird.f32 %v3257
        %vm3264 = vmor %vm3262, %vm3263
        %v3265 = vsel %vm3264, %v3257, %v3261
        %v3266 = vand.u32 2147483647, %v3249
        %vm3267 = vcmp.eq.f32.partialorder %v3266, 8.507059e+37
        %v3268 = vand.u32 %v3249, 2147483648
        %v3269 = vor.u32 1.1754944e-38, %v3268
        %v3270 = vsel %vm3267, %v3269, %v3265
        %v3271 = vmul.f32 1.0, %v3270
        %v3272 = vrcp.pop %v3250
        %v3273 = vmul.f32 %v3250, %v3272
        %v3274 = vsub.f32 1.0, %v3273
        %v3275 = vmul.f32 %v3272, %v3274
        %v3276 = vadd.f32 %v3272, %v3275
        %vm3277 = vweird.f32 %v3250
        %vm3278 = vweird.f32 %v3272
        %vm3279 = vmor %vm3277, %vm3278
        %v3280 = vsel %vm3279, %v3272, %v3276
        %v3281 = vand.u32 2147483647, %v3250
        %vm3282 = vcmp.eq.f32.partialorder %v3281, 8.507059e+37
        %v3283 = vand.u32 %v3250, 2147483648
        %v3284 = vor.u32 1.1754944e-38, %v3283
        %v3285 = vsel %vm3282, %v3284, %v3280
        %v3286 = vmul.f32 1.0, %v3285
        %v3287 = vrcp.pop %v3251
        %v3288 = vmul.f32 %v3251, %v3287
        %v3289 = vsub.f32 1.0, %v3288
        %v3290 = vmul.f32 %v3287, %v3289
        %v3291 = vadd.f32 %v3287, %v3290
        %vm3292 = vweird.f32 %v3251
        %vm3293 = vweird.f32 %v3287
        %vm3294 = vmor %vm3292, %vm3293
        %v3295 = vsel %vm3294, %v3287, %v3291
        %v3296 = vand.u32 2147483647, %v3251
        %vm3297 = vcmp.eq.f32.partialorder %v3296, 8.507059e+37
        %v3298 = vand.u32 %v3251, 2147483648
        %v3299 = vor.u32 1.1754944e-38, %v3298
        %v3300 = vsel %vm3297, %v3299, %v3295
        %v3301 = vmul.f32 1.0, %v3300
        %v3302 = vrcp.pop %v3252
        %v3303 = vmul.f32 %v3252, %v3302
        %v3304 = vsub.f32 1.0, %v3303
        %v3305 = vmul.f32 %v3302, %v3304
        %v3306 = vadd.f32 %v3302, %v3305
        %vm3307 = vweird.f32 %v3252
        %vm3308 = vweird.f32 %v3302
        %vm3309 = vmor %vm3307, %vm3308
        %v3310 = vsel %vm3309, %v3302, %v3306
        %v3311 = vand.u32 2147483647, %v3252
        %vm3312 = vcmp.eq.f32.partialorder %v3311, 8.507059e+37
        %v3313 = vand.u32 %v3252, 2147483648
        %v3314 = vor.u32 1.1754944e-38, %v3313
        %v3315 = vsel %vm3312, %v3314, %v3310
        %v3316 = vmul.f32 1.0, %v3315
        %v3317 = vrcp.pop %v3253
        %v3318 = vmul.f32 %v3253, %v3317
        %v3319 = vsub.f32 1.0, %v3318
        %v3320 = vmul.f32 %v3317, %v3319
        %v3321 = vadd.f32 %v3317, %v3320
        %vm3322 = vweird.f32 %v3253
        %vm3323 = vweird.f32 %v3317
        %vm3324 = vmor %vm3322, %vm3323
        %v3325 = vsel %vm3324, %v3317, %v3321
        %v3326 = vand.u32 2147483647, %v3253
        %vm3327 = vcmp.eq.f32.partialorder %v3326, 8.507059e+37
        %v3328 = vand.u32 %v3253, 2147483648
        %v3329 = vor.u32 1.1754944e-38, %v3328
        %v3330 = vsel %vm3327, %v3329, %v3325
        %v3331 = vmul.f32 1.0, %v3330
        %v3332 = vrcp.pop %v3254
        %v3333 = vmul.f32 %v3254, %v3332
        %v3334 = vsub.f32 1.0, %v3333
        %v3335 = vmul.f32 %v3332, %v3334
        %v3336 = vadd.f32 %v3332, %v3335
        %vm3337 = vweird.f32 %v3254
        %vm3338 = vweird.f32 %v3332
        %vm3339 = vmor %vm3337, %vm3338
        %v3340 = vsel %vm3339, %v3332, %v3336
        %v3341 = vand.u32 2147483647, %v3254
        %vm3342 = vcmp.eq.f32.partialorder %v3341, 8.507059e+37
        %v3343 = vand.u32 %v3254, 2147483648
        %v3344 = vor.u32 1.1754944e-38, %v3343
        %v3345 = vsel %vm3342, %v3344, %v3340
        %v3346 = vmul.f32 1.0, %v3345
        %v3347 = vrcp.pop %v3255
        %v3348 = vmul.f32 %v3255, %v3347
        %v3349 = vsub.f32 1.0, %v3348
        %v3350 = vmul.f32 %v3347, %v3349
        %v3351 = vadd.f32 %v3347, %v3350
        %vm3352 = vweird.f32 %v3255
        %vm3353 = vweird.f32 %v3347
        %vm3354 = vmor %vm3352, %vm3353
        %v3355 = vsel %vm3354, %v3347, %v3351
        %v3356 = vand.u32 2147483647, %v3255
        %vm3357 = vcmp.eq.f32.partialorder %v3356, 8.507059e+37
        %v3358 = vand.u32 %v3255, 2147483648
        %v3359 = vor.u32 1.1754944e-38, %v3358
        %v3360 = vsel %vm3357, %v3359, %v3355
        %v3361 = vmul.f32 1.0, %v3360
        %v3362 = vrcp.pop %v3256
        %v3363 = vmul.f32 %v3256, %v3362
        %v3364 = vsub.f32 1.0, %v3363
        %v3365 = vmul.f32 %v3362, %v3364
        %v3366 = vadd.f32 %v3362, %v3365
        %vm3367 = vweird.f32 %v3256
        %vm3368 = vweird.f32 %v3362
        %vm3369 = vmor %vm3367, %vm3368
        %v3370 = vsel %vm3369, %v3362, %v3366
        %v3371 = vand.u32 2147483647, %v3256
        %vm3372 = vcmp.eq.f32.partialorder %v3371, 8.507059e+37
        %v3373 = vand.u32 %v3256, 2147483648
        %v3374 = vor.u32 1.1754944e-38, %v3373
        %v3375 = vsel %vm3372, %v3374, %v3370
        %v3376 = vmul.f32 1.0, %v3375
        %v3377 = vmul.f32 %v1867, %v3271
        %v3378 = vmul.f32 %v1937, %v3286
        %v3379 = vmul.f32 %v2007, %v3301
        %v3380 = vmul.f32 %v2077, %v3316
        %v3381 = vmul.f32 %v1869, %v3331
        %v3382 = vmul.f32 %v1939, %v3346
        %v3383 = vmul.f32 %v2009, %v3361
        %v3384 = vmul.f32 %v2079, %v3376
        %v3385 = vmul.f32 %v3377, %v3011
        %v3386 = vmul.f32 %v3378, %v3081
        %v3387 = vmul.f32 %v3379, %v3151
        %v3388 = vmul.f32 %v3380, %v3221
        %v3389 = vmul.f32 %v3381, %v3013
        %v3390 = vmul.f32 %v3382, %v3083
        %v3391 = vmul.f32 %v3383, %v3153
        %v3392 = vmul.f32 %v3384, %v3223
        %v3393 = vpack.c.bf16 %v3389, %v3385
        %v3394 = vpack.c.bf16 %v3390, %v3386
        %v3395 = vpack.c.bf16 %v3391, %v3387
        %v3396 = vpack.c.bf16 %v3392, %v3388
        %v3397 = vld [vmem:[#allocation2] sm:$0xff]
        %v3398 = vld [vmem:[#allocation2 + $0x8] sm:$0xff]
        %v3399 = vld [vmem:[#allocation2 + $0x10] sm:$0xff]
        %v3400 = vld [vmem:[#allocation2 + $0x18] sm:$0xff]
        %v3401 = vld [vmem:[#allocation2 + $0x20] sm:$0xff]
        %v3402 = vld [vmem:[#allocation2 + $0x28] sm:$0xff]
        %v3403 = vld [vmem:[#allocation2 + $0x30] sm:$0xff]
        %v3404 = vld [vmem:[#allocation2 + $0x38] sm:$0xff]
        %v3405 = vld [vmem:[#allocation2 + $0x40] sm:$0xff]
        %v3406 = vld [vmem:[#allocation2 + $0x48] sm:$0xff]
        %v3407 = vld [vmem:[%s883] sm:$0xff]
        %v3408 = vld [vmem:[%s883 + $0x8] sm:$0xff]
        %v3409 = vld [vmem:[%s883 + $0x10] sm:$0xf]
        %v3410 = vld [vmem:[%s883 + $0x14] sm:$0xff]
        %v3411 = vld [vmem:[%s883 + $0x1c] sm:$0xff]
        %v3412 = vld [vmem:[%s883 + $0x24] sm:$0xf]
        %v3413 = vld [vmem:[%s883 + $0x28] sm:$0xff]
        %v3414 = vld [vmem:[%s883 + $0x30] sm:$0xff]
        %v3415 = vld [vmem:[%s883 + $0x38] sm:$0xf]
        %v3416 = vld [vmem:[%s883 + $0x3c] sm:$0xff]
        %v3417 = vld [vmem:[%s883 + $0x44] sm:$0xff]
        %v3418 = vld [vmem:[%s883 + $0x4c] sm:$0xf]
        %v3419 = vld [vmem:[%s883 + $0x50] sm:$0xff]
        %v3420 = vld [vmem:[%s883 + $0x58] sm:$0xff]
        %v3421 = vld [vmem:[%s883 + $0x60] sm:$0xf]
        %v3422 = vld [vmem:[%s883 + $0x64] sm:$0xff]
        %v3423 = vld [vmem:[%s883 + $0x6c] sm:$0xff]
        %v3424 = vld [vmem:[%s883 + $0x74] sm:$0xf]
        %v3425 = vld [vmem:[%s883 + $0x78] sm:$0xff]
        %v3426 = vld [vmem:[%s883 + $0x80] sm:$0xff]
        %v3427 = vld [vmem:[%s883 + $0x88] sm:$0xf]
        %v3428 = vld [vmem:[%s883 + $0x8c] sm:$0xff]
        %v3429 = vld [vmem:[%s883 + $0x94] sm:$0xff]
        %v3430 = vld [vmem:[%s883 + $0x9c] sm:$0xf]
        %v3431 = vld [vmem:[%s883 + $0xa0] sm:$0xff]
        %v3432 = vld [vmem:[%s883 + $0xa8] sm:$0xff]
        %v3433 = vld [vmem:[%s883 + $0xb0] sm:$0xf]
        %v3434 = vld [vmem:[%s883 + $0xb4] sm:$0xff]
        %v3435 = vld [vmem:[%s883 + $0xbc] sm:$0xff]
        %v3436 = vld [vmem:[%s883 + $0xc4] sm:$0xf]
        %v3437 = vld [vmem:[%s883 + $0xc8] sm:$0xff]
        %v3438 = vld [vmem:[%s883 + $0xd0] sm:$0xff]
        %v3439 = vld [vmem:[%s883 + $0xd8] sm:$0xf]
        %v3440 = vld [vmem:[%s883 + $0xdc] sm:$0xff]
        %v3441 = vld [vmem:[%s883 + $0xe4] sm:$0xff]
        %v3442 = vld [vmem:[%s883 + $0xec] sm:$0xf]
        %v3443 = vld [vmem:[%s883 + $0xf0] sm:$0xff]
        %v3444 = vld [vmem:[%s883 + $0xf8] sm:$0xff]
        %v3445 = vld [vmem:[%s883 + $0x100] sm:$0xf]
        %v3446 = vld [vmem:[%s883 + $0x104] sm:$0xff]
        %v3447 = vld [vmem:[%s883 + $0x10c] sm:$0xff]
        %v3448 = vld [vmem:[%s883 + $0x114] sm:$0xf]
        %v3449 = vld [vmem:[%s883 + $0x118] sm:$0xff]
        %v3450 = vld [vmem:[%s883 + $0x120] sm:$0xff]
        %v3451 = vld [vmem:[%s883 + $0x128] sm:$0xf]
        %v3452 = vld [vmem:[%s883 + $0x12c] sm:$0xff]
        %v3453 = vld [vmem:[%s883 + $0x134] sm:$0xff]
        %v3454 = vld [vmem:[%s883 + $0x13c] sm:$0xf]
        %v3455 = vld [vmem:[%s883 + $0x140] sm:$0xff]
        %v3456 = vld [vmem:[%s883 + $0x148] sm:$0xff]
        %v3457 = vld [vmem:[%s883 + $0x150] sm:$0xf]
        %v3458 = vld [vmem:[%s883 + $0x154] sm:$0xff]
        %v3459 = vld [vmem:[%s883 + $0x15c] sm:$0xff]
        %v3460 = vld [vmem:[%s883 + $0x164] sm:$0xf]
        %v3461 = vld [vmem:[%s883 + $0x168] sm:$0xff]
        %v3462 = vld [vmem:[%s883 + $0x170] sm:$0xff]
        %v3463 = vld [vmem:[%s883 + $0x178] sm:$0xf]
        %v3464 = vld [vmem:[%s883 + $0x17c] sm:$0xff]
        %v3465 = vld [vmem:[%s883 + $0x184] sm:$0xff]
        %v3466 = vld [vmem:[%s883 + $0x18c] sm:$0xf]
        %v3467 = vld [vmem:[%s883 + $0x190] sm:$0xff]
        %v3468 = vld [vmem:[%s883 + $0x198] sm:$0xff]
        %v3469 = vld [vmem:[%s883 + $0x1a0] sm:$0xf]
        %v3470 = vld [vmem:[%s883 + $0x1a4] sm:$0xff]
        %v3471 = vld [vmem:[%s883 + $0x1ac] sm:$0xff]
        %v3472 = vld [vmem:[%s883 + $0x1b4] sm:$0xf]
        %v3473 = vld [vmem:[%s883 + $0x1b8] sm:$0xff]
        %v3474 = vld [vmem:[%s883 + $0x1c0] sm:$0xff]
        %v3475 = vld [vmem:[%s883 + $0x1c8] sm:$0xf]
        %v3476 = vld [vmem:[%s883 + $0x1cc] sm:$0xff]
        %v3477 = vld [vmem:[%s883 + $0x1d4] sm:$0xff]
        %v3478 = vld [vmem:[%s883 + $0x1dc] sm:$0xf]
        %v3479 = vld [vmem:[%s883 + $0x1e0] sm:$0xff]
        %v3480 = vld [vmem:[%s883 + $0x1e8] sm:$0xff]
        %v3481 = vld [vmem:[%s883 + $0x1f0] sm:$0xf]
        %v3482 = vld [vmem:[%s883 + $0x1f4] sm:$0xff]
        %v3483 = vld [vmem:[%s883 + $0x1fc] sm:$0xff]
        %v3484 = vld [vmem:[%s883 + $0x204] sm:$0xf]
        %v3485 = vld [vmem:[%s883 + $0x208] sm:$0xff]
        %v3486 = vld [vmem:[%s883 + $0x210] sm:$0xff]
        %v3487 = vld [vmem:[%s883 + $0x218] sm:$0xf]
        %v3488 = vld [vmem:[%s883 + $0x21c] sm:$0xff]
        %v3489 = vld [vmem:[%s883 + $0x224] sm:$0xff]
        %v3490 = vld [vmem:[%s883 + $0x22c] sm:$0xf]
        %v3491 = vld [vmem:[%s883 + $0x230] sm:$0xff]
        %v3492 = vld [vmem:[%s883 + $0x238] sm:$0xff]
        %v3493 = vld [vmem:[%s883 + $0x240] sm:$0xf]
        %v3494 = vld [vmem:[%s883 + $0x244] sm:$0xff]
        %v3495 = vld [vmem:[%s883 + $0x24c] sm:$0xff]
        %v3496 = vld [vmem:[%s883 + $0x254] sm:$0xf]
        %v3497 = vld [vmem:[%s883 + $0x258] sm:$0xff]
        %v3498 = vld [vmem:[%s883 + $0x260] sm:$0xff]
        %v3499 = vld [vmem:[%s883 + $0x268] sm:$0xf]
        %v3500 = vld [vmem:[%s883 + $0x26c] sm:$0xff]
        %v3501 = vld [vmem:[%s883 + $0x274] sm:$0xff]
        %v3502 = vld [vmem:[%s883 + $0x27c] sm:$0xf]
        %v3503 = vld [vmem:[%s883 + $0x280] sm:$0xff]
        %v3504 = vld [vmem:[%s883 + $0x288] sm:$0xff]
        %v3505 = vld [vmem:[%s883 + $0x290] sm:$0xf]
        %v3506 = vld [vmem:[%s883 + $0x294] sm:$0xff]
        %v3507 = vld [vmem:[%s883 + $0x29c] sm:$0xff]
        %v3508 = vld [vmem:[%s883 + $0x2a4] sm:$0xf]
        %v3509 = vld [vmem:[%s883 + $0x2a8] sm:$0xff]
        %v3510 = vld [vmem:[%s883 + $0x2b0] sm:$0xff]
        %v3511 = vld [vmem:[%s883 + $0x2b8] sm:$0xf]
        %v3512 = vld [vmem:[%s883 + $0x2bc] sm:$0xff]
        %v3513 = vld [vmem:[%s883 + $0x2c4] sm:$0xff]
        %v3514 = vld [vmem:[%s883 + $0x2cc] sm:$0xf]
        %v3515 = vld [vmem:[%s883 + $0x2d0] sm:$0xff]
        %v3516 = vld [vmem:[%s883 + $0x2d8] sm:$0xff]
        %v3517 = vld [vmem:[%s883 + $0x2e0] sm:$0xf]
        %v3518 = vld [vmem:[%s883 + $0x2e4] sm:$0xff]
        %v3519 = vld [vmem:[%s883 + $0x2ec] sm:$0xff]
        %v3520 = vld [vmem:[%s883 + $0x2f4] sm:$0xf]
        %v3521 = vld [vmem:[%s883 + $0x2f8] sm:$0xff]
        %v3522 = vld [vmem:[%s883 + $0x300] sm:$0xff]
        %v3523 = vld [vmem:[%s883 + $0x308] sm:$0xf]
        %v3524 = vld [vmem:[%s883 + $0x30c] sm:$0xff]
        %v3525 = vld [vmem:[%s883 + $0x314] sm:$0xff]
        %v3526 = vld [vmem:[%s883 + $0x31c] sm:$0xf]
        %v3527 = vld [vmem:[%s883 + $0x320] sm:$0xff]
        %v3528 = vld [vmem:[%s883 + $0x328] sm:$0xff]
        %v3529 = vld [vmem:[%s883 + $0x330] sm:$0xf]
        %v3530 = vld [vmem:[%s883 + $0x334] sm:$0xff]
        %v3531 = vld [vmem:[%s883 + $0x33c] sm:$0xff]
        %v3532 = vld [vmem:[%s883 + $0x344] sm:$0xf]
        %v3533 = vld [vmem:[%s883 + $0x348] sm:$0xff]
        %v3534 = vld [vmem:[%s883 + $0x350] sm:$0xff]
        %v3535 = vld [vmem:[%s883 + $0x358] sm:$0xf]
        %v3536 = vld [vmem:[%s883 + $0x35c] sm:$0xff]
        %v3537 = vld [vmem:[%s883 + $0x364] sm:$0xff]
        %v3538 = vld [vmem:[%s883 + $0x36c] sm:$0xf]
        %v3539 = vld [vmem:[%s883 + $0x370] sm:$0xff]
        %v3540 = vld [vmem:[%s883 + $0x378] sm:$0xff]
        %v3541 = vld [vmem:[%s883 + $0x380] sm:$0xf]
        %v3542 = vld [vmem:[%s883 + $0x384] sm:$0xff]
        %v3543 = vld [vmem:[%s883 + $0x38c] sm:$0xff]
        %v3544 = vld [vmem:[%s883 + $0x394] sm:$0xf]
        %v3545 = vld [vmem:[%s883 + $0x398] sm:$0xff]
        %v3546 = vld [vmem:[%s883 + $0x3a0] sm:$0xff]
        %v3547 = vld [vmem:[%s883 + $0x3a8] sm:$0xf]
        %v3548 = vld [vmem:[%s883 + $0x3ac] sm:$0xff]
        %v3549 = vld [vmem:[%s883 + $0x3b4] sm:$0xff]
        %v3550 = vld [vmem:[%s883 + $0x3bc] sm:$0xf]
        %v3551 = vld [vmem:[%s883 + $0x3c0] sm:$0xff]
        %v3552 = vld [vmem:[%s883 + $0x3c8] sm:$0xff]
        %v3553 = vld [vmem:[%s883 + $0x3d0] sm:$0xf]
        %v3554 = vld [vmem:[%s883 + $0x3d4] sm:$0xff]
        %v3555 = vld [vmem:[%s883 + $0x3dc] sm:$0xff]
        %v3556 = vld [vmem:[%s883 + $0x3e4] sm:$0xf]
        %v3557 = vld [vmem:[%s883 + $0x3e8] sm:$0xff]
        %v3558 = vld [vmem:[%s883 + $0x3f0] sm:$0xff]
        %v3559 = vld [vmem:[%s883 + $0x3f8] sm:$0xf]
        %v3560 = vld [vmem:[%s883 + $0x3fc] sm:$0xff]
        %v3561 = vld [vmem:[%s883 + $0x404] sm:$0xff]
        %v3562 = vld [vmem:[%s883 + $0x40c] sm:$0xf]
        %v3563 = vld [vmem:[%s883 + $0x410] sm:$0xff]
        %v3564 = vld [vmem:[%s883 + $0x418] sm:$0xff]
        %v3565 = vld [vmem:[%s883 + $0x420] sm:$0xf]
        %v3566 = vld [vmem:[%s883 + $0x424] sm:$0xff]
        %v3567 = vld [vmem:[%s883 + $0x42c] sm:$0xff]
        %v3568 = vld [vmem:[%s883 + $0x434] sm:$0xf]
        %v3569 = vld [vmem:[%s883 + $0x438] sm:$0xff]
        %v3570 = vld [vmem:[%s883 + $0x440] sm:$0xff]
        %v3571 = vld [vmem:[%s883 + $0x448] sm:$0xf]
        %v3572 = vld [vmem:[%s883 + $0x44c] sm:$0xff]
        %v3573 = vld [vmem:[%s883 + $0x454] sm:$0xff]
        %v3574 = vld [vmem:[%s883 + $0x45c] sm:$0xf]
        %v3575 = vld [vmem:[%s883 + $0x460] sm:$0xff]
        %v3576 = vld [vmem:[%s883 + $0x468] sm:$0xff]
        %v3577 = vld [vmem:[%s883 + $0x470] sm:$0xf]
        %v3578 = vld [vmem:[%s883 + $0x474] sm:$0xff]
        %v3579 = vld [vmem:[%s883 + $0x47c] sm:$0xff]
        %v3580 = vld [vmem:[%s883 + $0x484] sm:$0xf]
        %v3581 = vld [vmem:[%s883 + $0x488] sm:$0xff]
        %v3582 = vld [vmem:[%s883 + $0x490] sm:$0xff]
        %v3583 = vld [vmem:[%s883 + $0x498] sm:$0xf]
        %v3584 = vld [vmem:[%s883 + $0x49c] sm:$0xff]
        %v3585 = vld [vmem:[%s883 + $0x4a4] sm:$0xff]
        %v3586 = vld [vmem:[%s883 + $0x4ac] sm:$0xf]
        %v3587 = vld [vmem:[%s883 + $0x4b0] sm:$0xff]
        %v3588 = vld [vmem:[%s883 + $0x4b8] sm:$0xff]
        %v3589 = vld [vmem:[%s883 + $0x4c0] sm:$0xf]
        %v3590 = vld [vmem:[%s883 + $0x4c4] sm:$0xff]
        %v3591 = vld [vmem:[%s883 + $0x4cc] sm:$0xff]
        %v3592 = vld [vmem:[%s883 + $0x4d4] sm:$0xf]
        %v3593 = vld [vmem:[%s883 + $0x4d8] sm:$0xff]
        %v3594 = vld [vmem:[%s883 + $0x4e0] sm:$0xff]
        %v3595 = vld [vmem:[%s883 + $0x4e8] sm:$0xf]
        %v3596 = vld [vmem:[%s883 + $0x4ec] sm:$0xff]
        %v3597 = vld [vmem:[%s883 + $0x4f4] sm:$0xff]
        %v3598 = vld [vmem:[%s883 + $0x4fc] sm:$0xf]
        %v3791 = vunpack.c.l.b16 %v3407
        %v3792 = vunpack.c.h.b16 %v3407
        %v3793 = vunpack.c.l.b16 %v3408
        %v3794 = vunpack.c.h.b16 %v3408
        %v3795 = vunpack.c.l.b16 %v3409
        %v3796 = vunpack.c.l.b16 %v3410
        %v3797 = vunpack.c.h.b16 %v3410
        %v3798 = vunpack.c.l.b16 %v3411
        %v3799 = vunpack.c.h.b16 %v3411
        %v3800 = vunpack.c.l.b16 %v3412
        %v3801 = vunpack.c.l.b16 %v3413
        %v3802 = vunpack.c.h.b16 %v3413
        %v3803 = vunpack.c.l.b16 %v3414
        %v3804 = vunpack.c.h.b16 %v3414
        %v3805 = vunpack.c.l.b16 %v3415
        %v3806 = vunpack.c.l.b16 %v3416
        %v3807 = vunpack.c.h.b16 %v3416
        %v3808 = vunpack.c.l.b16 %v3417
        %v3809 = vunpack.c.h.b16 %v3417
        %v3810 = vunpack.c.l.b16 %v3418
        %v3811 = vunpack.c.l.b16 %v3419
        %v3812 = vunpack.c.h.b16 %v3419
        %v3813 = vunpack.c.l.b16 %v3420
        %v3814 = vunpack.c.h.b16 %v3420
        %v3815 = vunpack.c.l.b16 %v3421
        %v3816 = vunpack.c.l.b16 %v3422
        %v3817 = vunpack.c.h.b16 %v3422
        %v3818 = vunpack.c.l.b16 %v3423
        %v3819 = vunpack.c.h.b16 %v3423
        %v3820 = vunpack.c.l.b16 %v3424
        %v3821 = vunpack.c.l.b16 %v3425
        %v3822 = vunpack.c.h.b16 %v3425
        %v3823 = vunpack.c.l.b16 %v3426
        %v3824 = vunpack.c.h.b16 %v3426
        %v3825 = vunpack.c.l.b16 %v3427
        %v3826 = vunpack.c.l.b16 %v3428
        %v3827 = vunpack.c.h.b16 %v3428
        %v3828 = vunpack.c.l.b16 %v3429
        %v3829 = vunpack.c.h.b16 %v3429
        %v3830 = vunpack.c.l.b16 %v3430
        %v3831 = vunpack.c.l.b16 %v3431
        %v3832 = vunpack.c.h.b16 %v3431
        %v3833 = vunpack.c.l.b16 %v3432
        %v3834 = vunpack.c.h.b16 %v3432
        %v3835 = vunpack.c.l.b16 %v3433
        %v3836 = vunpack.c.l.b16 %v3434
        %v3837 = vunpack.c.h.b16 %v3434
        %v3838 = vunpack.c.l.b16 %v3435
        %v3839 = vunpack.c.h.b16 %v3435
        %v3840 = vunpack.c.l.b16 %v3436
        %v3841 = vunpack.c.l.b16 %v3437
        %v3842 = vunpack.c.h.b16 %v3437
        %v3843 = vunpack.c.l.b16 %v3438
        %v3844 = vunpack.c.h.b16 %v3438
        %v3845 = vunpack.c.l.b16 %v3439
        %v3846 = vunpack.c.l.b16 %v3440
        %v3847 = vunpack.c.h.b16 %v3440
        %v3848 = vunpack.c.l.b16 %v3441
        %v3849 = vunpack.c.h.b16 %v3441
        %v3850 = vunpack.c.l.b16 %v3442
        %v3851 = vunpack.c.l.b16 %v3443
        %v3852 = vunpack.c.h.b16 %v3443
        %v3853 = vunpack.c.l.b16 %v3444
        %v3854 = vunpack.c.h.b16 %v3444
        %v3855 = vunpack.c.l.b16 %v3445
        %v3856 = vunpack.c.l.b16 %v3446
        %v3857 = vunpack.c.h.b16 %v3446
        %v3858 = vunpack.c.l.b16 %v3447
        %v3859 = vunpack.c.h.b16 %v3447
        %v3860 = vunpack.c.l.b16 %v3448
        %v3861 = vunpack.c.l.b16 %v3449
        %v3862 = vunpack.c.h.b16 %v3449
        %v3863 = vunpack.c.l.b16 %v3450
        %v3864 = vunpack.c.h.b16 %v3450
        %v3865 = vunpack.c.l.b16 %v3451
        %v3866 = vunpack.c.l.b16 %v3452
        %v3867 = vunpack.c.h.b16 %v3452
        %v3868 = vunpack.c.l.b16 %v3453
        %v3869 = vunpack.c.h.b16 %v3453
        %v3870 = vunpack.c.l.b16 %v3454
        %v3871 = vunpack.c.l.b16 %v3455
        %v3872 = vunpack.c.h.b16 %v3455
        %v3873 = vunpack.c.l.b16 %v3456
        %v3874 = vunpack.c.h.b16 %v3456
        %v3875 = vunpack.c.l.b16 %v3457
        %v3876 = vunpack.c.l.b16 %v3458
        %v3877 = vunpack.c.h.b16 %v3458
        %v3878 = vunpack.c.l.b16 %v3459
        %v3879 = vunpack.c.h.b16 %v3459
        %v3880 = vunpack.c.l.b16 %v3460
        %v3881 = vunpack.c.l.b16 %v3461
        %v3882 = vunpack.c.h.b16 %v3461
        %v3883 = vunpack.c.l.b16 %v3462
        %v3884 = vunpack.c.h.b16 %v3462
        %v3885 = vunpack.c.l.b16 %v3463
        %v3886 = vunpack.c.l.b16 %v3464
        %v3887 = vunpack.c.h.b16 %v3464
        %v3888 = vunpack.c.l.b16 %v3465
        %v3889 = vunpack.c.h.b16 %v3465
        %v3890 = vunpack.c.l.b16 %v3466
        %v3891 = vunpack.c.l.b16 %v3467
        %v3892 = vunpack.c.h.b16 %v3467
        %v3893 = vunpack.c.l.b16 %v3468
        %v3894 = vunpack.c.h.b16 %v3468
        %v3895 = vunpack.c.l.b16 %v3469
        %v3896 = vunpack.c.l.b16 %v3470
        %v3897 = vunpack.c.h.b16 %v3470
        %v3898 = vunpack.c.l.b16 %v3471
        %v3899 = vunpack.c.h.b16 %v3471
        %v3900 = vunpack.c.l.b16 %v3472
        %v3901 = vunpack.c.l.b16 %v3473
        %v3902 = vunpack.c.h.b16 %v3473
        %v3903 = vunpack.c.l.b16 %v3474
        %v3904 = vunpack.c.h.b16 %v3474
        %v3905 = vunpack.c.l.b16 %v3475
        %v3906 = vunpack.c.l.b16 %v3476
        %v3907 = vunpack.c.h.b16 %v3476
        %v3908 = vunpack.c.l.b16 %v3477
        %v3909 = vunpack.c.h.b16 %v3477
        %v3910 = vunpack.c.l.b16 %v3478
        %v3911 = vunpack.c.l.b16 %v3479
        %v3912 = vunpack.c.h.b16 %v3479
        %v3913 = vunpack.c.l.b16 %v3480
        %v3914 = vunpack.c.h.b16 %v3480
        %v3915 = vunpack.c.l.b16 %v3481
        %v3916 = vunpack.c.l.b16 %v3482
        %v3917 = vunpack.c.h.b16 %v3482
        %v3918 = vunpack.c.l.b16 %v3483
        %v3919 = vunpack.c.h.b16 %v3483
        %v3920 = vunpack.c.l.b16 %v3484
        %v3921 = vunpack.c.l.b16 %v3485
        %v3922 = vunpack.c.h.b16 %v3485
        %v3923 = vunpack.c.l.b16 %v3486
        %v3924 = vunpack.c.h.b16 %v3486
        %v3925 = vunpack.c.l.b16 %v3487
        %v3926 = vunpack.c.l.b16 %v3488
        %v3927 = vunpack.c.h.b16 %v3488
        %v3928 = vunpack.c.l.b16 %v3489
        %v3929 = vunpack.c.h.b16 %v3489
        %v3930 = vunpack.c.l.b16 %v3490
        %v3931 = vunpack.c.l.b16 %v3491
        %v3932 = vunpack.c.h.b16 %v3491
        %v3933 = vunpack.c.l.b16 %v3492
        %v3934 = vunpack.c.h.b16 %v3492
        %v3935 = vunpack.c.l.b16 %v3493
        %v3936 = vunpack.c.l.b16 %v3494
        %v3937 = vunpack.c.h.b16 %v3494
        %v3938 = vunpack.c.l.b16 %v3495
        %v3939 = vunpack.c.h.b16 %v3495
        %v3940 = vunpack.c.l.b16 %v3496
        %v3941 = vunpack.c.l.b16 %v3497
        %v3942 = vunpack.c.h.b16 %v3497
        %v3943 = vunpack.c.l.b16 %v3498
        %v3944 = vunpack.c.h.b16 %v3498
        %v3945 = vunpack.c.l.b16 %v3499
        %v3946 = vunpack.c.l.b16 %v3500
        %v3947 = vunpack.c.h.b16 %v3500
        %v3948 = vunpack.c.l.b16 %v3501
        %v3949 = vunpack.c.h.b16 %v3501
        %v3950 = vunpack.c.l.b16 %v3502
        %v3951 = vunpack.c.l.b16 %v3503
        %v3952 = vunpack.c.h.b16 %v3503
        %v3953 = vunpack.c.l.b16 %v3504
        %v3954 = vunpack.c.h.b16 %v3504
        %v3955 = vunpack.c.l.b16 %v3505
        %v3956 = vunpack.c.l.b16 %v3506
        %v3957 = vunpack.c.h.b16 %v3506
        %v3958 = vunpack.c.l.b16 %v3507
        %v3959 = vunpack.c.h.b16 %v3507
        %v3960 = vunpack.c.l.b16 %v3508
        %v3961 = vunpack.c.l.b16 %v3509
        %v3962 = vunpack.c.h.b16 %v3509
        %v3963 = vunpack.c.l.b16 %v3510
        %v3964 = vunpack.c.h.b16 %v3510
        %v3965 = vunpack.c.l.b16 %v3511
        %v3966 = vunpack.c.l.b16 %v3512
        %v3967 = vunpack.c.h.b16 %v3512
        %v3968 = vunpack.c.l.b16 %v3513
        %v3969 = vunpack.c.h.b16 %v3513
        %v3970 = vunpack.c.l.b16 %v3514
        %v3971 = vunpack.c.l.b16 %v3515
        %v3972 = vunpack.c.h.b16 %v3515
        %v3973 = vunpack.c.l.b16 %v3516
        %v3974 = vunpack.c.h.b16 %v3516
        %v3975 = vunpack.c.l.b16 %v3517
        %v3976 = vunpack.c.l.b16 %v3518
        %v3977 = vunpack.c.h.b16 %v3518
        %v3978 = vunpack.c.l.b16 %v3519
        %v3979 = vunpack.c.h.b16 %v3519
        %v3980 = vunpack.c.l.b16 %v3520
        %v3981 = vunpack.c.l.b16 %v3521
        %v3982 = vunpack.c.h.b16 %v3521
        %v3983 = vunpack.c.l.b16 %v3522
        %v3984 = vunpack.c.h.b16 %v3522
        %v3985 = vunpack.c.l.b16 %v3523
        %v3986 = vunpack.c.l.b16 %v3524
        %v3987 = vunpack.c.h.b16 %v3524
        %v3988 = vunpack.c.l.b16 %v3525
        %v3989 = vunpack.c.h.b16 %v3525
        %v3990 = vunpack.c.l.b16 %v3526
        %v3991 = vunpack.c.l.b16 %v3527
        %v3992 = vunpack.c.h.b16 %v3527
        %v3993 = vunpack.c.l.b16 %v3528
        %v3994 = vunpack.c.h.b16 %v3528
        %v3995 = vunpack.c.l.b16 %v3529
        %v3996 = vunpack.c.l.b16 %v3530
        %v3997 = vunpack.c.h.b16 %v3530
        %v3998 = vunpack.c.l.b16 %v3531
        %v3999 = vunpack.c.h.b16 %v3531
        %v4000 = vunpack.c.l.b16 %v3532
        %v4001 = vunpack.c.l.b16 %v3533
        %v4002 = vunpack.c.h.b16 %v3533
        %v4003 = vunpack.c.l.b16 %v3534
        %v4004 = vunpack.c.h.b16 %v3534
        %v4005 = vunpack.c.l.b16 %v3535
        %v4006 = vunpack.c.l.b16 %v3536
        %v4007 = vunpack.c.h.b16 %v3536
        %v4008 = vunpack.c.l.b16 %v3537
        %v4009 = vunpack.c.h.b16 %v3537
        %v4010 = vunpack.c.l.b16 %v3538
        %v4011 = vunpack.c.l.b16 %v3539
        %v4012 = vunpack.c.h.b16 %v3539
        %v4013 = vunpack.c.l.b16 %v3540
        %v4014 = vunpack.c.h.b16 %v3540
        %v4015 = vunpack.c.l.b16 %v3541
        %v4016 = vunpack.c.l.b16 %v3542
        %v4017 = vunpack.c.h.b16 %v3542
        %v4018 = vunpack.c.l.b16 %v3543
        %v4019 = vunpack.c.h.b16 %v3543
        %v4020 = vunpack.c.l.b16 %v3544
        %v4021 = vunpack.c.l.b16 %v3545
        %v4022 = vunpack.c.h.b16 %v3545
        %v4023 = vunpack.c.l.b16 %v3546
        %v4024 = vunpack.c.h.b16 %v3546
        %v4025 = vunpack.c.l.b16 %v3547
        %v4026 = vunpack.c.l.b16 %v3548
        %v4027 = vunpack.c.h.b16 %v3548
        %v4028 = vunpack.c.l.b16 %v3549
        %v4029 = vunpack.c.h.b16 %v3549
        %v4030 = vunpack.c.l.b16 %v3550
        %v4031 = vunpack.c.l.b16 %v3551
        %v4032 = vunpack.c.h.b16 %v3551
        %v4033 = vunpack.c.l.b16 %v3552
        %v4034 = vunpack.c.h.b16 %v3552
        %v4035 = vunpack.c.l.b16 %v3553
        %v4036 = vunpack.c.l.b16 %v3554
        %v4037 = vunpack.c.h.b16 %v3554
        %v4038 = vunpack.c.l.b16 %v3555
        %v4039 = vunpack.c.h.b16 %v3555
        %v4040 = vunpack.c.l.b16 %v3556
        %v4041 = vunpack.c.l.b16 %v3557
        %v4042 = vunpack.c.h.b16 %v3557
        %v4043 = vunpack.c.l.b16 %v3558
        %v4044 = vunpack.c.h.b16 %v3558
        %v4045 = vunpack.c.l.b16 %v3559
        %v4046 = vunpack.c.l.b16 %v3560
        %v4047 = vunpack.c.h.b16 %v3560
        %v4048 = vunpack.c.l.b16 %v3561
        %v4049 = vunpack.c.h.b16 %v3561
        %v4050 = vunpack.c.l.b16 %v3562
        %v4051 = vunpack.c.l.b16 %v3563
        %v4052 = vunpack.c.h.b16 %v3563
        %v4053 = vunpack.c.l.b16 %v3564
        %v4054 = vunpack.c.h.b16 %v3564
        %v4055 = vunpack.c.l.b16 %v3565
        %v4056 = vunpack.c.l.b16 %v3566
        %v4057 = vunpack.c.h.b16 %v3566
        %v4058 = vunpack.c.l.b16 %v3567
        %v4059 = vunpack.c.h.b16 %v3567
        %v4060 = vunpack.c.l.b16 %v3568
        %v4061 = vunpack.c.l.b16 %v3569
        %v4062 = vunpack.c.h.b16 %v3569
        %v4063 = vunpack.c.l.b16 %v3570
        %v4064 = vunpack.c.h.b16 %v3570
        %v4065 = vunpack.c.l.b16 %v3571
        %v4066 = vunpack.c.l.b16 %v3572
        %v4067 = vunpack.c.h.b16 %v3572
        %v4068 = vunpack.c.l.b16 %v3573
        %v4069 = vunpack.c.h.b16 %v3573
        %v4070 = vunpack.c.l.b16 %v3574
        %v4071 = vunpack.c.l.b16 %v3575
        %v4072 = vunpack.c.h.b16 %v3575
        %v4073 = vunpack.c.l.b16 %v3576
        %v4074 = vunpack.c.h.b16 %v3576
        %v4075 = vunpack.c.l.b16 %v3577
        %v4076 = vunpack.c.l.b16 %v3578
        %v4077 = vunpack.c.h.b16 %v3578
        %v4078 = vunpack.c.l.b16 %v3579
        %v4079 = vunpack.c.h.b16 %v3579
        %v4080 = vunpack.c.l.b16 %v3580
        %v4081 = vunpack.c.l.b16 %v3581
        %v4082 = vunpack.c.h.b16 %v3581
        %v4083 = vunpack.c.l.b16 %v3582
        %v4084 = vunpack.c.h.b16 %v3582
        %v4085 = vunpack.c.l.b16 %v3583
        %v4086 = vunpack.c.l.b16 %v3584
        %v4087 = vunpack.c.h.b16 %v3584
        %v4088 = vunpack.c.l.b16 %v3585
        %v4089 = vunpack.c.h.b16 %v3585
        %v4090 = vunpack.c.l.b16 %v3586
        %v4091 = vunpack.c.l.b16 %v3587
        %v4092 = vunpack.c.h.b16 %v3587
        %v4093 = vunpack.c.l.b16 %v3588
        %v4094 = vunpack.c.h.b16 %v3588
        %v4095 = vunpack.c.l.b16 %v3589
        %v4096 = vunpack.c.l.b16 %v3590
        %v4097 = vunpack.c.h.b16 %v3590
        %v4098 = vunpack.c.l.b16 %v3591
        %v4099 = vunpack.c.h.b16 %v3591
        %v4100 = vunpack.c.l.b16 %v3592
        %v4101 = vunpack.c.l.b16 %v3593
        %v4102 = vunpack.c.h.b16 %v3593
        %v4103 = vunpack.c.l.b16 %v3594
        %v4104 = vunpack.c.h.b16 %v3594
        %v4105 = vunpack.c.l.b16 %v3595
        %v4106 = vunpack.c.l.b16 %v3596
        %v4107 = vunpack.c.h.b16 %v3596
        %v4108 = vunpack.c.l.b16 %v3597
        %v4109 = vunpack.c.h.b16 %v3597
        %v4110 = vunpack.c.l.b16 %v3598
        %v4111 = vpack.c.b16 %v3796, %v3791
        %v4112 = vpack.c.b16 %v3797, %v3792
        %v4113 = vpack.c.b16 %v3798, %v3793
        %v4114 = vpack.c.b16 %v3799, %v3794
        %v4115 = vpack.c.b16 %v3800, %v3795
        %v4116 = vpack.c.b16 %v3806, %v3801
        %v4117 = vpack.c.b16 %v3807, %v3802
        %v4118 = vpack.c.b16 %v3808, %v3803
        %v4119 = vpack.c.b16 %v3809, %v3804
        %v4120 = vpack.c.b16 %v3810, %v3805
        %v4121 = vpack.c.b16 %v3816, %v3811
        %v4122 = vpack.c.b16 %v3817, %v3812
        %v4123 = vpack.c.b16 %v3818, %v3813
        %v4124 = vpack.c.b16 %v3819, %v3814
        %v4125 = vpack.c.b16 %v3820, %v3815
        %v4126 = vpack.c.b16 %v3826, %v3821
        %v4127 = vpack.c.b16 %v3827, %v3822
        %v4128 = vpack.c.b16 %v3828, %v3823
        %v4129 = vpack.c.b16 %v3829, %v3824
        %v4130 = vpack.c.b16 %v3830, %v3825
        %v4131 = vpack.c.b16 %v3836, %v3831
        %v4132 = vpack.c.b16 %v3837, %v3832
        %v4133 = vpack.c.b16 %v3838, %v3833
        %v4134 = vpack.c.b16 %v3839, %v3834
        %v4135 = vpack.c.b16 %v3840, %v3835
        %v4136 = vpack.c.b16 %v3846, %v3841
        %v4137 = vpack.c.b16 %v3847, %v3842
        %v4138 = vpack.c.b16 %v3848, %v3843
        %v4139 = vpack.c.b16 %v3849, %v3844
        %v4140 = vpack.c.b16 %v3850, %v3845
        %v4141 = vpack.c.b16 %v3856, %v3851
        %v4142 = vpack.c.b16 %v3857, %v3852
        %v4143 = vpack.c.b16 %v3858, %v3853
        %v4144 = vpack.c.b16 %v3859, %v3854
        %v4145 = vpack.c.b16 %v3860, %v3855
        %v4146 = vpack.c.b16 %v3866, %v3861
        %v4147 = vpack.c.b16 %v3867, %v3862
        %v4148 = vpack.c.b16 %v3868, %v3863
        %v4149 = vpack.c.b16 %v3869, %v3864
        %v4150 = vpack.c.b16 %v3870, %v3865
        %v4151 = vpack.c.b16 %v3876, %v3871
        %v4152 = vpack.c.b16 %v3877, %v3872
        %v4153 = vpack.c.b16 %v3878, %v3873
        %v4154 = vpack.c.b16 %v3879, %v3874
        %v4155 = vpack.c.b16 %v3880, %v3875
        %v4156 = vpack.c.b16 %v3886, %v3881
        %v4157 = vpack.c.b16 %v3887, %v3882
        %v4158 = vpack.c.b16 %v3888, %v3883
        %v4159 = vpack.c.b16 %v3889, %v3884
        %v4160 = vpack.c.b16 %v3890, %v3885
        %v4161 = vpack.c.b16 %v3896, %v3891
        %v4162 = vpack.c.b16 %v3897, %v3892
        %v4163 = vpack.c.b16 %v3898, %v3893
        %v4164 = vpack.c.b16 %v3899, %v3894
        %v4165 = vpack.c.b16 %v3900, %v3895
        %v4166 = vpack.c.b16 %v3906, %v3901
        %v4167 = vpack.c.b16 %v3907, %v3902
        %v4168 = vpack.c.b16 %v3908, %v3903
        %v4169 = vpack.c.b16 %v3909, %v3904
        %v4170 = vpack.c.b16 %v3910, %v3905
        %v4171 = vpack.c.b16 %v3916, %v3911
        %v4172 = vpack.c.b16 %v3917, %v3912
        %v4173 = vpack.c.b16 %v3918, %v3913
        %v4174 = vpack.c.b16 %v3919, %v3914
        %v4175 = vpack.c.b16 %v3920, %v3915
        %v4176 = vpack.c.b16 %v3926, %v3921
        %v4177 = vpack.c.b16 %v3927, %v3922
        %v4178 = vpack.c.b16 %v3928, %v3923
        %v4179 = vpack.c.b16 %v3929, %v3924
        %v4180 = vpack.c.b16 %v3930, %v3925
        %v4181 = vpack.c.b16 %v3936, %v3931
        %v4182 = vpack.c.b16 %v3937, %v3932
        %v4183 = vpack.c.b16 %v3938, %v3933
        %v4184 = vpack.c.b16 %v3939, %v3934
        %v4185 = vpack.c.b16 %v3940, %v3935
        %v4186 = vpack.c.b16 %v3946, %v3941
        %v4187 = vpack.c.b16 %v3947, %v3942
        %v4188 = vpack.c.b16 %v3948, %v3943
        %v4189 = vpack.c.b16 %v3949, %v3944
        %v4190 = vpack.c.b16 %v3950, %v3945
        %v4191 = vpack.c.b16 %v3956, %v3951
        %v4192 = vpack.c.b16 %v3957, %v3952
        %v4193 = vpack.c.b16 %v3958, %v3953
        %v4194 = vpack.c.b16 %v3959, %v3954
        %v4195 = vpack.c.b16 %v3960, %v3955
        %v4196 = vpack.c.b16 %v3966, %v3961
        %v4197 = vpack.c.b16 %v3967, %v3962
        %v4198 = vpack.c.b16 %v3968, %v3963
        %v4199 = vpack.c.b16 %v3969, %v3964
        %v4200 = vpack.c.b16 %v3970, %v3965
        %v4201 = vpack.c.b16 %v3976, %v3971
        %v4202 = vpack.c.b16 %v3977, %v3972
        %v4203 = vpack.c.b16 %v3978, %v3973
        %v4204 = vpack.c.b16 %v3979, %v3974
        %v4205 = vpack.c.b16 %v3980, %v3975
        %v4206 = vpack.c.b16 %v3986, %v3981
        %v4207 = vpack.c.b16 %v3987, %v3982
        %v4208 = vpack.c.b16 %v3988, %v3983
        %v4209 = vpack.c.b16 %v3989, %v3984
        %v4210 = vpack.c.b16 %v3990, %v3985
        %v4211 = vpack.c.b16 %v3996, %v3991
        %v4212 = vpack.c.b16 %v3997, %v3992
        %v4213 = vpack.c.b16 %v3998, %v3993
        %v4214 = vpack.c.b16 %v3999, %v3994
        %v4215 = vpack.c.b16 %v4000, %v3995
        %v4216 = vpack.c.b16 %v4006, %v4001
        %v4217 = vpack.c.b16 %v4007, %v4002
        %v4218 = vpack.c.b16 %v4008, %v4003
        %v4219 = vpack.c.b16 %v4009, %v4004
        %v4220 = vpack.c.b16 %v4010, %v4005
        %v4221 = vpack.c.b16 %v4016, %v4011
        %v4222 = vpack.c.b16 %v4017, %v4012
        %v4223 = vpack.c.b16 %v4018, %v4013
        %v4224 = vpack.c.b16 %v4019, %v4014
        %v4225 = vpack.c.b16 %v4020, %v4015
        %v4226 = vpack.c.b16 %v4026, %v4021
        %v4227 = vpack.c.b16 %v4027, %v4022
        %v4228 = vpack.c.b16 %v4028, %v4023
        %v4229 = vpack.c.b16 %v4029, %v4024
        %v4230 = vpack.c.b16 %v4030, %v4025
        %v4231 = vpack.c.b16 %v4036, %v4031
        %v4232 = vpack.c.b16 %v4037, %v4032
        %v4233 = vpack.c.b16 %v4038, %v4033
        %v4234 = vpack.c.b16 %v4039, %v4034
        %v4235 = vpack.c.b16 %v4040, %v4035
        %v4236 = vpack.c.b16 %v4046, %v4041
        %v4237 = vpack.c.b16 %v4047, %v4042
        %v4238 = vpack.c.b16 %v4048, %v4043
        %v4239 = vpack.c.b16 %v4049, %v4044
        %v4240 = vpack.c.b16 %v4050, %v4045
        %v4241 = vpack.c.b16 %v4056, %v4051
        %v4242 = vpack.c.b16 %v4057, %v4052
        %v4243 = vpack.c.b16 %v4058, %v4053
        %v4244 = vpack.c.b16 %v4059, %v4054
        %v4245 = vpack.c.b16 %v4060, %v4055
        %v4246 = vpack.c.b16 %v4066, %v4061
        %v4247 = vpack.c.b16 %v4067, %v4062
        %v4248 = vpack.c.b16 %v4068, %v4063
        %v4249 = vpack.c.b16 %v4069, %v4064
        %v4250 = vpack.c.b16 %v4070, %v4065
        %v4251 = vpack.c.b16 %v4076, %v4071
        %v4252 = vpack.c.b16 %v4077, %v4072
        %v4253 = vpack.c.b16 %v4078, %v4073
        %v4254 = vpack.c.b16 %v4079, %v4074
        %v4255 = vpack.c.b16 %v4080, %v4075
        %v4256 = vpack.c.b16 %v4086, %v4081
        %v4257 = vpack.c.b16 %v4087, %v4082
        %v4258 = vpack.c.b16 %v4088, %v4083
        %v4259 = vpack.c.b16 %v4089, %v4084
        %v4260 = vpack.c.b16 %v4090, %v4085
        %v4261 = vpack.c.b16 %v4096, %v4091
        %v4262 = vpack.c.b16 %v4097, %v4092
        %v4263 = vpack.c.b16 %v4098, %v4093
        %v4264 = vpack.c.b16 %v4099, %v4094
        %v4265 = vpack.c.b16 %v4100, %v4095
        %v4266 = vpack.c.b16 %v4106, %v4101
        %v4267 = vpack.c.b16 %v4107, %v4102
        %v4268 = vpack.c.b16 %v4108, %v4103
        %v4269 = vpack.c.b16 %v4109, %v4104
        %v4270 = vpack.c.b16 %v4110, %v4105
        %4431 = vmatpush.bf16.msra.mxu0 %v4146
        %4432 = vmatpush.bf16.msra.mxu0 %v4141
        %4433 = vmatpush.bf16.msra.mxu0 %v4136
        %4434 = vmatpush.bf16.msra.mxu0 %v4131
        %4435 = vmatpush.bf16.msra.mxu0 %v4126
        %4436 = vmatpush.bf16.msra.mxu0 %v4121
        %4437 = vmatpush.bf16.msra.mxu0 %v4116
        %4438 = vmatpush.bf16.msra.mxu0 %v4111
        %4439 = vmatmul.bf16.gmra.mxu0 %v3393
        %v4440 = vpop.f32.mrf.mxu0
        %v4441 = vadd.f32 0.0, %v4440
        %v4442 = vpop.f32.mrf.mxu0
        %v4443 = vadd.f32 0.0, %v4442
        %4444 = vdwg.mxu0
        %4445 = vmatpush.bf16.msra.mxu0 %v4186
        %4446 = vmatpush.bf16.msra.mxu0 %v4181
        %4447 = vmatpush.bf16.msra.mxu0 %v4176
        %4448 = vmatpush.bf16.msra.mxu0 %v4171
        %4449 = vmatpush.bf16.msra.mxu0 %v4166
        %4450 = vmatpush.bf16.msra.mxu0 %v4161
        %4451 = vmatpush.bf16.msra.mxu0 %v4156
        %4452 = vmatpush.bf16.msra.mxu0 %v4151
        %4453 = vmatmul.bf16.gmra.mxu0 %v3394
        %v4454 = vpop.f32.mrf.mxu0
        %v4455 = vadd.f32 %v4441, %v4454
        %v4456 = vpop.f32.mrf.mxu0
        %v4457 = vadd.f32 %v4443, %v4456
        %4458 = vdwg.mxu0
        %4459 = vmatpush.bf16.msra.mxu0 %v4226
        %4460 = vmatpush.bf16.msra.mxu0 %v4221
        %4461 = vmatpush.bf16.msra.mxu0 %v4216
        %4462 = vmatpush.bf16.msra.mxu0 %v4211
        %4463 = vmatpush.bf16.msra.mxu0 %v4206
        %4464 = vmatpush.bf16.msra.mxu0 %v4201
        %4465 = vmatpush.bf16.msra.mxu0 %v4196
        %4466 = vmatpush.bf16.msra.mxu0 %v4191
        %4467 = vmatmul.bf16.gmra.mxu0 %v3395
        %v4468 = vpop.f32.mrf.mxu0
        %v4469 = vadd.f32 %v4455, %v4468
        %v4470 = vpop.f32.mrf.mxu0
        %v4471 = vadd.f32 %v4457, %v4470
        %4472 = vdwg.mxu0
        %4473 = vmatpush.bf16.msra.mxu0 %v4266
        %4474 = vmatpush.bf16.msra.mxu0 %v4261
        %4475 = vmatpush.bf16.msra.mxu0 %v4256
        %4476 = vmatpush.bf16.msra.mxu0 %v4251
        %4477 = vmatpush.bf16.msra.mxu0 %v4246
        %4478 = vmatpush.bf16.msra.mxu0 %v4241
        %4479 = vmatpush.bf16.msra.mxu0 %v4236
        %4480 = vmatpush.bf16.msra.mxu0 %v4231
        %4481 = vmatmul.bf16.gmra.mxu0 %v3396
        %v4482 = vpop.f32.mrf.mxu0
        %v4483 = vadd.f32 %v4469, %v4482
        %v4484 = vpop.f32.mrf.mxu0
        %v4485 = vadd.f32 %v4471, %v4484
        %4486 = vdwg.mxu0
        %4487 = vmatpush.bf16.msra.mxu0 %v4147
        %4488 = vmatpush.bf16.msra.mxu0 %v4142
        %4489 = vmatpush.bf16.msra.mxu0 %v4137
        %4490 = vmatpush.bf16.msra.mxu0 %v4132
        %4491 = vmatpush.bf16.msra.mxu0 %v4127
        %4492 = vmatpush.bf16.msra.mxu0 %v4122
        %4493 = vmatpush.bf16.msra.mxu0 %v4117
        %4494 = vmatpush.bf16.msra.mxu0 %v4112
        %4495 = vmatmul.bf16.gmra.mxu0 %v3393
        %v4496 = vpop.f32.mrf.mxu0
        %v4497 = vadd.f32 0.0, %v4496
        %v4498 = vpop.f32.mrf.mxu0
        %v4499 = vadd.f32 0.0, %v4498
        %4500 = vdwg.mxu0
        %4501 = vmatpush.bf16.msra.mxu0 %v4187
        %4502 = vmatpush.bf16.msra.mxu0 %v4182
        %4503 = vmatpush.bf16.msra.mxu0 %v4177
        %4504 = vmatpush.bf16.msra.mxu0 %v4172
        %4505 = vmatpush.bf16.msra.mxu0 %v4167
        %4506 = vmatpush.bf16.msra.mxu0 %v4162
        %4507 = vmatpush.bf16.msra.mxu0 %v4157
        %4508 = vmatpush.bf16.msra.mxu0 %v4152
        %4509 = vmatmul.bf16.gmra.mxu0 %v3394
        %v4510 = vpop.f32.mrf.mxu0
        %v4511 = vadd.f32 %v4497, %v4510
        %v4512 = vpop.f32.mrf.mxu0
        %v4513 = vadd.f32 %v4499, %v4512
        %4514 = vdwg.mxu0
        %4515 = vmatpush.bf16.msra.mxu0 %v4227
        %4516 = vmatpush.bf16.msra.mxu0 %v4222
        %4517 = vmatpush.bf16.msra.mxu0 %v4217
        %4518 = vmatpush.bf16.msra.mxu0 %v4212
        %4519 = vmatpush.bf16.msra.mxu0 %v4207
        %4520 = vmatpush.bf16.msra.mxu0 %v4202
        %4521 = vmatpush.bf16.msra.mxu0 %v4197
        %4522 = vmatpush.bf16.msra.mxu0 %v4192
        %4523 = vmatmul.bf16.gmra.mxu0 %v3395
        %v4524 = vpop.f32.mrf.mxu0
        %v4525 = vadd.f32 %v4511, %v4524
        %v4526 = vpop.f32.mrf.mxu0
        %v4527 = vadd.f32 %v4513, %v4526
        %4528 = vdwg.mxu0
        %4529 = vmatpush.bf16.msra.mxu0 %v4267
        %4530 = vmatpush.bf16.msra.mxu0 %v4262
        %4531 = vmatpush.bf16.msra.mxu0 %v4257
        %4532 = vmatpush.bf16.msra.mxu0 %v4252
        %4533 = vmatpush.bf16.msra.mxu0 %v4247
        %4534 = vmatpush.bf16.msra.mxu0 %v4242
        %4535 = vmatpush.bf16.msra.mxu0 %v4237
        %4536 = vmatpush.bf16.msra.mxu0 %v4232
        %4537 = vmatmul.bf16.gmra.mxu0 %v3396
        %v4538 = vpop.f32.mrf.mxu0
        %v4539 = vadd.f32 %v4525, %v4538
        %v4540 = vpop.f32.mrf.mxu0
        %v4541 = vadd.f32 %v4527, %v4540
        %4542 = vdwg.mxu0
        %4543 = vmatpush.bf16.msra.mxu0 %v4148
        %4544 = vmatpush.bf16.msra.mxu0 %v4143
        %4545 = vmatpush.bf16.msra.mxu0 %v4138
        %4546 = vmatpush.bf16.msra.mxu0 %v4133
        %4547 = vmatpush.bf16.msra.mxu0 %v4128
        %4548 = vmatpush.bf16.msra.mxu0 %v4123
        %4549 = vmatpush.bf16.msra.mxu0 %v4118
        %4550 = vmatpush.bf16.msra.mxu0 %v4113
        %4551 = vmatmul.bf16.gmra.mxu0 %v3393
        %v4552 = vpop.f32.mrf.mxu0
        %v4553 = vadd.f32 0.0, %v4552
        %v4554 = vpop.f32.mrf.mxu0
        %v4555 = vadd.f32 0.0, %v4554
        %4556 = vdwg.mxu0
        %4557 = vmatpush.bf16.msra.mxu0 %v4188
        %4558 = vmatpush.bf16.msra.mxu0 %v4183
        %4559 = vmatpush.bf16.msra.mxu0 %v4178
        %4560 = vmatpush.bf16.msra.mxu0 %v4173
        %4561 = vmatpush.bf16.msra.mxu0 %v4168
        %4562 = vmatpush.bf16.msra.mxu0 %v4163
        %4563 = vmatpush.bf16.msra.mxu0 %v4158
        %4564 = vmatpush.bf16.msra.mxu0 %v4153
        %4565 = vmatmul.bf16.gmra.mxu0 %v3394
        %v4566 = vpop.f32.mrf.mxu0
        %v4567 = vadd.f32 %v4553, %v4566
        %v4568 = vpop.f32.mrf.mxu0
        %v4569 = vadd.f32 %v4555, %v4568
        %4570 = vdwg.mxu0
        %4571 = vmatpush.bf16.msra.mxu0 %v4228
        %4572 = vmatpush.bf16.msra.mxu0 %v4223
        %4573 = vmatpush.bf16.msra.mxu0 %v4218
        %4574 = vmatpush.bf16.msra.mxu0 %v4213
        %4575 = vmatpush.bf16.msra.mxu0 %v4208
        %4576 = vmatpush.bf16.msra.mxu0 %v4203
        %4577 = vmatpush.bf16.msra.mxu0 %v4198
        %4578 = vmatpush.bf16.msra.mxu0 %v4193
        %4579 = vmatmul.bf16.gmra.mxu0 %v3395
        %v4580 = vpop.f32.mrf.mxu0
        %v4581 = vadd.f32 %v4567, %v4580
        %v4582 = vpop.f32.mrf.mxu0
        %v4583 = vadd.f32 %v4569, %v4582
        %4584 = vdwg.mxu0
        %4585 = vmatpush.bf16.msra.mxu0 %v4268
        %4586 = vmatpush.bf16.msra.mxu0 %v4263
        %4587 = vmatpush.bf16.msra.mxu0 %v4258
        %4588 = vmatpush.bf16.msra.mxu0 %v4253
        %4589 = vmatpush.bf16.msra.mxu0 %v4248
        %4590 = vmatpush.bf16.msra.mxu0 %v4243
        %4591 = vmatpush.bf16.msra.mxu0 %v4238
        %4592 = vmatpush.bf16.msra.mxu0 %v4233
        %4593 = vmatmul.bf16.gmra.mxu0 %v3396
        %v4594 = vpop.f32.mrf.mxu0
        %v4595 = vadd.f32 %v4581, %v4594
        %v4596 = vpop.f32.mrf.mxu0
        %v4597 = vadd.f32 %v4583, %v4596
        %4598 = vdwg.mxu0
        %4599 = vmatpush.bf16.msra.mxu0 %v4149
        %4600 = vmatpush.bf16.msra.mxu0 %v4144
        %4601 = vmatpush.bf16.msra.mxu0 %v4139
        %4602 = vmatpush.bf16.msra.mxu0 %v4134
        %4603 = vmatpush.bf16.msra.mxu0 %v4129
        %4604 = vmatpush.bf16.msra.mxu0 %v4124
        %4605 = vmatpush.bf16.msra.mxu0 %v4119
        %4606 = vmatpush.bf16.msra.mxu0 %v4114
        %4607 = vmatmul.bf16.gmra.mxu0 %v3393
        %v4608 = vpop.f32.mrf.mxu0
        %v4609 = vadd.f32 0.0, %v4608
        %v4610 = vpop.f32.mrf.mxu0
        %v4611 = vadd.f32 0.0, %v4610
        %4612 = vdwg.mxu0
        %4613 = vmatpush.bf16.msra.mxu0 %v4189
        %4614 = vmatpush.bf16.msra.mxu0 %v4184
        %4615 = vmatpush.bf16.msra.mxu0 %v4179
        %4616 = vmatpush.bf16.msra.mxu0 %v4174
        %4617 = vmatpush.bf16.msra.mxu0 %v4169
        %4618 = vmatpush.bf16.msra.mxu0 %v4164
        %4619 = vmatpush.bf16.msra.mxu0 %v4159
        %4620 = vmatpush.bf16.msra.mxu0 %v4154
        %4621 = vmatmul.bf16.gmra.mxu0 %v3394
        %v4622 = vpop.f32.mrf.mxu0
        %v4623 = vadd.f32 %v4609, %v4622
        %v4624 = vpop.f32.mrf.mxu0
        %v4625 = vadd.f32 %v4611, %v4624
        %4626 = vdwg.mxu0
        %4627 = vmatpush.bf16.msra.mxu0 %v4229
        %4628 = vmatpush.bf16.msra.mxu0 %v4224
        %4629 = vmatpush.bf16.msra.mxu0 %v4219
        %4630 = vmatpush.bf16.msra.mxu0 %v4214
        %4631 = vmatpush.bf16.msra.mxu0 %v4209
        %4632 = vmatpush.bf16.msra.mxu0 %v4204
        %4633 = vmatpush.bf16.msra.mxu0 %v4199
        %4634 = vmatpush.bf16.msra.mxu0 %v4194
        %4635 = vmatmul.bf16.gmra.mxu0 %v3395
        %v4636 = vpop.f32.mrf.mxu0
        %v4637 = vadd.f32 %v4623, %v4636
        %v4638 = vpop.f32.mrf.mxu0
        %v4639 = vadd.f32 %v4625, %v4638
        %4640 = vdwg.mxu0
        %4641 = vmatpush.bf16.msra.mxu0 %v4269
        %4642 = vmatpush.bf16.msra.mxu0 %v4264
        %4643 = vmatpush.bf16.msra.mxu0 %v4259
        %4644 = vmatpush.bf16.msra.mxu0 %v4254
        %4645 = vmatpush.bf16.msra.mxu0 %v4249
        %4646 = vmatpush.bf16.msra.mxu0 %v4244
        %4647 = vmatpush.bf16.msra.mxu0 %v4239
        %4648 = vmatpush.bf16.msra.mxu0 %v4234
        %4649 = vmatmul.bf16.gmra.mxu0 %v3396
        %v4650 = vpop.f32.mrf.mxu0
        %v4651 = vadd.f32 %v4637, %v4650
        %v4652 = vpop.f32.mrf.mxu0
        %v4653 = vadd.f32 %v4639, %v4652
        %4654 = vdwg.mxu0
        %4655 = vmatpush.bf16.msra.mxu0 %v4150
        %4656 = vmatpush.bf16.msra.mxu0 %v4145
        %4657 = vmatpush.bf16.msra.mxu0 %v4140
        %4658 = vmatpush.bf16.msra.mxu0 %v4135
        %4659 = vmatpush.bf16.msra.mxu0 %v4130
        %4660 = vmatpush.bf16.msra.mxu0 %v4125
        %4661 = vmatpush.bf16.msra.mxu0 %v4120
        %4662 = vmatpush.bf16.msra.mxu0 %v4115
        %4663 = vmatmul.bf16.gmra.mxu0 %v3393
        %v4664 = vpop.f32.mrf.mxu0
        %v4665 = vadd.f32 0.0, %v4664
        %v4666 = vpop.f32.mrf.mxu0
        %v4667 = vadd.f32 0.0, %v4666
        %4668 = vdwg.mxu0
        %4669 = vmatpush.bf16.msra.mxu0 %v4190
        %4670 = vmatpush.bf16.msra.mxu0 %v4185
        %4671 = vmatpush.bf16.msra.mxu0 %v4180
        %4672 = vmatpush.bf16.msra.mxu0 %v4175
        %4673 = vmatpush.bf16.msra.mxu0 %v4170
        %4674 = vmatpush.bf16.msra.mxu0 %v4165
        %4675 = vmatpush.bf16.msra.mxu0 %v4160
        %4676 = vmatpush.bf16.msra.mxu0 %v4155
        %4677 = vmatmul.bf16.gmra.mxu0 %v3394
        %v4678 = vpop.f32.mrf.mxu0
        %v4679 = vadd.f32 %v4665, %v4678
        %v4680 = vpop.f32.mrf.mxu0
        %v4681 = vadd.f32 %v4667, %v4680
        %4682 = vdwg.mxu0
        %4683 = vmatpush.bf16.msra.mxu0 %v4230
        %4684 = vmatpush.bf16.msra.mxu0 %v4225
        %4685 = vmatpush.bf16.msra.mxu0 %v4220
        %4686 = vmatpush.bf16.msra.mxu0 %v4215
        %4687 = vmatpush.bf16.msra.mxu0 %v4210
        %4688 = vmatpush.bf16.msra.mxu0 %v4205
        %4689 = vmatpush.bf16.msra.mxu0 %v4200
        %4690 = vmatpush.bf16.msra.mxu0 %v4195
        %4691 = vmatmul.bf16.gmra.mxu0 %v3395
        %v4692 = vpop.f32.mrf.mxu0
        %v4693 = vadd.f32 %v4679, %v4692
        %v4694 = vpop.f32.mrf.mxu0
        %v4695 = vadd.f32 %v4681, %v4694
        %4696 = vdwg.mxu0
        %4697 = vmatpush.bf16.msra.mxu0 %v4270
        %4698 = vmatpush.bf16.msra.mxu0 %v4265
        %4699 = vmatpush.bf16.msra.mxu0 %v4260
        %4700 = vmatpush.bf16.msra.mxu0 %v4255
        %4701 = vmatpush.bf16.msra.mxu0 %v4250
        %4702 = vmatpush.bf16.msra.mxu0 %v4245
        %4703 = vmatpush.bf16.msra.mxu0 %v4240
        %4704 = vmatpush.bf16.msra.mxu0 %v4235
        %4705 = vmatmul.bf16.gmra.mxu0 %v3396
        %v4706 = vpop.f32.mrf.mxu0
        %v4707 = vadd.f32 %v4693, %v4706
        %v4708 = vpop.f32.mrf.mxu0
        %v4709 = vadd.f32 %v4695, %v4708
        %4710 = vdwg.mxu0
        %v4711 = vadd.f32 %v3397, %v4483
        %v4712 = vadd.f32 %v3398, %v4539
        %v4713 = vadd.f32 %v3399, %v4595
        %v4714 = vadd.f32 %v3400, %v4651
        %v4715 = vadd.f32 %v3401, %v4707
        %v4716 = vadd.f32 %v3402, %v4485
        %v4717 = vadd.f32 %v3403, %v4541
        %v4718 = vadd.f32 %v3404, %v4597
        %v4719 = vadd.f32 %v3405, %v4653
        %v4720 = vadd.f32 %v3406, %v4709
        %4721 = vst [vmem:[#allocation2] sm:$0xff] %v4711
        %4722 = vst [vmem:[#allocation2 + $0x8] sm:$0xff] %v4712
        %4723 = vst [vmem:[#allocation2 + $0x10] sm:$0xff] %v4713
        %4724 = vst [vmem:[#allocation2 + $0x18] sm:$0xff] %v4714
        %4725 = vst.msk [vmem:[#allocation2 + $0x20] sm:$0xff] %vm1797, %v4715
        %4726 = vst [vmem:[#allocation2 + $0x28] sm:$0xff] %v4716
        %4727 = vst [vmem:[#allocation2 + $0x30] sm:$0xff] %v4717
        %4728 = vst [vmem:[#allocation2 + $0x38] sm:$0xff] %v4718
        %4729 = vst [vmem:[#allocation2 + $0x40] sm:$0xff] %v4719
        %4730 = vst.msk [vmem:[#allocation2 + $0x48] sm:$0xff] %vm1797, %v4720
        %p4731 = scmp.eq.s32.totalorder %s21, 2
        // Predicated region
        $region87: #{tpu_custom_call.1} parent=73 // pred_check
          %p4732 = pneg %p4731
        $region88: #{tpu_custom_call.1} parent=73 // pred_check_branch
          %4734 = sbr.rel (%p4732) target = $region90
        $region89: #{tpu_custom_call.1} parent=73 // pred_region
          %v4735 = vld [vmem:[#allocation2] sm:$0xff]
          %v4736 = vld [vmem:[#allocation2 + $0x8] sm:$0xff]
          %v4737 = vld [vmem:[#allocation2 + $0x10] sm:$0xff]
          %v4738 = vld [vmem:[#allocation2 + $0x18] sm:$0xff]
          %v4739 = vld [vmem:[#allocation2 + $0x20] sm:$0xff]
          %v4740 = vld [vmem:[#allocation2 + $0x28] sm:$0xff]
          %v4741 = vld [vmem:[#allocation2 + $0x30] sm:$0xff]
          %v4742 = vld [vmem:[#allocation2 + $0x38] sm:$0xff]
          %v4743 = vld [vmem:[#allocation2 + $0x40] sm:$0xff]
          %v4744 = vld [vmem:[#allocation2 + $0x48] sm:$0xff]
          %4745 = vst [vmem:[#allocation5] sm:$0xff] %v4735
          %4746 = vst [vmem:[#allocation5 + $0x8] sm:$0xff] %v4736
          %4747 = vst [vmem:[#allocation5 + $0x10] sm:$0xff] %v4737
          %4748 = vst [vmem:[#allocation5 + $0x18] sm:$0xff] %v4738
          %4749 = vst.msk [vmem:[#allocation5 + $0x20] sm:$0xff] %vm1797, %v4739
          %4750 = vst [vmem:[#allocation5 + $0x28] sm:$0xff] %v4740
          %4751 = vst [vmem:[#allocation5 + $0x30] sm:$0xff] %v4741
          %4752 = vst [vmem:[#allocation5 + $0x38] sm:$0xff] %v4742
          %4753 = vst [vmem:[#allocation5 + $0x40] sm:$0xff] %v4743
          %4754 = vst.msk [vmem:[#allocation5 + $0x48] sm:$0xff] %vm1797, %v4744
        $region90: #{tpu_custom_call.1} parent=73 // pred_fallthru
          _
        // Predicated region
        $region91: #{tpu_custom_call.1} parent=73 // pred_check
          %p4755 = pneg %p150
        $region92: #{tpu_custom_call.1} parent=73 // pred_check_branch
          %4757 = sbr.rel (%p4755) target = $region94
        $region93: #{tpu_custom_call.1} parent=73 // pred_region
          %s4758 = smul.u32 2, %s20
          %4760 = vsyncadd [#allocation6], 0
          %s4761 = smul.addr %s4758, 5
          %s4762 = smul.addr %s4761, 8
          %s4763 = scalar_lea.hbm %s4, %s4762
          %s4764 = sshll.u32 [#allocation5], 4
          %s4765 = int_to_ptr.vmem [resolvable:$true] %s4764
          %s4766 = sshll.u32 %s4763, 4
          %s4767 = int_to_ptr.hbm [resolvable:$true] %s4766
          %4772 = dma.vmem_to_hbm [thread:$0]  %s4765, 1280, %s4767, [#allocation6], 640, 640, 40
        $region94: #{tpu_custom_call.1} parent=73 // pred_fallthru
          _
        // Predicated region
        $region95: #{tpu_custom_call.1} parent=73 // pred_check
          %p4773 = pneg %p150
        $region96: #{tpu_custom_call.1} parent=73 // pred_check_branch
          %4775 = sbr.rel (%p4773) target = $region98
        $region97: #{tpu_custom_call.1} parent=73 // pred_region
          %4777 = dma.done [#allocation6], 1280
        $region98: #{tpu_custom_call.1} parent=73 // pred_fallthru
          _
      $region74: #{tpu_custom_call.1} parent=5 // pred_fallthru
        _
      %p4778 = scmp.le.s32.totalorder 2, %s11
      // Predicated region
      $region99: #{tpu_custom_call.1} parent=5 // pred_check
        %p4779 = pneg %p4778
      $region100: #{tpu_custom_call.1} parent=5 // pred_check_branch
        %4781 = sbr.rel (%p4779) target = $region102
      $region101: #{tpu_custom_call.1} parent=5 // pred_region
        %s4782 = ssub.s32 %s11, 2
      $region102: #{tpu_custom_call.1} parent=5 // pred_fallthru
        _
    $region6: #{tpu_custom_call.1} parent=1 // loop_footer
      %s15 = sadd.s32 1, %s11
    $region7: #{tpu_custom_call.1} parent=1 // loop_footer_branch
      %10 = sbr.rel target = $region3
    $region8: #{tpu_custom_call.1} parent=1 // loop_exit
      _
    %4783 = vsyncpa [#allocation6], 1
    %s4784 = scalar_lea.sflag [#allocation6], 1
    %4785 = vsyncpa %s4784, 1

</llo_original>
